<compile_context>
chip_gen: v5e
topology: v5e:2x2
jax: 0.10.0
libtpu: 0.0.40
codegen_flags: <defaults>
</compile_context>

<pallas_src>
import jax
import jax.numpy as jnp
from jax.experimental import pallas as pl
from jax.experimental.pallas import tpu as pltpu

# Model dimensions implied by PolicyNetwork / Pong.
D_IN = 80 * 80          # 6400, output of prepro
HIDDEN = 256            # hidden_size default
NUM_ACTIONS = 6         # Pong action space
A_PAD = 128             # lane-dense padded logit width
TB_MAX = 256            # max batch tile per grid step


def _round_up(x, m):
    return (x + m - 1) // m * m


def prepro(frame_u8):
    """prepro a 210x160x3 uint8 frame into a (6400,) int8 {0,1} vector."""
    I = frame_u8[35:195]                                      # crop -> (160, 160, 3)
    I = I[::2, ::2, 0]                                        # downsample + ch0 -> (80, 80)
    I = jnp.where((I == 144) | (I == 109), jnp.uint8(0), I)   # erase background
    return (I != 0).astype(jnp.int8).reshape(-1)              # everything else -> 1


def policy_kernel(x_ref, w1_ref, b1_ref, w2_ref, b2_ref, out_ref):
    """softmax(relu(x @ w1 + b1) @ w2 + b2) on one (TB, D_IN) batch tile."""
    x = x_ref[...].astype(jnp.bfloat16)                               # int8 -> bf16 (VPU, free)
    h = jnp.dot(x, w1_ref[...], preferred_element_type=jnp.float32)   # MXU bf16 -> f32
    h = jnp.maximum(h + b1_ref[...], 0.0)                             # relu, (TB, HIDDEN) f32
    logits = jnp.dot(h.astype(jnp.bfloat16), w2_ref[...],
                     preferred_element_type=jnp.float32)
    logits = logits + b2_ref[...]                                     # pad cols get -1e30
    m = jnp.max(logits, axis=-1, keepdims=True)
    e = jnp.exp(logits - m)                                           # pad cols -> 0
    denom = jnp.sum(e, axis=-1, keepdims=True)
    out_ref[...] = e / denom                                          # exact normalization


def _policy_pallas(states_i8, w1, b1, w2p, b2p, TB):
    """states_i8: (B_pad, D_IN) int8; w1: (D_IN, HIDDEN) bf16; w2p: (HIDDEN, A_PAD) bf16."""
    B_pad = states_i8.shape[0]
    assert B_pad % TB == 0
    grid = (B_pad // TB,)
    return pl.pallas_call(
        policy_kernel,
        out_shape=jax.ShapeDtypeStruct((B_pad, A_PAD), jnp.float32),
        grid_spec=pltpu.PrefetchScalarGridSpec(
            num_scalar_prefetch=0,
            grid=grid,
            in_specs=[
                # x tiles stream/pipeline over the batch grid axis.
                pl.BlockSpec((TB, D_IN), lambda i: (i, 0)),
                # Weights/biases: constant block index -> fetched once, resident.
                pl.BlockSpec((D_IN, HIDDEN), lambda i: (0, 0)),
                pl.BlockSpec((1, HIDDEN), lambda i: (0, 0)),
                pl.BlockSpec((HIDDEN, A_PAD), lambda i: (0, 0)),
                pl.BlockSpec((1, A_PAD), lambda i: (0, 0)),
            ],
            out_specs=pl.BlockSpec((TB, A_PAD), lambda i: (i, 0)),
        ),
        compiler_params=pltpu.CompilerParams(
            dimension_semantics=("parallel",),   # batch tiles shard across v7x's 2 TCs
            vmem_limit_bytes=16 << 20,
        ),
    )(states_i8, w1, b1, w2p, b2p)


@jax.jit
def policy_forward(frames_u8, w1, b1, w2p, b2p):
    """frames_u8: (B, 210, 160, 3) uint8 -> (B, NUM_ACTIONS) action probabilities."""
    B = frames_u8.shape[0]
    states = jax.vmap(prepro)(frames_u8)                 # (B, 6400) int8, values in {0,1}
    # Batch tile: multiple of 32 (int8 sublane packing), capped at TB_MAX.
    TB = min(TB_MAX, _round_up(B, 32))
    B_pad = _round_up(B, TB)
    if B_pad != B:
        states = jnp.pad(states, ((0, B_pad - B), (0, 0)))
    probs_pad = _policy_pallas(states, w1, b1, w2p, b2p, TB)
    return probs_pad[:B, :NUM_ACTIONS]


def init_params(key):
    """PyTorch-style init U(-1/sqrt(fan_in), 1/sqrt(fan_in)); weights in bf16 (in, out)."""
    k1, k2, k3, k4 = jax.random.split(key, 4)
    bound1 = 1.0 / jnp.sqrt(jnp.float32(D_IN))
    bound2 = 1.0 / jnp.sqrt(jnp.float32(HIDDEN))
    w1 = jax.random.uniform(k1, (D_IN, HIDDEN), jnp.float32,
                            -bound1, bound1).astype(jnp.bfloat16)
    b1 = jax.random.uniform(k2, (1, HIDDEN), jnp.float32, -bound1, bound1)
    w2 = jax.random.uniform(k3, (HIDDEN, NUM_ACTIONS), jnp.float32,
                            -bound2, bound2).astype(jnp.bfloat16)
    b2 = jax.random.uniform(k4, (1, NUM_ACTIONS), jnp.float32, -bound2, bound2)
    # Lane-dense padding for layer 2: zero weight columns, -1e30 bias columns
    # so the padded logits vanish under the softmax exp.
    w2p = jnp.zeros((HIDDEN, A_PAD), jnp.bfloat16).at[:, :NUM_ACTIONS].set(w2)
    b2p = jnp.full((1, A_PAD), -1e30, jnp.float32).at[:, :NUM_ACTIONS].set(b2)
    return w1, b1, w2, b2, w2p, b2p


if __name__ == "__main__":
    key = jax.random.PRNGKey(0)
    key_frame, key_params = jax.random.split(key)

    # Small batch of synthetic Pong frames: (B, 210, 160, 3) uint8.
    B = 8
    frames = jax.random.randint(key_frame, (B, 210, 160, 3), 0, 256,
                                dtype=jnp.int32).astype(jnp.uint8)
    w1, b1, w2, b2, w2p, b2p = init_params(key_params)

    probs = policy_forward(frames, w1, b1, w2p, b2p)
    probs = jax.block_until_ready(probs)

    # Reference in plain JAX, following the same bf16 weight/activation path.
    states = jax.vmap(prepro)(frames).astype(jnp.float32)   # (B, 6400) f32
    w1f = w1.astype(jnp.float32)
    w2f = w2.astype(jnp.float32)
    h_ref = jnp.maximum(states @ w1f + b1, 0.0)
    logits_ref = h_ref.astype(jnp.bfloat16).astype(jnp.float32) @ w2f + b2
    ref = jax.nn.softmax(logits_ref, axis=1)

    assert probs.shape == (B, NUM_ACTIONS)
    assert jnp.allclose(probs, ref, atol=2e-3, rtol=0.0), float(jnp.max(jnp.abs(probs - ref)))
    assert jnp.allclose(jnp.sum(probs, axis=1), 1.0, atol=1e-5)

    print("KERNEL_OK")
</pallas_src>

<mosaic_0001>
module attributes {stable_mosaic.version = 11 : i64} {
  func.func @policy_kernel(%arg0: i32, %arg1: memref<32x6400xi8, #tpu.memory_space<vmem>>, %arg2: memref<6400x256xbf16, #tpu.memory_space<vmem>>, %arg3: memref<1x256xf32, #tpu.memory_space<vmem>>, %arg4: memref<256x128xbf16, #tpu.memory_space<vmem>>, %arg5: memref<1x128xf32, #tpu.memory_space<vmem>>, %arg6: memref<32x128xf32, #tpu.memory_space<vmem>>) attributes {dimension_semantics = [#tpu.dimension_semantics<parallel>], iteration_bounds = array<i64: 1>, scalar_prefetch = 0 : i64, scratch_operands = 0 : i64, tpu.core_type = #tpu.core_type<tc>, window_params = [{transform_indices = @transform_0, window_bounds = array<i64: 32, 6400>}, {pipeline_mode = #tpu.pipeline_mode<synchronous>, transform_indices = @transform_1, window_bounds = array<i64: 6400, 256>}, {pipeline_mode = #tpu.pipeline_mode<synchronous>, transform_indices = @transform_2, window_bounds = array<i64: 1, 256>}, {pipeline_mode = #tpu.pipeline_mode<synchronous>, transform_indices = @transform_3, window_bounds = array<i64: 256, 128>}, {pipeline_mode = #tpu.pipeline_mode<synchronous>, transform_indices = @transform_4, window_bounds = array<i64: 1, 128>}, {transform_indices = @transform_5, window_bounds = array<i64: 32, 128>}]} {
    %c0 = arith.constant 0 : index
    %c0_0 = arith.constant 0 : index
    %0 = vector.load %arg1[%c0, %c0_0] : memref<32x6400xi8, #tpu.memory_space<vmem>>, vector<32x6400xi8>
    %1 = arith.sitofp %0 : vector<32x6400xi8> to vector<32x6400xbf16>
    %c0_1 = arith.constant 0 : index
    %c0_2 = arith.constant 0 : index
    %2 = vector.load %arg2[%c0_1, %c0_2] : memref<6400x256xbf16, #tpu.memory_space<vmem>>, vector<6400x256xbf16>
    %cst = arith.constant dense<0.000000e+00> : vector<32x256xf32>
    %3 = tpu.matmul %1, %2, %cst {dimension_numbers = #tpu.dot_dimension_numbers<[1], [0], [0], [1], [0, 0, 1, 1], [], []>} : vector<32x6400xbf16>, vector<6400x256xbf16>, vector<32x256xf32> -> vector<32x256xf32>
    %c0_3 = arith.constant 0 : index
    %c0_4 = arith.constant 0 : index
    %4 = vector.load %arg3[%c0_3, %c0_4] : memref<1x256xf32, #tpu.memory_space<vmem>>, vector<1x256xf32>
    %5 = vector.broadcast %4 : vector<1x256xf32> to vector<32x256xf32>
    %6 = arith.addf %3, %5 : vector<32x256xf32>
    %cst_5 = arith.constant 0.000000e+00 : f32
    %7 = vector.broadcast %cst_5 : f32 to vector<32x256xf32>
    %8 = arith.maximumf %6, %7 : vector<32x256xf32>
    %9 = arith.truncf %8 : vector<32x256xf32> to vector<32x256xbf16>
    %c0_6 = arith.constant 0 : index
    %c0_7 = arith.constant 0 : index
    %10 = vector.load %arg4[%c0_6, %c0_7] : memref<256x128xbf16, #tpu.memory_space<vmem>>, vector<256x128xbf16>
    %cst_8 = arith.constant dense<0.000000e+00> : vector<32x128xf32>
    %11 = tpu.matmul %9, %10, %cst_8 {dimension_numbers = #tpu.dot_dimension_numbers<[1], [0], [0], [1], [0, 0, 1, 1], [], []>} : vector<32x256xbf16>, vector<256x128xbf16>, vector<32x128xf32> -> vector<32x128xf32>
    %c0_9 = arith.constant 0 : index
    %c0_10 = arith.constant 0 : index
    %12 = vector.load %arg5[%c0_9, %c0_10] : memref<1x128xf32, #tpu.memory_space<vmem>>, vector<1x128xf32>
    %13 = vector.broadcast %12 : vector<1x128xf32> to vector<32x128xf32>
    %14 = arith.addf %11, %13 : vector<32x128xf32>
    %cst_11 = arith.constant dense<0xFF800000> : vector<32xf32>
    %15 = vector.multi_reduction <maximumf>, %14, %cst_11 [1] : vector<32x128xf32> to vector<32xf32>
    %16 = vector.shape_cast %15 : vector<32xf32> to vector<32x1xf32>
    %17 = vector.broadcast %16 : vector<32x1xf32> to vector<32x128xf32>
    %18 = arith.subf %14, %17 : vector<32x128xf32>
    %19 = math.exp %18 : vector<32x128xf32>
    %cst_12 = arith.constant dense<0.000000e+00> : vector<32xf32>
    %20 = vector.multi_reduction <add>, %19, %cst_12 [1] : vector<32x128xf32> to vector<32xf32>
    %21 = vector.shape_cast %20 : vector<32xf32> to vector<32x1xf32>
    %22 = vector.broadcast %21 : vector<32x1xf32> to vector<32x128xf32>
    %23 = arith.divf %19, %22 : vector<32x128xf32>
    %c0_13 = arith.constant 0 : index
    %c0_14 = arith.constant 0 : index
    %24 = vector.load %arg6[%c0_13, %c0_14] : memref<32x128xf32, #tpu.memory_space<vmem>>, vector<32x128xf32>
    tpu.vector_store %arg6[%c0_13, %c0_14], %23 {strides = array<i32>} : memref<32x128xf32, #tpu.memory_space<vmem>>, vector<32x128xf32>,
    return
  }
  func.func @transform_0(%arg0: i32) -> (i32, i32) {
    %c0_i32 = arith.constant 0 : i32
    %c0_i32_0 = arith.constant 0 : i32
    return %arg0, %c0_i32 : i32, i32
  }
  func.func @transform_1(%arg0: i32) -> (i32, i32) {
    %c0_i32 = arith.constant 0 : i32
    %c0_i32_0 = arith.constant 0 : i32
    %c0_i32_1 = arith.constant 0 : i32
    return %c0_i32, %c0_i32_0 : i32, i32
  }
  func.func @transform_2(%arg0: i32) -> (i32, i32) {
    %c0_i32 = arith.constant 0 : i32
    %c0_i32_0 = arith.constant 0 : i32
    %c0_i32_1 = arith.constant 0 : i32
    return %c0_i32, %c0_i32_0 : i32, i32
  }
  func.func @transform_3(%arg0: i32) -> (i32, i32) {
    %c0_i32 = arith.constant 0 : i32
    %c0_i32_0 = arith.constant 0 : i32
    %c0_i32_1 = arith.constant 0 : i32
    return %c0_i32, %c0_i32_0 : i32, i32
  }
  func.func @transform_4(%arg0: i32) -> (i32, i32) {
    %c0_i32 = arith.constant 0 : i32
    %c0_i32_0 = arith.constant 0 : i32
    %c0_i32_1 = arith.constant 0 : i32
    return %c0_i32, %c0_i32_0 : i32, i32
  }
  func.func @transform_5(%arg0: i32) -> (i32, i32) {
    %c0_i32 = arith.constant 0 : i32
    %c0_i32_0 = arith.constant 0 : i32
    return %arg0, %c0_i32 : i32, i32
  }
}

</mosaic_0001>

<llo_original>
// kernel: policy_forward.1
$region0: #{policy_forward.1}
  #allocation0 [shape = 'u32[]', space=smem, size = 0x4, offset = 0x4, fixed_abs, tag = 'smem constant byte address 0x4 - core index']
  #allocation1 [shape = 'u32[72,128]{1,0:T(1,128)}', space=vmem, size = 0x9000, scoped, tag = 'internal scratch']
  %s0 = inlined_call_operand.vmem [shape: s8[32,6400], index: 0, kind: input, shape index: {}]
  %s1 = inlined_call_operand.hbm [shape: bf16[6400,256], index: 1, kind: input, shape index: {}]
  %s2 = inlined_call_operand.hbm [shape: f32[1,256], index: 2, kind: input, shape index: {}]
  %s3 = inlined_call_operand.hbm [shape: bf16[256,128], index: 3, kind: input, shape index: {}]
  %s4 = inlined_call_operand.hbm [shape: f32[1,128], index: 4, kind: input, shape index: {}]
  %s5 = inlined_call_operand.vmem [shape: f32[32,128], index: 5, kind: output, shape index: {}]
  %s6 = sld [smem:[#allocation0]]
  $region46: #{policy_forward.1} parent=0
    _
  %s8 = ssub.s32 1, %s6
  %s9 = scalar_select 0, %s8, %s6
  $region1: #{policy_forward.1} parent=0
    #allocation2 [shape = 'u8[3276800]{0}', space=vmem, size = 0x320000, scoped, tag = 'input window, operand 1, single buffered']
    #allocation3 [shape = 's32[1]{0}', space=sflag, size = 0x4, scoped, tag = 'scoped memory for policy_forward.1']
    #allocation4 [shape = 'u8[1024]{0}', space=vmem, size = 0x400, scoped, tag = 'input window, operand 2, single buffered']
    #allocation5 [shape = 's32[1]{0}', space=sflag, size = 0x4, scoped, tag = 'scoped memory for policy_forward.1']
    #allocation6 [shape = 'u8[65536]{0}', space=vmem, size = 0x10000, scoped, tag = 'input window, operand 3, single buffered']
    #allocation7 [shape = 'u8[512]{0}', space=vmem, size = 0x400, scoped, tag = 'input window, operand 4, single buffered']
    #allocation8 [shape = 's32[1]{0}', space=sflag, size = 0x4, scoped, tag = 'scoped memory for policy_forward.1']
    %10 = vsyncpa [#allocation3], 0
    %11 = vsyncpa [#allocation5], 0
    %12 = vsyncpa [#allocation8], 0
    // Predicated region
    $region2: #{policy_forward.1} parent=1 // pred_check
      _
    $region3: #{policy_forward.1} parent=1 // pred_check_branch
      %14 = sbr.rel (0) target = $region5
    $region4: #{policy_forward.1} parent=1 // pred_region
      _
    $region5: #{policy_forward.1} parent=1 // pred_fallthru
      _
    // Predicated region
    $region6: #{policy_forward.1} parent=1 // pred_check
      _
    $region7: #{policy_forward.1} parent=1 // pred_check_branch
      %16 = sbr.rel (0) target = $region9
    $region8: #{policy_forward.1} parent=1 // pred_region
      %18 = vsyncadd [#allocation3], 0
      %s19 = sshll.u32 %s1, 4
      %s20 = int_to_ptr.hbm [resolvable:$true] %s19
      %s21 = sshll.u32 [#allocation2], 4
      %s22 = int_to_ptr.vmem [resolvable:$true] %s21
      %27 = dma.hbm_to_vmem [thread:$0]  %s20, 102400, %s22, [#allocation3], 128, 128, 8
    $region9: #{policy_forward.1} parent=1 // pred_fallthru
      _
    // Predicated region
    $region10: #{policy_forward.1} parent=1 // pred_check
      _
    $region11: #{policy_forward.1} parent=1 // pred_check_branch
      %29 = sbr.rel (0) target = $region13
    $region12: #{policy_forward.1} parent=1 // pred_region
      %31 = vsyncadd [#allocation5], 0
      %s33 = sshll.u32 %s2, 4
      %s34 = int_to_ptr.hbm [resolvable:$true] %s33
      %s35 = sshll.u32 [#allocation4], 4
      %s36 = int_to_ptr.vmem [resolvable:$true] %s35
      %38 = dma.hbm_to_vmem [thread:$0]  %s34, 32, %s36, [#allocation5]
    $region13: #{policy_forward.1} parent=1 // pred_fallthru
      _
    // Predicated region
    $region14: #{policy_forward.1} parent=1 // pred_check
      _
    $region15: #{policy_forward.1} parent=1 // pred_check_branch
      %40 = sbr.rel (0) target = $region17
    $region16: #{policy_forward.1} parent=1 // pred_region
      %42 = vsyncadd [#allocation5], 0
      %s43 = sshll.u32 %s3, 4
      %s44 = int_to_ptr.hbm [resolvable:$true] %s43
      %s45 = sshll.u32 [#allocation6], 4
      %s46 = int_to_ptr.vmem [resolvable:$true] %s45
      %51 = dma.hbm_to_vmem [thread:$0]  %s44, 2048, %s46, [#allocation5], 64, 64, 4
    $region17: #{policy_forward.1} parent=1 // pred_fallthru
      _
    // Predicated region
    $region18: #{policy_forward.1} parent=1 // pred_check
      _
    $region19: #{policy_forward.1} parent=1 // pred_check_branch
      %53 = sbr.rel (0) target = $region21
    $region20: #{policy_forward.1} parent=1 // pred_region
      %55 = vsyncadd [#allocation8], 0
      %s57 = sshll.u32 %s4, 4
      %s58 = int_to_ptr.hbm [resolvable:$true] %s57
      %s59 = sshll.u32 [#allocation7], 4
      %s60 = int_to_ptr.vmem [resolvable:$true] %s59
      %62 = dma.hbm_to_vmem [thread:$0]  %s58, 16, %s60, [#allocation8]
    $region21: #{policy_forward.1} parent=1 // pred_fallthru
      _
    // Predicated region
    $region22: #{policy_forward.1} parent=1 // pred_check
      _
    $region23: #{policy_forward.1} parent=1 // pred_check_branch
      %64 = sbr.rel (0) target = $region25
    $region24: #{policy_forward.1} parent=1 // pred_region
      %66 = dma.done [#allocation3], 102400
    $region25: #{policy_forward.1} parent=1 // pred_fallthru
      _
    // Predicated region
    $region26: #{policy_forward.1} parent=1 // pred_check
      _
    $region27: #{policy_forward.1} parent=1 // pred_check_branch
      %68 = sbr.rel (0) target = $region29
    $region28: #{policy_forward.1} parent=1 // pred_region
      %70 = dma.done [#allocation5], 32
    $region29: #{policy_forward.1} parent=1 // pred_fallthru
      _
    // Predicated region
    $region30: #{policy_forward.1} parent=1 // pred_check
      _
    $region31: #{policy_forward.1} parent=1 // pred_check_branch
      %72 = sbr.rel (0) target = $region33
    $region32: #{policy_forward.1} parent=1 // pred_region
      %74 = dma.done [#allocation5], 2048
    $region33: #{policy_forward.1} parent=1 // pred_fallthru
      _
    // Predicated region
    $region34: #{policy_forward.1} parent=1 // pred_check
      _
    $region35: #{policy_forward.1} parent=1 // pred_check_branch
      %76 = sbr.rel (0) target = $region37
    $region36: #{policy_forward.1} parent=1 // pred_region
      %78 = dma.done [#allocation8], 16
    $region37: #{policy_forward.1} parent=1 // pred_fallthru
      _
    %v79 = vld [vmem:[%s0] sm:$0xff]
    %v80 = vld [vmem:[%s0 + $0x8] sm:$0xff]
    %v81 = vld [vmem:[%s0 + $0x10] sm:$0xff]
    %v82 = vld [vmem:[%s0 + $0x18] sm:$0xff]
    %v83 = vld [vmem:[%s0 + $0x20] sm:$0xff]
    %v84 = vld [vmem:[%s0 + $0x28] sm:$0xff]
    %v85 = vld [vmem:[%s0 + $0x30] sm:$0xff]
    %v86 = vld [vmem:[%s0 + $0x38] sm:$0xff]
    %v87 = vld [vmem:[%s0 + $0x40] sm:$0xff]
    %v88 = vld [vmem:[%s0 + $0x48] sm:$0xff]
    %v89 = vld [vmem:[%s0 + $0x50] sm:$0xff]
    %v90 = vld [vmem:[%s0 + $0x58] sm:$0xff]
    %v91 = vld [vmem:[%s0 + $0x60] sm:$0xff]
    %v92 = vld [vmem:[%s0 + $0x68] sm:$0xff]
    %v93 = vld [vmem:[%s0 + $0x70] sm:$0xff]
    %v94 = vld [vmem:[%s0 + $0x78] sm:$0xff]
    %v95 = vld [vmem:[%s0 + $0x80] sm:$0xff]
    %v96 = vld [vmem:[%s0 + $0x88] sm:$0xff]
    %v97 = vld [vmem:[%s0 + $0x90] sm:$0xff]
    %v98 = vld [vmem:[%s0 + $0x98] sm:$0xff]
    %v99 = vld [vmem:[%s0 + $0xa0] sm:$0xff]
    %v100 = vld [vmem:[%s0 + $0xa8] sm:$0xff]
    %v101 = vld [vmem:[%s0 + $0xb0] sm:$0xff]
    %v102 = vld [vmem:[%s0 + $0xb8] sm:$0xff]
    %v103 = vld [vmem:[%s0 + $0xc0] sm:$0xff]
    %v104 = vld [vmem:[%s0 + $0xc8] sm:$0xff]
    %v105 = vld [vmem:[%s0 + $0xd0] sm:$0xff]
    %v106 = vld [vmem:[%s0 + $0xd8] sm:$0xff]
    %v107 = vld [vmem:[%s0 + $0xe0] sm:$0xff]
    %v108 = vld [vmem:[%s0 + $0xe8] sm:$0xff]
    %v109 = vld [vmem:[%s0 + $0xf0] sm:$0xff]
    %v110 = vld [vmem:[%s0 + $0xf8] sm:$0xff]
    %v111 = vld [vmem:[%s0 + $0x100] sm:$0xff]
    %v112 = vld [vmem:[%s0 + $0x108] sm:$0xff]
    %v113 = vld [vmem:[%s0 + $0x110] sm:$0xff]
    %v114 = vld [vmem:[%s0 + $0x118] sm:$0xff]
    %v115 = vld [vmem:[%s0 + $0x120] sm:$0xff]
    %v116 = vld [vmem:[%s0 + $0x128] sm:$0xff]
    %v117 = vld [vmem:[%s0 + $0x130] sm:$0xff]
    %v118 = vld [vmem:[%s0 + $0x138] sm:$0xff]
    %v119 = vld [vmem:[%s0 + $0x140] sm:$0xff]
    %v120 = vld [vmem:[%s0 + $0x148] sm:$0xff]
    %v121 = vld [vmem:[%s0 + $0x150] sm:$0xff]
    %v122 = vld [vmem:[%s0 + $0x158] sm:$0xff]
    %v123 = vld [vmem:[%s0 + $0x160] sm:$0xff]
    %v124 = vld [vmem:[%s0 + $0x168] sm:$0xff]
    %v125 = vld [vmem:[%s0 + $0x170] sm:$0xff]
    %v126 = vld [vmem:[%s0 + $0x178] sm:$0xff]
    %v127 = vld [vmem:[%s0 + $0x180] sm:$0xff]
    %v128 = vld [vmem:[%s0 + $0x188] sm:$0xff]
    %v129 = vunpack.c.0.s8 %v79
    %v130 = vunpack.c.0.s8 %v80
    %v131 = vunpack.c.0.s8 %v81
    %v132 = vunpack.c.0.s8 %v82
    %v133 = vunpack.c.0.s8 %v83
    %v134 = vunpack.c.0.s8 %v84
    %v135 = vunpack.c.0.s8 %v85
    %v136 = vunpack.c.0.s8 %v86
    %v137 = vunpack.c.0.s8 %v87
    %v138 = vunpack.c.0.s8 %v88
    %v139 = vunpack.c.0.s8 %v89
    %v140 = vunpack.c.0.s8 %v90
    %v141 = vunpack.c.0.s8 %v91
    %v142 = vunpack.c.0.s8 %v92
    %v143 = vunpack.c.0.s8 %v93
    %v144 = vunpack.c.0.s8 %v94
    %v145 = vunpack.c.0.s8 %v95
    %v146 = vunpack.c.0.s8 %v96
    %v147 = vunpack.c.0.s8 %v97
    %v148 = vunpack.c.0.s8 %v98
    %v149 = vunpack.c.0.s8 %v99
    %v150 = vunpack.c.0.s8 %v100
    %v151 = vunpack.c.0.s8 %v101
    %v152 = vunpack.c.0.s8 %v102
    %v153 = vunpack.c.0.s8 %v103
    %v154 = vunpack.c.0.s8 %v104
    %v155 = vunpack.c.0.s8 %v105
    %v156 = vunpack.c.0.s8 %v106
    %v157 = vunpack.c.0.s8 %v107
    %v158 = vunpack.c.0.s8 %v108
    %v159 = vunpack.c.0.s8 %v109
    %v160 = vunpack.c.0.s8 %v110
    %v161 = vunpack.c.0.s8 %v111
    %v162 = vunpack.c.0.s8 %v112
    %v163 = vunpack.c.0.s8 %v113
    %v164 = vunpack.c.0.s8 %v114
    %v165 = vunpack.c.0.s8 %v115
    %v166 = vunpack.c.0.s8 %v116
    %v167 = vunpack.c.0.s8 %v117
    %v168 = vunpack.c.0.s8 %v118
    %v169 = vunpack.c.0.s8 %v119
    %v170 = vunpack.c.0.s8 %v120
    %v171 = vunpack.c.0.s8 %v121
    %v172 = vunpack.c.0.s8 %v122
    %v173 = vunpack.c.0.s8 %v123
    %v174 = vunpack.c.0.s8 %v124
    %v175 = vunpack.c.0.s8 %v125
    %v176 = vunpack.c.0.s8 %v126
    %v177 = vunpack.c.0.s8 %v127
    %v178 = vunpack.c.0.s8 %v128
    %v179 = vunpack.c.1.s8 %v79
    %v180 = vunpack.c.1.s8 %v80
    %v181 = vunpack.c.1.s8 %v81
    %v182 = vunpack.c.1.s8 %v82
    %v183 = vunpack.c.1.s8 %v83
    %v184 = vunpack.c.1.s8 %v84
    %v185 = vunpack.c.1.s8 %v85
    %v186 = vunpack.c.1.s8 %v86
    %v187 = vunpack.c.1.s8 %v87
    %v188 = vunpack.c.1.s8 %v88
    %v189 = vunpack.c.1.s8 %v89
    %v190 = vunpack.c.1.s8 %v90
    %v191 = vunpack.c.1.s8 %v91
    %v192 = vunpack.c.1.s8 %v92
    %v193 = vunpack.c.1.s8 %v93
    %v194 = vunpack.c.1.s8 %v94
    %v195 = vunpack.c.1.s8 %v95
    %v196 = vunpack.c.1.s8 %v96
    %v197 = vunpack.c.1.s8 %v97
    %v198 = vunpack.c.1.s8 %v98
    %v199 = vunpack.c.1.s8 %v99
    %v200 = vunpack.c.1.s8 %v100
    %v201 = vunpack.c.1.s8 %v101
    %v202 = vunpack.c.1.s8 %v102
    %v203 = vunpack.c.1.s8 %v103
    %v204 = vunpack.c.1.s8 %v104
    %v205 = vunpack.c.1.s8 %v105
    %v206 = vunpack.c.1.s8 %v106
    %v207 = vunpack.c.1.s8 %v107
    %v208 = vunpack.c.1.s8 %v108
    %v209 = vunpack.c.1.s8 %v109
    %v210 = vunpack.c.1.s8 %v110
    %v211 = vunpack.c.1.s8 %v111
    %v212 = vunpack.c.1.s8 %v112
    %v213 = vunpack.c.1.s8 %v113
    %v214 = vunpack.c.1.s8 %v114
    %v215 = vunpack.c.1.s8 %v115
    %v216 = vunpack.c.1.s8 %v116
    %v217 = vunpack.c.1.s8 %v117
    %v218 = vunpack.c.1.s8 %v118
    %v219 = vunpack.c.1.s8 %v119
    %v220 = vunpack.c.1.s8 %v120
    %v221 = vunpack.c.1.s8 %v121
    %v222 = vunpack.c.1.s8 %v122
    %v223 = vunpack.c.1.s8 %v123
    %v224 = vunpack.c.1.s8 %v124
    %v225 = vunpack.c.1.s8 %v125
    %v226 = vunpack.c.1.s8 %v126
    %v227 = vunpack.c.1.s8 %v127
    %v228 = vunpack.c.1.s8 %v128
    %v229 = vunpack.c.2.s8 %v79
    %v230 = vunpack.c.2.s8 %v80
    %v231 = vunpack.c.2.s8 %v81
    %v232 = vunpack.c.2.s8 %v82
    %v233 = vunpack.c.2.s8 %v83
    %v234 = vunpack.c.2.s8 %v84
    %v235 = vunpack.c.2.s8 %v85
    %v236 = vunpack.c.2.s8 %v86
    %v237 = vunpack.c.2.s8 %v87
    %v238 = vunpack.c.2.s8 %v88
    %v239 = vunpack.c.2.s8 %v89
    %v240 = vunpack.c.2.s8 %v90
    %v241 = vunpack.c.2.s8 %v91
    %v242 = vunpack.c.2.s8 %v92
    %v243 = vunpack.c.2.s8 %v93
    %v244 = vunpack.c.2.s8 %v94
    %v245 = vunpack.c.2.s8 %v95
    %v246 = vunpack.c.2.s8 %v96
    %v247 = vunpack.c.2.s8 %v97
    %v248 = vunpack.c.2.s8 %v98
    %v249 = vunpack.c.2.s8 %v99
    %v250 = vunpack.c.2.s8 %v100
    %v251 = vunpack.c.2.s8 %v101
    %v252 = vunpack.c.2.s8 %v102
    %v253 = vunpack.c.2.s8 %v103
    %v254 = vunpack.c.2.s8 %v104
    %v255 = vunpack.c.2.s8 %v105
    %v256 = vunpack.c.2.s8 %v106
    %v257 = vunpack.c.2.s8 %v107
    %v258 = vunpack.c.2.s8 %v108
    %v259 = vunpack.c.2.s8 %v109
    %v260 = vunpack.c.2.s8 %v110
    %v261 = vunpack.c.2.s8 %v111
    %v262 = vunpack.c.2.s8 %v112
    %v263 = vunpack.c.2.s8 %v113
    %v264 = vunpack.c.2.s8 %v114
    %v265 = vunpack.c.2.s8 %v115
    %v266 = vunpack.c.2.s8 %v116
    %v267 = vunpack.c.2.s8 %v117
    %v268 = vunpack.c.2.s8 %v118
    %v269 = vunpack.c.2.s8 %v119
    %v270 = vunpack.c.2.s8 %v120
    %v271 = vunpack.c.2.s8 %v121
    %v272 = vunpack.c.2.s8 %v122
    %v273 = vunpack.c.2.s8 %v123
    %v274 = vunpack.c.2.s8 %v124
    %v275 = vunpack.c.2.s8 %v125
    %v276 = vunpack.c.2.s8 %v126
    %v277 = vunpack.c.2.s8 %v127
    %v278 = vunpack.c.2.s8 %v128
    %v279 = vunpack.c.3.s8 %v79
    %v280 = vunpack.c.3.s8 %v80
    %v281 = vunpack.c.3.s8 %v81
    %v282 = vunpack.c.3.s8 %v82
    %v283 = vunpack.c.3.s8 %v83
    %v284 = vunpack.c.3.s8 %v84
    %v285 = vunpack.c.3.s8 %v85
    %v286 = vunpack.c.3.s8 %v86
    %v287 = vunpack.c.3.s8 %v87
    %v288 = vunpack.c.3.s8 %v88
    %v289 = vunpack.c.3.s8 %v89
    %v290 = vunpack.c.3.s8 %v90
    %v291 = vunpack.c.3.s8 %v91
    %v292 = vunpack.c.3.s8 %v92
    %v293 = vunpack.c.3.s8 %v93
    %v294 = vunpack.c.3.s8 %v94
    %v295 = vunpack.c.3.s8 %v95
    %v296 = vunpack.c.3.s8 %v96
    %v297 = vunpack.c.3.s8 %v97
    %v298 = vunpack.c.3.s8 %v98
    %v299 = vunpack.c.3.s8 %v99
    %v300 = vunpack.c.3.s8 %v100
    %v301 = vunpack.c.3.s8 %v101
    %v302 = vunpack.c.3.s8 %v102
    %v303 = vunpack.c.3.s8 %v103
    %v304 = vunpack.c.3.s8 %v104
    %v305 = vunpack.c.3.s8 %v105
    %v306 = vunpack.c.3.s8 %v106
    %v307 = vunpack.c.3.s8 %v107
    %v308 = vunpack.c.3.s8 %v108
    %v309 = vunpack.c.3.s8 %v109
    %v310 = vunpack.c.3.s8 %v110
    %v311 = vunpack.c.3.s8 %v111
    %v312 = vunpack.c.3.s8 %v112
    %v313 = vunpack.c.3.s8 %v113
    %v314 = vunpack.c.3.s8 %v114
    %v315 = vunpack.c.3.s8 %v115
    %v316 = vunpack.c.3.s8 %v116
    %v317 = vunpack.c.3.s8 %v117
    %v318 = vunpack.c.3.s8 %v118
    %v319 = vunpack.c.3.s8 %v119
    %v320 = vunpack.c.3.s8 %v120
    %v321 = vunpack.c.3.s8 %v121
    %v322 = vunpack.c.3.s8 %v122
    %v323 = vunpack.c.3.s8 %v123
    %v324 = vunpack.c.3.s8 %v124
    %v325 = vunpack.c.3.s8 %v125
    %v326 = vunpack.c.3.s8 %v126
    %v327 = vunpack.c.3.s8 %v127
    %v328 = vunpack.c.3.s8 %v128
    %v329 = vcvt.s32.f32 %v129
    %v330 = vcvt.s32.f32 %v130
    %v331 = vcvt.s32.f32 %v131
    %v332 = vcvt.s32.f32 %v132
    %v333 = vcvt.s32.f32 %v133
    %v334 = vcvt.s32.f32 %v134
    %v335 = vcvt.s32.f32 %v135
    %v336 = vcvt.s32.f32 %v136
    %v337 = vcvt.s32.f32 %v137
    %v338 = vcvt.s32.f32 %v138
    %v339 = vcvt.s32.f32 %v139
    %v340 = vcvt.s32.f32 %v140
    %v341 = vcvt.s32.f32 %v141
    %v342 = vcvt.s32.f32 %v142
    %v343 = vcvt.s32.f32 %v143
    %v344 = vcvt.s32.f32 %v144
    %v345 = vcvt.s32.f32 %v145
    %v346 = vcvt.s32.f32 %v146
    %v347 = vcvt.s32.f32 %v147
    %v348 = vcvt.s32.f32 %v148
    %v349 = vcvt.s32.f32 %v149
    %v350 = vcvt.s32.f32 %v150
    %v351 = vcvt.s32.f32 %v151
    %v352 = vcvt.s32.f32 %v152
    %v353 = vcvt.s32.f32 %v153
    %v354 = vcvt.s32.f32 %v154
    %v355 = vcvt.s32.f32 %v155
    %v356 = vcvt.s32.f32 %v156
    %v357 = vcvt.s32.f32 %v157
    %v358 = vcvt.s32.f32 %v158
    %v359 = vcvt.s32.f32 %v159
    %v360 = vcvt.s32.f32 %v160
    %v361 = vcvt.s32.f32 %v161
    %v362 = vcvt.s32.f32 %v162
    %v363 = vcvt.s32.f32 %v163
    %v364 = vcvt.s32.f32 %v164
    %v365 = vcvt.s32.f32 %v165
    %v366 = vcvt.s32.f32 %v166
    %v367 = vcvt.s32.f32 %v167
    %v368 = vcvt.s32.f32 %v168
    %v369 = vcvt.s32.f32 %v169
    %v370 = vcvt.s32.f32 %v170
    %v371 = vcvt.s32.f32 %v171
    %v372 = vcvt.s32.f32 %v172
    %v373 = vcvt.s32.f32 %v173
    %v374 = vcvt.s32.f32 %v174
    %v375 = vcvt.s32.f32 %v175
    %v376 = vcvt.s32.f32 %v176
    %v377 = vcvt.s32.f32 %v177
    %v378 = vcvt.s32.f32 %v178
    %v379 = vcvt.s32.f32 %v179
    %v380 = vcvt.s32.f32 %v180
    %v381 = vcvt.s32.f32 %v181
    %v382 = vcvt.s32.f32 %v182
    %v383 = vcvt.s32.f32 %v183
    %v384 = vcvt.s32.f32 %v184
    %v385 = vcvt.s32.f32 %v185
    %v386 = vcvt.s32.f32 %v186
    %v387 = vcvt.s32.f32 %v187
    %v388 = vcvt.s32.f32 %v188
    %v389 = vcvt.s32.f32 %v189
    %v390 = vcvt.s32.f32 %v190
    %v391 = vcvt.s32.f32 %v191
    %v392 = vcvt.s32.f32 %v192
    %v393 = vcvt.s32.f32 %v193
    %v394 = vcvt.s32.f32 %v194
    %v395 = vcvt.s32.f32 %v195
    %v396 = vcvt.s32.f32 %v196
    %v397 = vcvt.s32.f32 %v197
    %v398 = vcvt.s32.f32 %v198
    %v399 = vcvt.s32.f32 %v199
    %v400 = vcvt.s32.f32 %v200
    %v401 = vcvt.s32.f32 %v201
    %v402 = vcvt.s32.f32 %v202
    %v403 = vcvt.s32.f32 %v203
    %v404 = vcvt.s32.f32 %v204
    %v405 = vcvt.s32.f32 %v205
    %v406 = vcvt.s32.f32 %v206
    %v407 = vcvt.s32.f32 %v207
    %v408 = vcvt.s32.f32 %v208
    %v409 = vcvt.s32.f32 %v209
    %v410 = vcvt.s32.f32 %v210
    %v411 = vcvt.s32.f32 %v211
    %v412 = vcvt.s32.f32 %v212
    %v413 = vcvt.s32.f32 %v213
    %v414 = vcvt.s32.f32 %v214
    %v415 = vcvt.s32.f32 %v215
    %v416 = vcvt.s32.f32 %v216
    %v417 = vcvt.s32.f32 %v217
    %v418 = vcvt.s32.f32 %v218
    %v419 = vcvt.s32.f32 %v219
    %v420 = vcvt.s32.f32 %v220
    %v421 = vcvt.s32.f32 %v221
    %v422 = vcvt.s32.f32 %v222
    %v423 = vcvt.s32.f32 %v223
    %v424 = vcvt.s32.f32 %v224
    %v425 = vcvt.s32.f32 %v225
    %v426 = vcvt.s32.f32 %v226
    %v427 = vcvt.s32.f32 %v227
    %v428 = vcvt.s32.f32 %v228
    %v429 = vcvt.s32.f32 %v229
    %v430 = vcvt.s32.f32 %v230
    %v431 = vcvt.s32.f32 %v231
    %v432 = vcvt.s32.f32 %v232
    %v433 = vcvt.s32.f32 %v233
    %v434 = vcvt.s32.f32 %v234
    %v435 = vcvt.s32.f32 %v235
    %v436 = vcvt.s32.f32 %v236
    %v437 = vcvt.s32.f32 %v237
    %v438 = vcvt.s32.f32 %v238
    %v439 = vcvt.s32.f32 %v239
    %v440 = vcvt.s32.f32 %v240
    %v441 = vcvt.s32.f32 %v241
    %v442 = vcvt.s32.f32 %v242
    %v443 = vcvt.s32.f32 %v243
    %v444 = vcvt.s32.f32 %v244
    %v445 = vcvt.s32.f32 %v245
    %v446 = vcvt.s32.f32 %v246
    %v447 = vcvt.s32.f32 %v247
    %v448 = vcvt.s32.f32 %v248
    %v449 = vcvt.s32.f32 %v249
    %v450 = vcvt.s32.f32 %v250
    %v451 = vcvt.s32.f32 %v251
    %v452 = vcvt.s32.f32 %v252
    %v453 = vcvt.s32.f32 %v253
    %v454 = vcvt.s32.f32 %v254
    %v455 = vcvt.s32.f32 %v255
    %v456 = vcvt.s32.f32 %v256
    %v457 = vcvt.s32.f32 %v257
    %v458 = vcvt.s32.f32 %v258
    %v459 = vcvt.s32.f32 %v259
    %v460 = vcvt.s32.f32 %v260
    %v461 = vcvt.s32.f32 %v261
    %v462 = vcvt.s32.f32 %v262
    %v463 = vcvt.s32.f32 %v263
    %v464 = vcvt.s32.f32 %v264
    %v465 = vcvt.s32.f32 %v265
    %v466 = vcvt.s32.f32 %v266
    %v467 = vcvt.s32.f32 %v267
    %v468 = vcvt.s32.f32 %v268
    %v469 = vcvt.s32.f32 %v269
    %v470 = vcvt.s32.f32 %v270
    %v471 = vcvt.s32.f32 %v271
    %v472 = vcvt.s32.f32 %v272
    %v473 = vcvt.s32.f32 %v273
    %v474 = vcvt.s32.f32 %v274
    %v475 = vcvt.s32.f32 %v275
    %v476 = vcvt.s32.f32 %v276
    %v477 = vcvt.s32.f32 %v277
    %v478 = vcvt.s32.f32 %v278
    %v479 = vcvt.s32.f32 %v279
    %v480 = vcvt.s32.f32 %v280
    %v481 = vcvt.s32.f32 %v281
    %v482 = vcvt.s32.f32 %v282
    %v483 = vcvt.s32.f32 %v283
    %v484 = vcvt.s32.f32 %v284
    %v485 = vcvt.s32.f32 %v285
    %v486 = vcvt.s32.f32 %v286
    %v487 = vcvt.s32.f32 %v287
    %v488 = vcvt.s32.f32 %v288
    %v489 = vcvt.s32.f32 %v289
    %v490 = vcvt.s32.f32 %v290
    %v491 = vcvt.s32.f32 %v291
    %v492 = vcvt.s32.f32 %v292
    %v493 = vcvt.s32.f32 %v293
    %v494 = vcvt.s32.f32 %v294
    %v495 = vcvt.s32.f32 %v295
    %v496 = vcvt.s32.f32 %v296
    %v497 = vcvt.s32.f32 %v297
    %v498 = vcvt.s32.f32 %v298
    %v499 = vcvt.s32.f32 %v299
    %v500 = vcvt.s32.f32 %v300
    %v501 = vcvt.s32.f32 %v301
    %v502 = vcvt.s32.f32 %v302
    %v503 = vcvt.s32.f32 %v303
    %v504 = vcvt.s32.f32 %v304
    %v505 = vcvt.s32.f32 %v305
    %v506 = vcvt.s32.f32 %v306
    %v507 = vcvt.s32.f32 %v307
    %v508 = vcvt.s32.f32 %v308
    %v509 = vcvt.s32.f32 %v309
    %v510 = vcvt.s32.f32 %v310
    %v511 = vcvt.s32.f32 %v311
    %v512 = vcvt.s32.f32 %v312
    %v513 = vcvt.s32.f32 %v313
    %v514 = vcvt.s32.f32 %v314
    %v515 = vcvt.s32.f32 %v315
    %v516 = vcvt.s32.f32 %v316
    %v517 = vcvt.s32.f32 %v317
    %v518 = vcvt.s32.f32 %v318
    %v519 = vcvt.s32.f32 %v319
    %v520 = vcvt.s32.f32 %v320
    %v521 = vcvt.s32.f32 %v321
    %v522 = vcvt.s32.f32 %v322
    %v523 = vcvt.s32.f32 %v323
    %v524 = vcvt.s32.f32 %v324
    %v525 = vcvt.s32.f32 %v325
    %v526 = vcvt.s32.f32 %v326
    %v527 = vcvt.s32.f32 %v327
    %v528 = vcvt.s32.f32 %v328
    %v529 = vpack.c.bf16 %v379, %v329
    %v530 = vpack.c.bf16 %v380, %v330
    %v531 = vpack.c.bf16 %v381, %v331
    %v532 = vpack.c.bf16 %v382, %v332
    %v533 = vpack.c.bf16 %v383, %v333
    %v534 = vpack.c.bf16 %v384, %v334
    %v535 = vpack.c.bf16 %v385, %v335
    %v536 = vpack.c.bf16 %v386, %v336
    %v537 = vpack.c.bf16 %v387, %v337
    %v538 = vpack.c.bf16 %v388, %v338
    %v539 = vpack.c.bf16 %v389, %v339
    %v540 = vpack.c.bf16 %v390, %v340
    %v541 = vpack.c.bf16 %v391, %v341
    %v542 = vpack.c.bf16 %v392, %v342
    %v543 = vpack.c.bf16 %v393, %v343
    %v544 = vpack.c.bf16 %v394, %v344
    %v545 = vpack.c.bf16 %v395, %v345
    %v546 = vpack.c.bf16 %v396, %v346
    %v547 = vpack.c.bf16 %v397, %v347
    %v548 = vpack.c.bf16 %v398, %v348
    %v549 = vpack.c.bf16 %v399, %v349
    %v550 = vpack.c.bf16 %v400, %v350
    %v551 = vpack.c.bf16 %v401, %v351
    %v552 = vpack.c.bf16 %v402, %v352
    %v553 = vpack.c.bf16 %v403, %v353
    %v554 = vpack.c.bf16 %v404, %v354
    %v555 = vpack.c.bf16 %v405, %v355
    %v556 = vpack.c.bf16 %v406, %v356
    %v557 = vpack.c.bf16 %v407, %v357
    %v558 = vpack.c.bf16 %v408, %v358
    %v559 = vpack.c.bf16 %v409, %v359
    %v560 = vpack.c.bf16 %v410, %v360
    %v561 = vpack.c.bf16 %v411, %v361
    %v562 = vpack.c.bf16 %v412, %v362
    %v563 = vpack.c.bf16 %v413, %v363
    %v564 = vpack.c.bf16 %v414, %v364
    %v565 = vpack.c.bf16 %v415, %v365
    %v566 = vpack.c.bf16 %v416, %v366
    %v567 = vpack.c.bf16 %v417, %v367
    %v568 = vpack.c.bf16 %v418, %v368
    %v569 = vpack.c.bf16 %v419, %v369
    %v570 = vpack.c.bf16 %v420, %v370
    %v571 = vpack.c.bf16 %v421, %v371
    %v572 = vpack.c.bf16 %v422, %v372
    %v573 = vpack.c.bf16 %v423, %v373
    %v574 = vpack.c.bf16 %v424, %v374
    %v575 = vpack.c.bf16 %v425, %v375
    %v576 = vpack.c.bf16 %v426, %v376
    %v577 = vpack.c.bf16 %v427, %v377
    %v578 = vpack.c.bf16 %v428, %v378
    %v579 = vpack.c.bf16 %v479, %v429
    %v580 = vpack.c.bf16 %v480, %v430
    %v581 = vpack.c.bf16 %v481, %v431
    %v582 = vpack.c.bf16 %v482, %v432
    %v583 = vpack.c.bf16 %v483, %v433
    %v584 = vpack.c.bf16 %v484, %v434
    %v585 = vpack.c.bf16 %v485, %v435
    %v586 = vpack.c.bf16 %v486, %v436
    %v587 = vpack.c.bf16 %v487, %v437
    %v588 = vpack.c.bf16 %v488, %v438
    %v589 = vpack.c.bf16 %v489, %v439
    %v590 = vpack.c.bf16 %v490, %v440
    %v591 = vpack.c.bf16 %v491, %v441
    %v592 = vpack.c.bf16 %v492, %v442
    %v593 = vpack.c.bf16 %v493, %v443
    %v594 = vpack.c.bf16 %v494, %v444
    %v595 = vpack.c.bf16 %v495, %v445
    %v596 = vpack.c.bf16 %v496, %v446
    %v597 = vpack.c.bf16 %v497, %v447
    %v598 = vpack.c.bf16 %v498, %v448
    %v599 = vpack.c.bf16 %v499, %v449
    %v600 = vpack.c.bf16 %v500, %v450
    %v601 = vpack.c.bf16 %v501, %v451
    %v602 = vpack.c.bf16 %v502, %v452
    %v603 = vpack.c.bf16 %v503, %v453
    %v604 = vpack.c.bf16 %v504, %v454
    %v605 = vpack.c.bf16 %v505, %v455
    %v606 = vpack.c.bf16 %v506, %v456
    %v607 = vpack.c.bf16 %v507, %v457
    %v608 = vpack.c.bf16 %v508, %v458
    %v609 = vpack.c.bf16 %v509, %v459
    %v610 = vpack.c.bf16 %v510, %v460
    %v611 = vpack.c.bf16 %v511, %v461
    %v612 = vpack.c.bf16 %v512, %v462
    %v613 = vpack.c.bf16 %v513, %v463
    %v614 = vpack.c.bf16 %v514, %v464
    %v615 = vpack.c.bf16 %v515, %v465
    %v616 = vpack.c.bf16 %v516, %v466
    %v617 = vpack.c.bf16 %v517, %v467
    %v618 = vpack.c.bf16 %v518, %v468
    %v619 = vpack.c.bf16 %v519, %v469
    %v620 = vpack.c.bf16 %v520, %v470
    %v621 = vpack.c.bf16 %v521, %v471
    %v622 = vpack.c.bf16 %v522, %v472
    %v623 = vpack.c.bf16 %v523, %v473
    %v624 = vpack.c.bf16 %v524, %v474
    %v625 = vpack.c.bf16 %v525, %v475
    %v626 = vpack.c.bf16 %v526, %v476
    %v627 = vpack.c.bf16 %v527, %v477
    %v628 = vpack.c.bf16 %v528, %v478
    %v629 = vld [vmem:[#allocation2] sm:$0xff]
    %v630 = vld [vmem:[#allocation2 + $0x8] sm:$0xff]
    %v631 = vld [vmem:[#allocation2 + $0x10] sm:$0xff]
    %v632 = vld [vmem:[#allocation2 + $0x18] sm:$0xff]
    %v633 = vld [vmem:[#allocation2 + $0x20] sm:$0xff]
    %v634 = vld [vmem:[#allocation2 + $0x28] sm:$0xff]
    %v635 = vld [vmem:[#allocation2 + $0x30] sm:$0xff]
    %v636 = vld [vmem:[#allocation2 + $0x38] sm:$0xff]
    %v637 = vld [vmem:[#allocation2 + $0x40] sm:$0xff]
    %v638 = vld [vmem:[#allocation2 + $0x48] sm:$0xff]
    %v639 = vld [vmem:[#allocation2 + $0x50] sm:$0xff]
    %v640 = vld [vmem:[#allocation2 + $0x58] sm:$0xff]
    %v641 = vld [vmem:[#allocation2 + $0x60] sm:$0xff]
    %v642 = vld [vmem:[#allocation2 + $0x68] sm:$0xff]
    %v643 = vld [vmem:[#allocation2 + $0x70] sm:$0xff]
    %v644 = vld [vmem:[#allocation2 + $0x78] sm:$0xff]
    %v645 = vld [vmem:[#allocation2 + $0x80] sm:$0xff]
    %v646 = vld [vmem:[#allocation2 + $0x88] sm:$0xff]
    %v647 = vld [vmem:[#allocation2 + $0x90] sm:$0xff]
    %v648 = vld [vmem:[#allocation2 + $0x98] sm:$0xff]
    %v649 = vld [vmem:[#allocation2 + $0xa0] sm:$0xff]
    %v650 = vld [vmem:[#allocation2 + $0xa8] sm:$0xff]
    %v651 = vld [vmem:[#allocation2 + $0xb0] sm:$0xff]
    %v652 = vld [vmem:[#allocation2 + $0xb8] sm:$0xff]
    %v653 = vld [vmem:[#allocation2 + $0xc0] sm:$0xff]
    %v654 = vld [vmem:[#allocation2 + $0xc8] sm:$0xff]
    %v655 = vld [vmem:[#allocation2 + $0xd0] sm:$0xff]
    %v656 = vld [vmem:[#allocation2 + $0xd8] sm:$0xff]
    %v657 = vld [vmem:[#allocation2 + $0xe0] sm:$0xff]
    %v658 = vld [vmem:[#allocation2 + $0xe8] sm:$0xff]
    %v659 = vld [vmem:[#allocation2 + $0xf0] sm:$0xff]
    %v660 = vld [vmem:[#allocation2 + $0xf8] sm:$0xff]
    %v661 = vld [vmem:[#allocation2 + $0x100] sm:$0xff]
    %v662 = vld [vmem:[#allocation2 + $0x108] sm:$0xff]
    %v663 = vld [vmem:[#allocation2 + $0x110] sm:$0xff]
    %v664 = vld [vmem:[#allocation2 + $0x118] sm:$0xff]
    %v665 = vld [vmem:[#allocation2 + $0x120] sm:$0xff]
    %v666 = vld [vmem:[#allocation2 + $0x128] sm:$0xff]
    %v667 = vld [vmem:[#allocation2 + $0x130] sm:$0xff]
    %v668 = vld [vmem:[#allocation2 + $0x138] sm:$0xff]
    %v669 = vld [vmem:[#allocation2 + $0x140] sm:$0xff]
    %v670 = vld [vmem:[#allocation2 + $0x148] sm:$0xff]
    %v671 = vld [vmem:[#allocation2 + $0x150] sm:$0xff]
    %v672 = vld [vmem:[#allocation2 + $0x158] sm:$0xff]
    %v673 = vld [vmem:[#allocation2 + $0x160] sm:$0xff]
    %v674 = vld [vmem:[#allocation2 + $0x168] sm:$0xff]
    %v675 = vld [vmem:[#allocation2 + $0x170] sm:$0xff]
    %v676 = vld [vmem:[#allocation2 + $0x178] sm:$0xff]
    %v677 = vld [vmem:[#allocation2 + $0x180] sm:$0xff]
    %v678 = vld [vmem:[#allocation2 + $0x188] sm:$0xff]
    %v679 = vld [vmem:[#allocation2 + $0x190] sm:$0xff]
    %v680 = vld [vmem:[#allocation2 + $0x198] sm:$0xff]
    %v681 = vld [vmem:[#allocation2 + $0x1a0] sm:$0xff]
    %v682 = vld [vmem:[#allocation2 + $0x1a8] sm:$0xff]
    %v683 = vld [vmem:[#allocation2 + $0x1b0] sm:$0xff]
    %v684 = vld [vmem:[#allocation2 + $0x1b8] sm:$0xff]
    %v685 = vld [vmem:[#allocation2 + $0x1c0] sm:$0xff]
    %v686 = vld [vmem:[#allocation2 + $0x1c8] sm:$0xff]
    %v687 = vld [vmem:[#allocation2 + $0x1d0] sm:$0xff]
    %v688 = vld [vmem:[#allocation2 + $0x1d8] sm:$0xff]
    %v689 = vld [vmem:[#allocation2 + $0x1e0] sm:$0xff]
    %v690 = vld [vmem:[#allocation2 + $0x1e8] sm:$0xff]
    %v691 = vld [vmem:[#allocation2 + $0x1f0] sm:$0xff]
    %v692 = vld [vmem:[#allocation2 + $0x1f8] sm:$0xff]
    %v693 = vld [vmem:[#allocation2 + $0x200] sm:$0xff]
    %v694 = vld [vmem:[#allocation2 + $0x208] sm:$0xff]
    %v695 = vld [vmem:[#allocation2 + $0x210] sm:$0xff]
    %v696 = vld [vmem:[#allocation2 + $0x218] sm:$0xff]
    %v697 = vld [vmem:[#allocation2 + $0x220] sm:$0xff]
    %v698 = vld [vmem:[#allocation2 + $0x228] sm:$0xff]
    %v699 = vld [vmem:[#allocation2 + $0x230] sm:$0xff]
    %v700 = vld [vmem:[#allocation2 + $0x238] sm:$0xff]
    %v701 = vld [vmem:[#allocation2 + $0x240] sm:$0xff]
    %v702 = vld [vmem:[#allocation2 + $0x248] sm:$0xff]
    %v703 = vld [vmem:[#allocation2 + $0x250] sm:$0xff]
    %v704 = vld [vmem:[#allocation2 + $0x258] sm:$0xff]
    %v705 = vld [vmem:[#allocation2 + $0x260] sm:$0xff]
    %v706 = vld [vmem:[#allocation2 + $0x268] sm:$0xff]
    %v707 = vld [vmem:[#allocation2 + $0x270] sm:$0xff]
    %v708 = vld [vmem:[#allocation2 + $0x278] sm:$0xff]
    %v709 = vld [vmem:[#allocation2 + $0x280] sm:$0xff]
    %v710 = vld [vmem:[#allocation2 + $0x288] sm:$0xff]
    %v711 = vld [vmem:[#allocation2 + $0x290] sm:$0xff]
    %v712 = vld [vmem:[#allocation2 + $0x298] sm:$0xff]
    %v713 = vld [vmem:[#allocation2 + $0x2a0] sm:$0xff]
    %v714 = vld [vmem:[#allocation2 + $0x2a8] sm:$0xff]
    %v715 = vld [vmem:[#allocation2 + $0x2b0] sm:$0xff]
    %v716 = vld [vmem:[#allocation2 + $0x2b8] sm:$0xff]
    %v717 = vld [vmem:[#allocation2 + $0x2c0] sm:$0xff]
    %v718 = vld [vmem:[#allocation2 + $0x2c8] sm:$0xff]
    %v719 = vld [vmem:[#allocation2 + $0x2d0] sm:$0xff]
    %v720 = vld [vmem:[#allocation2 + $0x2d8] sm:$0xff]
    %v721 = vld [vmem:[#allocation2 + $0x2e0] sm:$0xff]
    %v722 = vld [vmem:[#allocation2 + $0x2e8] sm:$0xff]
    %v723 = vld [vmem:[#allocation2 + $0x2f0] sm:$0xff]
    %v724 = vld [vmem:[#allocation2 + $0x2f8] sm:$0xff]
    %v725 = vld [vmem:[#allocation2 + $0x300] sm:$0xff]
    %v726 = vld [vmem:[#allocation2 + $0x308] sm:$0xff]
    %v727 = vld [vmem:[#allocation2 + $0x310] sm:$0xff]
    %v728 = vld [vmem:[#allocation2 + $0x318] sm:$0xff]
    %v729 = vld [vmem:[#allocation2 + $0x320] sm:$0xff]
    %v730 = vld [vmem:[#allocation2 + $0x328] sm:$0xff]
    %v731 = vld [vmem:[#allocation2 + $0x330] sm:$0xff]
    %v732 = vld [vmem:[#allocation2 + $0x338] sm:$0xff]
    %v733 = vld [vmem:[#allocation2 + $0x340] sm:$0xff]
    %v734 = vld [vmem:[#allocation2 + $0x348] sm:$0xff]
    %v735 = vld [vmem:[#allocation2 + $0x350] sm:$0xff]
    %v736 = vld [vmem:[#allocation2 + $0x358] sm:$0xff]
    %v737 = vld [vmem:[#allocation2 + $0x360] sm:$0xff]
    %v738 = vld [vmem:[#allocation2 + $0x368] sm:$0xff]
    %v739 = vld [vmem:[#allocation2 + $0x370] sm:$0xff]
    %v740 = vld [vmem:[#allocation2 + $0x378] sm:$0xff]
    %v741 = vld [vmem:[#allocation2 + $0x380] sm:$0xff]
    %v742 = vld [vmem:[#allocation2 + $0x388] sm:$0xff]
    %v743 = vld [vmem:[#allocation2 + $0x390] sm:$0xff]
    %v744 = vld [vmem:[#allocation2 + $0x398] sm:$0xff]
    %v745 = vld [vmem:[#allocation2 + $0x3a0] sm:$0xff]
    %v746 = vld [vmem:[#allocation2 + $0x3a8] sm:$0xff]
    %v747 = vld [vmem:[#allocation2 + $0x3b0] sm:$0xff]
    %v748 = vld [vmem:[#allocation2 + $0x3b8] sm:$0xff]
    %v749 = vld [vmem:[#allocation2 + $0x3c0] sm:$0xff]
    %v750 = vld [vmem:[#allocation2 + $0x3c8] sm:$0xff]
    %v751 = vld [vmem:[#allocation2 + $0x3d0] sm:$0xff]
    %v752 = vld [vmem:[#allocation2 + $0x3d8] sm:$0xff]
    %v753 = vld [vmem:[#allocation2 + $0x3e0] sm:$0xff]
    %v754 = vld [vmem:[#allocation2 + $0x3e8] sm:$0xff]
    %v755 = vld [vmem:[#allocation2 + $0x3f0] sm:$0xff]
    %v756 = vld [vmem:[#allocation2 + $0x3f8] sm:$0xff]
    %v757 = vld [vmem:[#allocation2 + $0x400] sm:$0xff]
    %v758 = vld [vmem:[#allocation2 + $0x408] sm:$0xff]
    %v759 = vld [vmem:[#allocation2 + $0x410] sm:$0xff]
    %v760 = vld [vmem:[#allocation2 + $0x418] sm:$0xff]
    %v761 = vld [vmem:[#allocation2 + $0x420] sm:$0xff]
    %v762 = vld [vmem:[#allocation2 + $0x428] sm:$0xff]
    %v763 = vld [vmem:[#allocation2 + $0x430] sm:$0xff]
    %v764 = vld [vmem:[#allocation2 + $0x438] sm:$0xff]
    %v765 = vld [vmem:[#allocation2 + $0x440] sm:$0xff]
    %v766 = vld [vmem:[#allocation2 + $0x448] sm:$0xff]
    %v767 = vld [vmem:[#allocation2 + $0x450] sm:$0xff]
    %v768 = vld [vmem:[#allocation2 + $0x458] sm:$0xff]
    %v769 = vld [vmem:[#allocation2 + $0x460] sm:$0xff]
    %v770 = vld [vmem:[#allocation2 + $0x468] sm:$0xff]
    %v771 = vld [vmem:[#allocation2 + $0x470] sm:$0xff]
    %v772 = vld [vmem:[#allocation2 + $0x478] sm:$0xff]
    %v773 = vld [vmem:[#allocation2 + $0x480] sm:$0xff]
    %v774 = vld [vmem:[#allocation2 + $0x488] sm:$0xff]
    %v775 = vld [vmem:[#allocation2 + $0x490] sm:$0xff]
    %v776 = vld [vmem:[#allocation2 + $0x498] sm:$0xff]
    %v777 = vld [vmem:[#allocation2 + $0x4a0] sm:$0xff]
    %v778 = vld [vmem:[#allocation2 + $0x4a8] sm:$0xff]
    %v779 = vld [vmem:[#allocation2 + $0x4b0] sm:$0xff]
    %v780 = vld [vmem:[#allocation2 + $0x4b8] sm:$0xff]
    %v781 = vld [vmem:[#allocation2 + $0x4c0] sm:$0xff]
    %v782 = vld [vmem:[#allocation2 + $0x4c8] sm:$0xff]
    %v783 = vld [vmem:[#allocation2 + $0x4d0] sm:$0xff]
    %v784 = vld [vmem:[#allocation2 + $0x4d8] sm:$0xff]
    %v785 = vld [vmem:[#allocation2 + $0x4e0] sm:$0xff]
    %v786 = vld [vmem:[#allocation2 + $0x4e8] sm:$0xff]
    %v787 = vld [vmem:[#allocation2 + $0x4f0] sm:$0xff]
    %v788 = vld [vmem:[#allocation2 + $0x4f8] sm:$0xff]
    %v789 = vld [vmem:[#allocation2 + $0x500] sm:$0xff]
    %v790 = vld [vmem:[#allocation2 + $0x508] sm:$0xff]
    %v791 = vld [vmem:[#allocation2 + $0x510] sm:$0xff]
    %v792 = vld [vmem:[#allocation2 + $0x518] sm:$0xff]
    %v793 = vld [vmem:[#allocation2 + $0x520] sm:$0xff]
    %v794 = vld [vmem:[#allocation2 + $0x528] sm:$0xff]
    %v795 = vld [vmem:[#allocation2 + $0x530] sm:$0xff]
    %v796 = vld [vmem:[#allocation2 + $0x538] sm:$0xff]
    %v797 = vld [vmem:[#allocation2 + $0x540] sm:$0xff]
    %v798 = vld [vmem:[#allocation2 + $0x548] sm:$0xff]
    %v799 = vld [vmem:[#allocation2 + $0x550] sm:$0xff]
    %v800 = vld [vmem:[#allocation2 + $0x558] sm:$0xff]
    %v801 = vld [vmem:[#allocation2 + $0x560] sm:$0xff]
    %v802 = vld [vmem:[#allocation2 + $0x568] sm:$0xff]
    %v803 = vld [vmem:[#allocation2 + $0x570] sm:$0xff]
    %v804 = vld [vmem:[#allocation2 + $0x578] sm:$0xff]
    %v805 = vld [vmem:[#allocation2 + $0x580] sm:$0xff]
    %v806 = vld [vmem:[#allocation2 + $0x588] sm:$0xff]
    %v807 = vld [vmem:[#allocation2 + $0x590] sm:$0xff]
    %v808 = vld [vmem:[#allocation2 + $0x598] sm:$0xff]
    %v809 = vld [vmem:[#allocation2 + $0x5a0] sm:$0xff]
    %v810 = vld [vmem:[#allocation2 + $0x5a8] sm:$0xff]
    %v811 = vld [vmem:[#allocation2 + $0x5b0] sm:$0xff]
    %v812 = vld [vmem:[#allocation2 + $0x5b8] sm:$0xff]
    %v813 = vld [vmem:[#allocation2 + $0x5c0] sm:$0xff]
    %v814 = vld [vmem:[#allocation2 + $0x5c8] sm:$0xff]
    %v815 = vld [vmem:[#allocation2 + $0x5d0] sm:$0xff]
    %v816 = vld [vmem:[#allocation2 + $0x5d8] sm:$0xff]
    %v817 = vld [vmem:[#allocation2 + $0x5e0] sm:$0xff]
    %v818 = vld [vmem:[#allocation2 + $0x5e8] sm:$0xff]
    %v819 = vld [vmem:[#allocation2 + $0x5f0] sm:$0xff]
    %v820 = vld [vmem:[#allocation2 + $0x5f8] sm:$0xff]
    %v821 = vld [vmem:[#allocation2 + $0x600] sm:$0xff]
    %v822 = vld [vmem:[#allocation2 + $0x608] sm:$0xff]
    %v823 = vld [vmem:[#allocation2 + $0x610] sm:$0xff]
    %v824 = vld [vmem:[#allocation2 + $0x618] sm:$0xff]
    %v825 = vld [vmem:[#allocation2 + $0x620] sm:$0xff]
    %v826 = vld [vmem:[#allocation2 + $0x628] sm:$0xff]
    %v827 = vld [vmem:[#allocation2 + $0x630] sm:$0xff]
    %v828 = vld [vmem:[#allocation2 + $0x638] sm:$0xff]
    %v829 = vld [vmem:[#allocation2 + $0x640] sm:$0xff]
    %v830 = vld [vmem:[#allocation2 + $0x648] sm:$0xff]
    %v831 = vld [vmem:[#allocation2 + $0x650] sm:$0xff]
    %v832 = vld [vmem:[#allocation2 + $0x658] sm:$0xff]
    %v833 = vld [vmem:[#allocation2 + $0x660] sm:$0xff]
    %v834 = vld [vmem:[#allocation2 + $0x668] sm:$0xff]
    %v835 = vld [vmem:[#allocation2 + $0x670] sm:$0xff]
    %v836 = vld [vmem:[#allocation2 + $0x678] sm:$0xff]
    %v837 = vld [vmem:[#allocation2 + $0x680] sm:$0xff]
    %v838 = vld [vmem:[#allocation2 + $0x688] sm:$0xff]
    %v839 = vld [vmem:[#allocation2 + $0x690] sm:$0xff]
    %v840 = vld [vmem:[#allocation2 + $0x698] sm:$0xff]
    %v841 = vld [vmem:[#allocation2 + $0x6a0] sm:$0xff]
    %v842 = vld [vmem:[#allocation2 + $0x6a8] sm:$0xff]
    %v843 = vld [vmem:[#allocation2 + $0x6b0] sm:$0xff]
    %v844 = vld [vmem:[#allocation2 + $0x6b8] sm:$0xff]
    %v845 = vld [vmem:[#allocation2 + $0x6c0] sm:$0xff]
    %v846 = vld [vmem:[#allocation2 + $0x6c8] sm:$0xff]
    %v847 = vld [vmem:[#allocation2 + $0x6d0] sm:$0xff]
    %v848 = vld [vmem:[#allocation2 + $0x6d8] sm:$0xff]
    %v849 = vld [vmem:[#allocation2 + $0x6e0] sm:$0xff]
    %v850 = vld [vmem:[#allocation2 + $0x6e8] sm:$0xff]
    %v851 = vld [vmem:[#allocation2 + $0x6f0] sm:$0xff]
    %v852 = vld [vmem:[#allocation2 + $0x6f8] sm:$0xff]
    %v853 = vld [vmem:[#allocation2 + $0x700] sm:$0xff]
    %v854 = vld [vmem:[#allocation2 + $0x708] sm:$0xff]
    %v855 = vld [vmem:[#allocation2 + $0x710] sm:$0xff]
    %v856 = vld [vmem:[#allocation2 + $0x718] sm:$0xff]
    %v857 = vld [vmem:[#allocation2 + $0x720] sm:$0xff]
    %v858 = vld [vmem:[#allocation2 + $0x728] sm:$0xff]
    %v859 = vld [vmem:[#allocation2 + $0x730] sm:$0xff]
    %v860 = vld [vmem:[#allocation2 + $0x738] sm:$0xff]
    %v861 = vld [vmem:[#allocation2 + $0x740] sm:$0xff]
    %v862 = vld [vmem:[#allocation2 + $0x748] sm:$0xff]
    %v863 = vld [vmem:[#allocation2 + $0x750] sm:$0xff]
    %v864 = vld [vmem:[#allocation2 + $0x758] sm:$0xff]
    %v865 = vld [vmem:[#allocation2 + $0x760] sm:$0xff]
    %v866 = vld [vmem:[#allocation2 + $0x768] sm:$0xff]
    %v867 = vld [vmem:[#allocation2 + $0x770] sm:$0xff]
    %v868 = vld [vmem:[#allocation2 + $0x778] sm:$0xff]
    %v869 = vld [vmem:[#allocation2 + $0x780] sm:$0xff]
    %v870 = vld [vmem:[#allocation2 + $0x788] sm:$0xff]
    %v871 = vld [vmem:[#allocation2 + $0x790] sm:$0xff]
    %v872 = vld [vmem:[#allocation2 + $0x798] sm:$0xff]
    %v873 = vld [vmem:[#allocation2 + $0x7a0] sm:$0xff]
    %v874 = vld [vmem:[#allocation2 + $0x7a8] sm:$0xff]
    %v875 = vld [vmem:[#allocation2 + $0x7b0] sm:$0xff]
    %v876 = vld [vmem:[#allocation2 + $0x7b8] sm:$0xff]
    %v877 = vld [vmem:[#allocation2 + $0x7c0] sm:$0xff]
    %v878 = vld [vmem:[#allocation2 + $0x7c8] sm:$0xff]
    %v879 = vld [vmem:[#allocation2 + $0x7d0] sm:$0xff]
    %v880 = vld [vmem:[#allocation2 + $0x7d8] sm:$0xff]
    %v881 = vld [vmem:[#allocation2 + $0x7e0] sm:$0xff]
    %v882 = vld [vmem:[#allocation2 + $0x7e8] sm:$0xff]
    %v883 = vld [vmem:[#allocation2 + $0x7f0] sm:$0xff]
    %v884 = vld [vmem:[#allocation2 + $0x7f8] sm:$0xff]
    %v885 = vld [vmem:[#allocation2 + $0x800] sm:$0xff]
    %v886 = vld [vmem:[#allocation2 + $0x808] sm:$0xff]
    %v887 = vld [vmem:[#allocation2 + $0x810] sm:$0xff]
    %v888 = vld [vmem:[#allocation2 + $0x818] sm:$0xff]
    %v889 = vld [vmem:[#allocation2 + $0x820] sm:$0xff]
    %v890 = vld [vmem:[#allocation2 + $0x828] sm:$0xff]
    %v891 = vld [vmem:[#allocation2 + $0x830] sm:$0xff]
    %v892 = vld [vmem:[#allocation2 + $0x838] sm:$0xff]
    %v893 = vld [vmem:[#allocation2 + $0x840] sm:$0xff]
    %v894 = vld [vmem:[#allocation2 + $0x848] sm:$0xff]
    %v895 = vld [vmem:[#allocation2 + $0x850] sm:$0xff]
    %v896 = vld [vmem:[#allocation2 + $0x858] sm:$0xff]
    %v897 = vld [vmem:[#allocation2 + $0x860] sm:$0xff]
    %v898 = vld [vmem:[#allocation2 + $0x868] sm:$0xff]
    %v899 = vld [vmem:[#allocation2 + $0x870] sm:$0xff]
    %v900 = vld [vmem:[#allocation2 + $0x878] sm:$0xff]
    %v901 = vld [vmem:[#allocation2 + $0x880] sm:$0xff]
    %v902 = vld [vmem:[#allocation2 + $0x888] sm:$0xff]
    %v903 = vld [vmem:[#allocation2 + $0x890] sm:$0xff]
    %v904 = vld [vmem:[#allocation2 + $0x898] sm:$0xff]
    %v905 = vld [vmem:[#allocation2 + $0x8a0] sm:$0xff]
    %v906 = vld [vmem:[#allocation2 + $0x8a8] sm:$0xff]
    %v907 = vld [vmem:[#allocation2 + $0x8b0] sm:$0xff]
    %v908 = vld [vmem:[#allocation2 + $0x8b8] sm:$0xff]
    %v909 = vld [vmem:[#allocation2 + $0x8c0] sm:$0xff]
    %v910 = vld [vmem:[#allocation2 + $0x8c8] sm:$0xff]
    %v911 = vld [vmem:[#allocation2 + $0x8d0] sm:$0xff]
    %v912 = vld [vmem:[#allocation2 + $0x8d8] sm:$0xff]
    %v913 = vld [vmem:[#allocation2 + $0x8e0] sm:$0xff]
    %v914 = vld [vmem:[#allocation2 + $0x8e8] sm:$0xff]
    %v915 = vld [vmem:[#allocation2 + $0x8f0] sm:$0xff]
    %v916 = vld [vmem:[#allocation2 + $0x8f8] sm:$0xff]
    %v917 = vld [vmem:[#allocation2 + $0x900] sm:$0xff]
    %v918 = vld [vmem:[#allocation2 + $0x908] sm:$0xff]
    %v919 = vld [vmem:[#allocation2 + $0x910] sm:$0xff]
    %v920 = vld [vmem:[#allocation2 + $0x918] sm:$0xff]
    %v921 = vld [vmem:[#allocation2 + $0x920] sm:$0xff]
    %v922 = vld [vmem:[#allocation2 + $0x928] sm:$0xff]
    %v923 = vld [vmem:[#allocation2 + $0x930] sm:$0xff]
    %v924 = vld [vmem:[#allocation2 + $0x938] sm:$0xff]
    %v925 = vld [vmem:[#allocation2 + $0x940] sm:$0xff]
    %v926 = vld [vmem:[#allocation2 + $0x948] sm:$0xff]
    %v927 = vld [vmem:[#allocation2 + $0x950] sm:$0xff]
    %v928 = vld [vmem:[#allocation2 + $0x958] sm:$0xff]
    %v929 = vld [vmem:[#allocation2 + $0x960] sm:$0xff]
    %v930 = vld [vmem:[#allocation2 + $0x968] sm:$0xff]
    %v931 = vld [vmem:[#allocation2 + $0x970] sm:$0xff]
    %v932 = vld [vmem:[#allocation2 + $0x978] sm:$0xff]
    %v933 = vld [vmem:[#allocation2 + $0x980] sm:$0xff]
    %v934 = vld [vmem:[#allocation2 + $0x988] sm:$0xff]
    %v935 = vld [vmem:[#allocation2 + $0x990] sm:$0xff]
    %v936 = vld [vmem:[#allocation2 + $0x998] sm:$0xff]
    %v937 = vld [vmem:[#allocation2 + $0x9a0] sm:$0xff]
    %v938 = vld [vmem:[#allocation2 + $0x9a8] sm:$0xff]
    %v939 = vld [vmem:[#allocation2 + $0x9b0] sm:$0xff]
    %v940 = vld [vmem:[#allocation2 + $0x9b8] sm:$0xff]
    %v941 = vld [vmem:[#allocation2 + $0x9c0] sm:$0xff]
    %v942 = vld [vmem:[#allocation2 + $0x9c8] sm:$0xff]
    %v943 = vld [vmem:[#allocation2 + $0x9d0] sm:$0xff]
    %v944 = vld [vmem:[#allocation2 + $0x9d8] sm:$0xff]
    %v945 = vld [vmem:[#allocation2 + $0x9e0] sm:$0xff]
    %v946 = vld [vmem:[#allocation2 + $0x9e8] sm:$0xff]
    %v947 = vld [vmem:[#allocation2 + $0x9f0] sm:$0xff]
    %v948 = vld [vmem:[#allocation2 + $0x9f8] sm:$0xff]
    %v949 = vld [vmem:[#allocation2 + $0xa00] sm:$0xff]
    %v950 = vld [vmem:[#allocation2 + $0xa08] sm:$0xff]
    %v951 = vld [vmem:[#allocation2 + $0xa10] sm:$0xff]
    %v952 = vld [vmem:[#allocation2 + $0xa18] sm:$0xff]
    %v953 = vld [vmem:[#allocation2 + $0xa20] sm:$0xff]
    %v954 = vld [vmem:[#allocation2 + $0xa28] sm:$0xff]
    %v955 = vld [vmem:[#allocation2 + $0xa30] sm:$0xff]
    %v956 = vld [vmem:[#allocation2 + $0xa38] sm:$0xff]
    %v957 = vld [vmem:[#allocation2 + $0xa40] sm:$0xff]
    %v958 = vld [vmem:[#allocation2 + $0xa48] sm:$0xff]
    %v959 = vld [vmem:[#allocation2 + $0xa50] sm:$0xff]
    %v960 = vld [vmem:[#allocation2 + $0xa58] sm:$0xff]
    %v961 = vld [vmem:[#allocation2 + $0xa60] sm:$0xff]
    %v962 = vld [vmem:[#allocation2 + $0xa68] sm:$0xff]
    %v963 = vld [vmem:[#allocation2 + $0xa70] sm:$0xff]
    %v964 = vld [vmem:[#allocation2 + $0xa78] sm:$0xff]
    %v965 = vld [vmem:[#allocation2 + $0xa80] sm:$0xff]
    %v966 = vld [vmem:[#allocation2 + $0xa88] sm:$0xff]
    %v967 = vld [vmem:[#allocation2 + $0xa90] sm:$0xff]
    %v968 = vld [vmem:[#allocation2 + $0xa98] sm:$0xff]
    %v969 = vld [vmem:[#allocation2 + $0xaa0] sm:$0xff]
    %v970 = vld [vmem:[#allocation2 + $0xaa8] sm:$0xff]
    %v971 = vld [vmem:[#allocation2 + $0xab0] sm:$0xff]
    %v972 = vld [vmem:[#allocation2 + $0xab8] sm:$0xff]
    %v973 = vld [vmem:[#allocation2 + $0xac0] sm:$0xff]
    %v974 = vld [vmem:[#allocation2 + $0xac8] sm:$0xff]
    %v975 = vld [vmem:[#allocation2 + $0xad0] sm:$0xff]
    %v976 = vld [vmem:[#allocation2 + $0xad8] sm:$0xff]
    %v977 = vld [vmem:[#allocation2 + $0xae0] sm:$0xff]
    %v978 = vld [vmem:[#allocation2 + $0xae8] sm:$0xff]
    %v979 = vld [vmem:[#allocation2 + $0xaf0] sm:$0xff]
    %v980 = vld [vmem:[#allocation2 + $0xaf8] sm:$0xff]
    %v981 = vld [vmem:[#allocation2 + $0xb00] sm:$0xff]
    %v982 = vld [vmem:[#allocation2 + $0xb08] sm:$0xff]
    %v983 = vld [vmem:[#allocation2 + $0xb10] sm:$0xff]
    %v984 = vld [vmem:[#allocation2 + $0xb18] sm:$0xff]
    %v985 = vld [vmem:[#allocation2 + $0xb20] sm:$0xff]
    %v986 = vld [vmem:[#allocation2 + $0xb28] sm:$0xff]
    %v987 = vld [vmem:[#allocation2 + $0xb30] sm:$0xff]
    %v988 = vld [vmem:[#allocation2 + $0xb38] sm:$0xff]
    %v989 = vld [vmem:[#allocation2 + $0xb40] sm:$0xff]
    %v990 = vld [vmem:[#allocation2 + $0xb48] sm:$0xff]
    %v991 = vld [vmem:[#allocation2 + $0xb50] sm:$0xff]
    %v992 = vld [vmem:[#allocation2 + $0xb58] sm:$0xff]
    %v993 = vld [vmem:[#allocation2 + $0xb60] sm:$0xff]
    %v994 = vld [vmem:[#allocation2 + $0xb68] sm:$0xff]
    %v995 = vld [vmem:[#allocation2 + $0xb70] sm:$0xff]
    %v996 = vld [vmem:[#allocation2 + $0xb78] sm:$0xff]
    %v997 = vld [vmem:[#allocation2 + $0xb80] sm:$0xff]
    %v998 = vld [vmem:[#allocation2 + $0xb88] sm:$0xff]
    %v999 = vld [vmem:[#allocation2 + $0xb90] sm:$0xff]
    %v1000 = vld [vmem:[#allocation2 + $0xb98] sm:$0xff]
    %v1001 = vld [vmem:[#allocation2 + $0xba0] sm:$0xff]
    %v1002 = vld [vmem:[#allocation2 + $0xba8] sm:$0xff]
    %v1003 = vld [vmem:[#allocation2 + $0xbb0] sm:$0xff]
    %v1004 = vld [vmem:[#allocation2 + $0xbb8] sm:$0xff]
    %v1005 = vld [vmem:[#allocation2 + $0xbc0] sm:$0xff]
    %v1006 = vld [vmem:[#allocation2 + $0xbc8] sm:$0xff]
    %v1007 = vld [vmem:[#allocation2 + $0xbd0] sm:$0xff]
    %v1008 = vld [vmem:[#allocation2 + $0xbd8] sm:$0xff]
    %v1009 = vld [vmem:[#allocation2 + $0xbe0] sm:$0xff]
    %v1010 = vld [vmem:[#allocation2 + $0xbe8] sm:$0xff]
    %v1011 = vld [vmem:[#allocation2 + $0xbf0] sm:$0xff]
    %v1012 = vld [vmem:[#allocation2 + $0xbf8] sm:$0xff]
    %v1013 = vld [vmem:[#allocation2 + $0xc00] sm:$0xff]
    %v1014 = vld [vmem:[#allocation2 + $0xc08] sm:$0xff]
    %v1015 = vld [vmem:[#allocation2 + $0xc10] sm:$0xff]
    %v1016 = vld [vmem:[#allocation2 + $0xc18] sm:$0xff]
    %v1017 = vld [vmem:[#allocation2 + $0xc20] sm:$0xff]
    %v1018 = vld [vmem:[#allocation2 + $0xc28] sm:$0xff]
    %v1019 = vld [vmem:[#allocation2 + $0xc30] sm:$0xff]
    %v1020 = vld [vmem:[#allocation2 + $0xc38] sm:$0xff]
    %v1021 = vld [vmem:[#allocation2 + $0xc40] sm:$0xff]
    %v1022 = vld [vmem:[#allocation2 + $0xc48] sm:$0xff]
    %v1023 = vld [vmem:[#allocation2 + $0xc50] sm:$0xff]
    %v1024 = vld [vmem:[#allocation2 + $0xc58] sm:$0xff]
    %v1025 = vld [vmem:[#allocation2 + $0xc60] sm:$0xff]
    %v1026 = vld [vmem:[#allocation2 + $0xc68] sm:$0xff]
    %v1027 = vld [vmem:[#allocation2 + $0xc70] sm:$0xff]
    %v1028 = vld [vmem:[#allocation2 + $0xc78] sm:$0xff]
    %v1029 = vld [vmem:[#allocation2 + $0xc80] sm:$0xff]
    %v1030 = vld [vmem:[#allocation2 + $0xc88] sm:$0xff]
    %v1031 = vld [vmem:[#allocation2 + $0xc90] sm:$0xff]
    %v1032 = vld [vmem:[#allocation2 + $0xc98] sm:$0xff]
    %v1033 = vld [vmem:[#allocation2 + $0xca0] sm:$0xff]
    %v1034 = vld [vmem:[#allocation2 + $0xca8] sm:$0xff]
    %v1035 = vld [vmem:[#allocation2 + $0xcb0] sm:$0xff]
    %v1036 = vld [vmem:[#allocation2 + $0xcb8] sm:$0xff]
    %v1037 = vld [vmem:[#allocation2 + $0xcc0] sm:$0xff]
    %v1038 = vld [vmem:[#allocation2 + $0xcc8] sm:$0xff]
    %v1039 = vld [vmem:[#allocation2 + $0xcd0] sm:$0xff]
    %v1040 = vld [vmem:[#allocation2 + $0xcd8] sm:$0xff]
    %v1041 = vld [vmem:[#allocation2 + $0xce0] sm:$0xff]
    %v1042 = vld [vmem:[#allocation2 + $0xce8] sm:$0xff]
    %v1043 = vld [vmem:[#allocation2 + $0xcf0] sm:$0xff]
    %v1044 = vld [vmem:[#allocation2 + $0xcf8] sm:$0xff]
    %v1045 = vld [vmem:[#allocation2 + $0xd00] sm:$0xff]
    %v1046 = vld [vmem:[#allocation2 + $0xd08] sm:$0xff]
    %v1047 = vld [vmem:[#allocation2 + $0xd10] sm:$0xff]
    %v1048 = vld [vmem:[#allocation2 + $0xd18] sm:$0xff]
    %v1049 = vld [vmem:[#allocation2 + $0xd20] sm:$0xff]
    %v1050 = vld [vmem:[#allocation2 + $0xd28] sm:$0xff]
    %v1051 = vld [vmem:[#allocation2 + $0xd30] sm:$0xff]
    %v1052 = vld [vmem:[#allocation2 + $0xd38] sm:$0xff]
    %v1053 = vld [vmem:[#allocation2 + $0xd40] sm:$0xff]
    %v1054 = vld [vmem:[#allocation2 + $0xd48] sm:$0xff]
    %v1055 = vld [vmem:[#allocation2 + $0xd50] sm:$0xff]
    %v1056 = vld [vmem:[#allocation2 + $0xd58] sm:$0xff]
    %v1057 = vld [vmem:[#allocation2 + $0xd60] sm:$0xff]
    %v1058 = vld [vmem:[#allocation2 + $0xd68] sm:$0xff]
    %v1059 = vld [vmem:[#allocation2 + $0xd70] sm:$0xff]
    %v1060 = vld [vmem:[#allocation2 + $0xd78] sm:$0xff]
    %v1061 = vld [vmem:[#allocation2 + $0xd80] sm:$0xff]
    %v1062 = vld [vmem:[#allocation2 + $0xd88] sm:$0xff]
    %v1063 = vld [vmem:[#allocation2 + $0xd90] sm:$0xff]
    %v1064 = vld [vmem:[#allocation2 + $0xd98] sm:$0xff]
    %v1065 = vld [vmem:[#allocation2 + $0xda0] sm:$0xff]
    %v1066 = vld [vmem:[#allocation2 + $0xda8] sm:$0xff]
    %v1067 = vld [vmem:[#allocation2 + $0xdb0] sm:$0xff]
    %v1068 = vld [vmem:[#allocation2 + $0xdb8] sm:$0xff]
    %v1069 = vld [vmem:[#allocation2 + $0xdc0] sm:$0xff]
    %v1070 = vld [vmem:[#allocation2 + $0xdc8] sm:$0xff]
    %v1071 = vld [vmem:[#allocation2 + $0xdd0] sm:$0xff]
    %v1072 = vld [vmem:[#allocation2 + $0xdd8] sm:$0xff]
    %v1073 = vld [vmem:[#allocation2 + $0xde0] sm:$0xff]
    %v1074 = vld [vmem:[#allocation2 + $0xde8] sm:$0xff]
    %v1075 = vld [vmem:[#allocation2 + $0xdf0] sm:$0xff]
    %v1076 = vld [vmem:[#allocation2 + $0xdf8] sm:$0xff]
    %v1077 = vld [vmem:[#allocation2 + $0xe00] sm:$0xff]
    %v1078 = vld [vmem:[#allocation2 + $0xe08] sm:$0xff]
    %v1079 = vld [vmem:[#allocation2 + $0xe10] sm:$0xff]
    %v1080 = vld [vmem:[#allocation2 + $0xe18] sm:$0xff]
    %v1081 = vld [vmem:[#allocation2 + $0xe20] sm:$0xff]
    %v1082 = vld [vmem:[#allocation2 + $0xe28] sm:$0xff]
    %v1083 = vld [vmem:[#allocation2 + $0xe30] sm:$0xff]
    %v1084 = vld [vmem:[#allocation2 + $0xe38] sm:$0xff]
    %v1085 = vld [vmem:[#allocation2 + $0xe40] sm:$0xff]
    %v1086 = vld [vmem:[#allocation2 + $0xe48] sm:$0xff]
    %v1087 = vld [vmem:[#allocation2 + $0xe50] sm:$0xff]
    %v1088 = vld [vmem:[#allocation2 + $0xe58] sm:$0xff]
    %v1089 = vld [vmem:[#allocation2 + $0xe60] sm:$0xff]
    %v1090 = vld [vmem:[#allocation2 + $0xe68] sm:$0xff]
    %v1091 = vld [vmem:[#allocation2 + $0xe70] sm:$0xff]
    %v1092 = vld [vmem:[#allocation2 + $0xe78] sm:$0xff]
    %v1093 = vld [vmem:[#allocation2 + $0xe80] sm:$0xff]
    %v1094 = vld [vmem:[#allocation2 + $0xe88] sm:$0xff]
    %v1095 = vld [vmem:[#allocation2 + $0xe90] sm:$0xff]
    %v1096 = vld [vmem:[#allocation2 + $0xe98] sm:$0xff]
    %v1097 = vld [vmem:[#allocation2 + $0xea0] sm:$0xff]
    %v1098 = vld [vmem:[#allocation2 + $0xea8] sm:$0xff]
    %v1099 = vld [vmem:[#allocation2 + $0xeb0] sm:$0xff]
    %v1100 = vld [vmem:[#allocation2 + $0xeb8] sm:$0xff]
    %v1101 = vld [vmem:[#allocation2 + $0xec0] sm:$0xff]
    %v1102 = vld [vmem:[#allocation2 + $0xec8] sm:$0xff]
    %v1103 = vld [vmem:[#allocation2 + $0xed0] sm:$0xff]
    %v1104 = vld [vmem:[#allocation2 + $0xed8] sm:$0xff]
    %v1105 = vld [vmem:[#allocation2 + $0xee0] sm:$0xff]
    %v1106 = vld [vmem:[#allocation2 + $0xee8] sm:$0xff]
    %v1107 = vld [vmem:[#allocation2 + $0xef0] sm:$0xff]
    %v1108 = vld [vmem:[#allocation2 + $0xef8] sm:$0xff]
    %v1109 = vld [vmem:[#allocation2 + $0xf00] sm:$0xff]
    %v1110 = vld [vmem:[#allocation2 + $0xf08] sm:$0xff]
    %v1111 = vld [vmem:[#allocation2 + $0xf10] sm:$0xff]
    %v1112 = vld [vmem:[#allocation2 + $0xf18] sm:$0xff]
    %v1113 = vld [vmem:[#allocation2 + $0xf20] sm:$0xff]
    %v1114 = vld [vmem:[#allocation2 + $0xf28] sm:$0xff]
    %v1115 = vld [vmem:[#allocation2 + $0xf30] sm:$0xff]
    %v1116 = vld [vmem:[#allocation2 + $0xf38] sm:$0xff]
    %v1117 = vld [vmem:[#allocation2 + $0xf40] sm:$0xff]
    %v1118 = vld [vmem:[#allocation2 + $0xf48] sm:$0xff]
    %v1119 = vld [vmem:[#allocation2 + $0xf50] sm:$0xff]
    %v1120 = vld [vmem:[#allocation2 + $0xf58] sm:$0xff]
    %v1121 = vld [vmem:[#allocation2 + $0xf60] sm:$0xff]
    %v1122 = vld [vmem:[#allocation2 + $0xf68] sm:$0xff]
    %v1123 = vld [vmem:[#allocation2 + $0xf70] sm:$0xff]
    %v1124 = vld [vmem:[#allocation2 + $0xf78] sm:$0xff]
    %v1125 = vld [vmem:[#allocation2 + $0xf80] sm:$0xff]
    %v1126 = vld [vmem:[#allocation2 + $0xf88] sm:$0xff]
    %v1127 = vld [vmem:[#allocation2 + $0xf90] sm:$0xff]
    %v1128 = vld [vmem:[#allocation2 + $0xf98] sm:$0xff]
    %v1129 = vld [vmem:[#allocation2 + $0xfa0] sm:$0xff]
    %v1130 = vld [vmem:[#allocation2 + $0xfa8] sm:$0xff]
    %v1131 = vld [vmem:[#allocation2 + $0xfb0] sm:$0xff]
    %v1132 = vld [vmem:[#allocation2 + $0xfb8] sm:$0xff]
    %v1133 = vld [vmem:[#allocation2 + $0xfc0] sm:$0xff]
    %v1134 = vld [vmem:[#allocation2 + $0xfc8] sm:$0xff]
    %v1135 = vld [vmem:[#allocation2 + $0xfd0] sm:$0xff]
    %v1136 = vld [vmem:[#allocation2 + $0xfd8] sm:$0xff]
    %v1137 = vld [vmem:[#allocation2 + $0xfe0] sm:$0xff]
    %v1138 = vld [vmem:[#allocation2 + $0xfe8] sm:$0xff]
    %v1139 = vld [vmem:[#allocation2 + $0xff0] sm:$0xff]
    %v1140 = vld [vmem:[#allocation2 + $0xff8] sm:$0xff]
    %v1141 = vld [vmem:[#allocation2 + $0x1000] sm:$0xff]
    %v1142 = vld [vmem:[#allocation2 + $0x1008] sm:$0xff]
    %v1143 = vld [vmem:[#allocation2 + $0x1010] sm:$0xff]
    %v1144 = vld [vmem:[#allocation2 + $0x1018] sm:$0xff]
    %v1145 = vld [vmem:[#allocation2 + $0x1020] sm:$0xff]
    %v1146 = vld [vmem:[#allocation2 + $0x1028] sm:$0xff]
    %v1147 = vld [vmem:[#allocation2 + $0x1030] sm:$0xff]
    %v1148 = vld [vmem:[#allocation2 + $0x1038] sm:$0xff]
    %v1149 = vld [vmem:[#allocation2 + $0x1040] sm:$0xff]
    %v1150 = vld [vmem:[#allocation2 + $0x1048] sm:$0xff]
    %v1151 = vld [vmem:[#allocation2 + $0x1050] sm:$0xff]
    %v1152 = vld [vmem:[#allocation2 + $0x1058] sm:$0xff]
    %v1153 = vld [vmem:[#allocation2 + $0x1060] sm:$0xff]
    %v1154 = vld [vmem:[#allocation2 + $0x1068] sm:$0xff]
    %v1155 = vld [vmem:[#allocation2 + $0x1070] sm:$0xff]
    %v1156 = vld [vmem:[#allocation2 + $0x1078] sm:$0xff]
    %v1157 = vld [vmem:[#allocation2 + $0x1080] sm:$0xff]
    %v1158 = vld [vmem:[#allocation2 + $0x1088] sm:$0xff]
    %v1159 = vld [vmem:[#allocation2 + $0x1090] sm:$0xff]
    %v1160 = vld [vmem:[#allocation2 + $0x1098] sm:$0xff]
    %v1161 = vld [vmem:[#allocation2 + $0x10a0] sm:$0xff]
    %v1162 = vld [vmem:[#allocation2 + $0x10a8] sm:$0xff]
    %v1163 = vld [vmem:[#allocation2 + $0x10b0] sm:$0xff]
    %v1164 = vld [vmem:[#allocation2 + $0x10b8] sm:$0xff]
    %v1165 = vld [vmem:[#allocation2 + $0x10c0] sm:$0xff]
    %v1166 = vld [vmem:[#allocation2 + $0x10c8] sm:$0xff]
    %v1167 = vld [vmem:[#allocation2 + $0x10d0] sm:$0xff]
    %v1168 = vld [vmem:[#allocation2 + $0x10d8] sm:$0xff]
    %v1169 = vld [vmem:[#allocation2 + $0x10e0] sm:$0xff]
    %v1170 = vld [vmem:[#allocation2 + $0x10e8] sm:$0xff]
    %v1171 = vld [vmem:[#allocation2 + $0x10f0] sm:$0xff]
    %v1172 = vld [vmem:[#allocation2 + $0x10f8] sm:$0xff]
    %v1173 = vld [vmem:[#allocation2 + $0x1100] sm:$0xff]
    %v1174 = vld [vmem:[#allocation2 + $0x1108] sm:$0xff]
    %v1175 = vld [vmem:[#allocation2 + $0x1110] sm:$0xff]
    %v1176 = vld [vmem:[#allocation2 + $0x1118] sm:$0xff]
    %v1177 = vld [vmem:[#allocation2 + $0x1120] sm:$0xff]
    %v1178 = vld [vmem:[#allocation2 + $0x1128] sm:$0xff]
    %v1179 = vld [vmem:[#allocation2 + $0x1130] sm:$0xff]
    %v1180 = vld [vmem:[#allocation2 + $0x1138] sm:$0xff]
    %v1181 = vld [vmem:[#allocation2 + $0x1140] sm:$0xff]
    %v1182 = vld [vmem:[#allocation2 + $0x1148] sm:$0xff]
    %v1183 = vld [vmem:[#allocation2 + $0x1150] sm:$0xff]
    %v1184 = vld [vmem:[#allocation2 + $0x1158] sm:$0xff]
    %v1185 = vld [vmem:[#allocation2 + $0x1160] sm:$0xff]
    %v1186 = vld [vmem:[#allocation2 + $0x1168] sm:$0xff]
    %v1187 = vld [vmem:[#allocation2 + $0x1170] sm:$0xff]
    %v1188 = vld [vmem:[#allocation2 + $0x1178] sm:$0xff]
    %v1189 = vld [vmem:[#allocation2 + $0x1180] sm:$0xff]
    %v1190 = vld [vmem:[#allocation2 + $0x1188] sm:$0xff]
    %v1191 = vld [vmem:[#allocation2 + $0x1190] sm:$0xff]
    %v1192 = vld [vmem:[#allocation2 + $0x1198] sm:$0xff]
    %v1193 = vld [vmem:[#allocation2 + $0x11a0] sm:$0xff]
    %v1194 = vld [vmem:[#allocation2 + $0x11a8] sm:$0xff]
    %v1195 = vld [vmem:[#allocation2 + $0x11b0] sm:$0xff]
    %v1196 = vld [vmem:[#allocation2 + $0x11b8] sm:$0xff]
    %v1197 = vld [vmem:[#allocation2 + $0x11c0] sm:$0xff]
    %v1198 = vld [vmem:[#allocation2 + $0x11c8] sm:$0xff]
    %v1199 = vld [vmem:[#allocation2 + $0x11d0] sm:$0xff]
    %v1200 = vld [vmem:[#allocation2 + $0x11d8] sm:$0xff]
    %v1201 = vld [vmem:[#allocation2 + $0x11e0] sm:$0xff]
    %v1202 = vld [vmem:[#allocation2 + $0x11e8] sm:$0xff]
    %v1203 = vld [vmem:[#allocation2 + $0x11f0] sm:$0xff]
    %v1204 = vld [vmem:[#allocation2 + $0x11f8] sm:$0xff]
    %v1205 = vld [vmem:[#allocation2 + $0x1200] sm:$0xff]
    %v1206 = vld [vmem:[#allocation2 + $0x1208] sm:$0xff]
    %v1207 = vld [vmem:[#allocation2 + $0x1210] sm:$0xff]
    %v1208 = vld [vmem:[#allocation2 + $0x1218] sm:$0xff]
    %v1209 = vld [vmem:[#allocation2 + $0x1220] sm:$0xff]
    %v1210 = vld [vmem:[#allocation2 + $0x1228] sm:$0xff]
    %v1211 = vld [vmem:[#allocation2 + $0x1230] sm:$0xff]
    %v1212 = vld [vmem:[#allocation2 + $0x1238] sm:$0xff]
    %v1213 = vld [vmem:[#allocation2 + $0x1240] sm:$0xff]
    %v1214 = vld [vmem:[#allocation2 + $0x1248] sm:$0xff]
    %v1215 = vld [vmem:[#allocation2 + $0x1250] sm:$0xff]
    %v1216 = vld [vmem:[#allocation2 + $0x1258] sm:$0xff]
    %v1217 = vld [vmem:[#allocation2 + $0x1260] sm:$0xff]
    %v1218 = vld [vmem:[#allocation2 + $0x1268] sm:$0xff]
    %v1219 = vld [vmem:[#allocation2 + $0x1270] sm:$0xff]
    %v1220 = vld [vmem:[#allocation2 + $0x1278] sm:$0xff]
    %v1221 = vld [vmem:[#allocation2 + $0x1280] sm:$0xff]
    %v1222 = vld [vmem:[#allocation2 + $0x1288] sm:$0xff]
    %v1223 = vld [vmem:[#allocation2 + $0x1290] sm:$0xff]
    %v1224 = vld [vmem:[#allocation2 + $0x1298] sm:$0xff]
    %v1225 = vld [vmem:[#allocation2 + $0x12a0] sm:$0xff]
    %v1226 = vld [vmem:[#allocation2 + $0x12a8] sm:$0xff]
    %v1227 = vld [vmem:[#allocation2 + $0x12b0] sm:$0xff]
    %v1228 = vld [vmem:[#allocation2 + $0x12b8] sm:$0xff]
    %v1229 = vld [vmem:[#allocation2 + $0x12c0] sm:$0xff]
    %v1230 = vld [vmem:[#allocation2 + $0x12c8] sm:$0xff]
    %v1231 = vld [vmem:[#allocation2 + $0x12d0] sm:$0xff]
    %v1232 = vld [vmem:[#allocation2 + $0x12d8] sm:$0xff]
    %v1233 = vld [vmem:[#allocation2 + $0x12e0] sm:$0xff]
    %v1234 = vld [vmem:[#allocation2 + $0x12e8] sm:$0xff]
    %v1235 = vld [vmem:[#allocation2 + $0x12f0] sm:$0xff]
    %v1236 = vld [vmem:[#allocation2 + $0x12f8] sm:$0xff]
    %v1237 = vld [vmem:[#allocation2 + $0x1300] sm:$0xff]
    %v1238 = vld [vmem:[#allocation2 + $0x1308] sm:$0xff]
    %v1239 = vld [vmem:[#allocation2 + $0x1310] sm:$0xff]
    %v1240 = vld [vmem:[#allocation2 + $0x1318] sm:$0xff]
    %v1241 = vld [vmem:[#allocation2 + $0x1320] sm:$0xff]
    %v1242 = vld [vmem:[#allocation2 + $0x1328] sm:$0xff]
    %v1243 = vld [vmem:[#allocation2 + $0x1330] sm:$0xff]
    %v1244 = vld [vmem:[#allocation2 + $0x1338] sm:$0xff]
    %v1245 = vld [vmem:[#allocation2 + $0x1340] sm:$0xff]
    %v1246 = vld [vmem:[#allocation2 + $0x1348] sm:$0xff]
    %v1247 = vld [vmem:[#allocation2 + $0x1350] sm:$0xff]
    %v1248 = vld [vmem:[#allocation2 + $0x1358] sm:$0xff]
    %v1249 = vld [vmem:[#allocation2 + $0x1360] sm:$0xff]
    %v1250 = vld [vmem:[#allocation2 + $0x1368] sm:$0xff]
    %v1251 = vld [vmem:[#allocation2 + $0x1370] sm:$0xff]
    %v1252 = vld [vmem:[#allocation2 + $0x1378] sm:$0xff]
    %v1253 = vld [vmem:[#allocation2 + $0x1380] sm:$0xff]
    %v1254 = vld [vmem:[#allocation2 + $0x1388] sm:$0xff]
    %v1255 = vld [vmem:[#allocation2 + $0x1390] sm:$0xff]
    %v1256 = vld [vmem:[#allocation2 + $0x1398] sm:$0xff]
    %v1257 = vld [vmem:[#allocation2 + $0x13a0] sm:$0xff]
    %v1258 = vld [vmem:[#allocation2 + $0x13a8] sm:$0xff]
    %v1259 = vld [vmem:[#allocation2 + $0x13b0] sm:$0xff]
    %v1260 = vld [vmem:[#allocation2 + $0x13b8] sm:$0xff]
    %v1261 = vld [vmem:[#allocation2 + $0x13c0] sm:$0xff]
    %v1262 = vld [vmem:[#allocation2 + $0x13c8] sm:$0xff]
    %v1263 = vld [vmem:[#allocation2 + $0x13d0] sm:$0xff]
    %v1264 = vld [vmem:[#allocation2 + $0x13d8] sm:$0xff]
    %v1265 = vld [vmem:[#allocation2 + $0x13e0] sm:$0xff]
    %v1266 = vld [vmem:[#allocation2 + $0x13e8] sm:$0xff]
    %v1267 = vld [vmem:[#allocation2 + $0x13f0] sm:$0xff]
    %v1268 = vld [vmem:[#allocation2 + $0x13f8] sm:$0xff]
    %v1269 = vld [vmem:[#allocation2 + $0x1400] sm:$0xff]
    %v1270 = vld [vmem:[#allocation2 + $0x1408] sm:$0xff]
    %v1271 = vld [vmem:[#allocation2 + $0x1410] sm:$0xff]
    %v1272 = vld [vmem:[#allocation2 + $0x1418] sm:$0xff]
    %v1273 = vld [vmem:[#allocation2 + $0x1420] sm:$0xff]
    %v1274 = vld [vmem:[#allocation2 + $0x1428] sm:$0xff]
    %v1275 = vld [vmem:[#allocation2 + $0x1430] sm:$0xff]
    %v1276 = vld [vmem:[#allocation2 + $0x1438] sm:$0xff]
    %v1277 = vld [vmem:[#allocation2 + $0x1440] sm:$0xff]
    %v1278 = vld [vmem:[#allocation2 + $0x1448] sm:$0xff]
    %v1279 = vld [vmem:[#allocation2 + $0x1450] sm:$0xff]
    %v1280 = vld [vmem:[#allocation2 + $0x1458] sm:$0xff]
    %v1281 = vld [vmem:[#allocation2 + $0x1460] sm:$0xff]
    %v1282 = vld [vmem:[#allocation2 + $0x1468] sm:$0xff]
    %v1283 = vld [vmem:[#allocation2 + $0x1470] sm:$0xff]
    %v1284 = vld [vmem:[#allocation2 + $0x1478] sm:$0xff]
    %v1285 = vld [vmem:[#allocation2 + $0x1480] sm:$0xff]
    %v1286 = vld [vmem:[#allocation2 + $0x1488] sm:$0xff]
    %v1287 = vld [vmem:[#allocation2 + $0x1490] sm:$0xff]
    %v1288 = vld [vmem:[#allocation2 + $0x1498] sm:$0xff]
    %v1289 = vld [vmem:[#allocation2 + $0x14a0] sm:$0xff]
    %v1290 = vld [vmem:[#allocation2 + $0x14a8] sm:$0xff]
    %v1291 = vld [vmem:[#allocation2 + $0x14b0] sm:$0xff]
    %v1292 = vld [vmem:[#allocation2 + $0x14b8] sm:$0xff]
    %v1293 = vld [vmem:[#allocation2 + $0x14c0] sm:$0xff]
    %v1294 = vld [vmem:[#allocation2 + $0x14c8] sm:$0xff]
    %v1295 = vld [vmem:[#allocation2 + $0x14d0] sm:$0xff]
    %v1296 = vld [vmem:[#allocation2 + $0x14d8] sm:$0xff]
    %v1297 = vld [vmem:[#allocation2 + $0x14e0] sm:$0xff]
    %v1298 = vld [vmem:[#allocation2 + $0x14e8] sm:$0xff]
    %v1299 = vld [vmem:[#allocation2 + $0x14f0] sm:$0xff]
    %v1300 = vld [vmem:[#allocation2 + $0x14f8] sm:$0xff]
    %v1301 = vld [vmem:[#allocation2 + $0x1500] sm:$0xff]
    %v1302 = vld [vmem:[#allocation2 + $0x1508] sm:$0xff]
    %v1303 = vld [vmem:[#allocation2 + $0x1510] sm:$0xff]
    %v1304 = vld [vmem:[#allocation2 + $0x1518] sm:$0xff]
    %v1305 = vld [vmem:[#allocation2 + $0x1520] sm:$0xff]
    %v1306 = vld [vmem:[#allocation2 + $0x1528] sm:$0xff]
    %v1307 = vld [vmem:[#allocation2 + $0x1530] sm:$0xff]
    %v1308 = vld [vmem:[#allocation2 + $0x1538] sm:$0xff]
    %v1309 = vld [vmem:[#allocation2 + $0x1540] sm:$0xff]
    %v1310 = vld [vmem:[#allocation2 + $0x1548] sm:$0xff]
    %v1311 = vld [vmem:[#allocation2 + $0x1550] sm:$0xff]
    %v1312 = vld [vmem:[#allocation2 + $0x1558] sm:$0xff]
    %v1313 = vld [vmem:[#allocation2 + $0x1560] sm:$0xff]
    %v1314 = vld [vmem:[#allocation2 + $0x1568] sm:$0xff]
    %v1315 = vld [vmem:[#allocation2 + $0x1570] sm:$0xff]
    %v1316 = vld [vmem:[#allocation2 + $0x1578] sm:$0xff]
    %v1317 = vld [vmem:[#allocation2 + $0x1580] sm:$0xff]
    %v1318 = vld [vmem:[#allocation2 + $0x1588] sm:$0xff]
    %v1319 = vld [vmem:[#allocation2 + $0x1590] sm:$0xff]
    %v1320 = vld [vmem:[#allocation2 + $0x1598] sm:$0xff]
    %v1321 = vld [vmem:[#allocation2 + $0x15a0] sm:$0xff]
    %v1322 = vld [vmem:[#allocation2 + $0x15a8] sm:$0xff]
    %v1323 = vld [vmem:[#allocation2 + $0x15b0] sm:$0xff]
    %v1324 = vld [vmem:[#allocation2 + $0x15b8] sm:$0xff]
    %v1325 = vld [vmem:[#allocation2 + $0x15c0] sm:$0xff]
    %v1326 = vld [vmem:[#allocation2 + $0x15c8] sm:$0xff]
    %v1327 = vld [vmem:[#allocation2 + $0x15d0] sm:$0xff]
    %v1328 = vld [vmem:[#allocation2 + $0x15d8] sm:$0xff]
    %v1329 = vld [vmem:[#allocation2 + $0x15e0] sm:$0xff]
    %v1330 = vld [vmem:[#allocation2 + $0x15e8] sm:$0xff]
    %v1331 = vld [vmem:[#allocation2 + $0x15f0] sm:$0xff]
    %v1332 = vld [vmem:[#allocation2 + $0x15f8] sm:$0xff]
    %v1333 = vld [vmem:[#allocation2 + $0x1600] sm:$0xff]
    %v1334 = vld [vmem:[#allocation2 + $0x1608] sm:$0xff]
    %v1335 = vld [vmem:[#allocation2 + $0x1610] sm:$0xff]
    %v1336 = vld [vmem:[#allocation2 + $0x1618] sm:$0xff]
    %v1337 = vld [vmem:[#allocation2 + $0x1620] sm:$0xff]
    %v1338 = vld [vmem:[#allocation2 + $0x1628] sm:$0xff]
    %v1339 = vld [vmem:[#allocation2 + $0x1630] sm:$0xff]
    %v1340 = vld [vmem:[#allocation2 + $0x1638] sm:$0xff]
    %v1341 = vld [vmem:[#allocation2 + $0x1640] sm:$0xff]
    %v1342 = vld [vmem:[#allocation2 + $0x1648] sm:$0xff]
    %v1343 = vld [vmem:[#allocation2 + $0x1650] sm:$0xff]
    %v1344 = vld [vmem:[#allocation2 + $0x1658] sm:$0xff]
    %v1345 = vld [vmem:[#allocation2 + $0x1660] sm:$0xff]
    %v1346 = vld [vmem:[#allocation2 + $0x1668] sm:$0xff]
    %v1347 = vld [vmem:[#allocation2 + $0x1670] sm:$0xff]
    %v1348 = vld [vmem:[#allocation2 + $0x1678] sm:$0xff]
    %v1349 = vld [vmem:[#allocation2 + $0x1680] sm:$0xff]
    %v1350 = vld [vmem:[#allocation2 + $0x1688] sm:$0xff]
    %v1351 = vld [vmem:[#allocation2 + $0x1690] sm:$0xff]
    %v1352 = vld [vmem:[#allocation2 + $0x1698] sm:$0xff]
    %v1353 = vld [vmem:[#allocation2 + $0x16a0] sm:$0xff]
    %v1354 = vld [vmem:[#allocation2 + $0x16a8] sm:$0xff]
    %v1355 = vld [vmem:[#allocation2 + $0x16b0] sm:$0xff]
    %v1356 = vld [vmem:[#allocation2 + $0x16b8] sm:$0xff]
    %v1357 = vld [vmem:[#allocation2 + $0x16c0] sm:$0xff]
    %v1358 = vld [vmem:[#allocation2 + $0x16c8] sm:$0xff]
    %v1359 = vld [vmem:[#allocation2 + $0x16d0] sm:$0xff]
    %v1360 = vld [vmem:[#allocation2 + $0x16d8] sm:$0xff]
    %v1361 = vld [vmem:[#allocation2 + $0x16e0] sm:$0xff]
    %v1362 = vld [vmem:[#allocation2 + $0x16e8] sm:$0xff]
    %v1363 = vld [vmem:[#allocation2 + $0x16f0] sm:$0xff]
    %v1364 = vld [vmem:[#allocation2 + $0x16f8] sm:$0xff]
    %v1365 = vld [vmem:[#allocation2 + $0x1700] sm:$0xff]
    %v1366 = vld [vmem:[#allocation2 + $0x1708] sm:$0xff]
    %v1367 = vld [vmem:[#allocation2 + $0x1710] sm:$0xff]
    %v1368 = vld [vmem:[#allocation2 + $0x1718] sm:$0xff]
    %v1369 = vld [vmem:[#allocation2 + $0x1720] sm:$0xff]
    %v1370 = vld [vmem:[#allocation2 + $0x1728] sm:$0xff]
    %v1371 = vld [vmem:[#allocation2 + $0x1730] sm:$0xff]
    %v1372 = vld [vmem:[#allocation2 + $0x1738] sm:$0xff]
    %v1373 = vld [vmem:[#allocation2 + $0x1740] sm:$0xff]
    %v1374 = vld [vmem:[#allocation2 + $0x1748] sm:$0xff]
    %v1375 = vld [vmem:[#allocation2 + $0x1750] sm:$0xff]
    %v1376 = vld [vmem:[#allocation2 + $0x1758] sm:$0xff]
    %v1377 = vld [vmem:[#allocation2 + $0x1760] sm:$0xff]
    %v1378 = vld [vmem:[#allocation2 + $0x1768] sm:$0xff]
    %v1379 = vld [vmem:[#allocation2 + $0x1770] sm:$0xff]
    %v1380 = vld [vmem:[#allocation2 + $0x1778] sm:$0xff]
    %v1381 = vld [vmem:[#allocation2 + $0x1780] sm:$0xff]
    %v1382 = vld [vmem:[#allocation2 + $0x1788] sm:$0xff]
    %v1383 = vld [vmem:[#allocation2 + $0x1790] sm:$0xff]
    %v1384 = vld [vmem:[#allocation2 + $0x1798] sm:$0xff]
    %v1385 = vld [vmem:[#allocation2 + $0x17a0] sm:$0xff]
    %v1386 = vld [vmem:[#allocation2 + $0x17a8] sm:$0xff]
    %v1387 = vld [vmem:[#allocation2 + $0x17b0] sm:$0xff]
    %v1388 = vld [vmem:[#allocation2 + $0x17b8] sm:$0xff]
    %v1389 = vld [vmem:[#allocation2 + $0x17c0] sm:$0xff]
    %v1390 = vld [vmem:[#allocation2 + $0x17c8] sm:$0xff]
    %v1391 = vld [vmem:[#allocation2 + $0x17d0] sm:$0xff]
    %v1392 = vld [vmem:[#allocation2 + $0x17d8] sm:$0xff]
    %v1393 = vld [vmem:[#allocation2 + $0x17e0] sm:$0xff]
    %v1394 = vld [vmem:[#allocation2 + $0x17e8] sm:$0xff]
    %v1395 = vld [vmem:[#allocation2 + $0x17f0] sm:$0xff]
    %v1396 = vld [vmem:[#allocation2 + $0x17f8] sm:$0xff]
    %v1397 = vld [vmem:[#allocation2 + $0x1800] sm:$0xff]
    %v1398 = vld [vmem:[#allocation2 + $0x1808] sm:$0xff]
    %v1399 = vld [vmem:[#allocation2 + $0x1810] sm:$0xff]
    %v1400 = vld [vmem:[#allocation2 + $0x1818] sm:$0xff]
    %v1401 = vld [vmem:[#allocation2 + $0x1820] sm:$0xff]
    %v1402 = vld [vmem:[#allocation2 + $0x1828] sm:$0xff]
    %v1403 = vld [vmem:[#allocation2 + $0x1830] sm:$0xff]
    %v1404 = vld [vmem:[#allocation2 + $0x1838] sm:$0xff]
    %v1405 = vld [vmem:[#allocation2 + $0x1840] sm:$0xff]
    %v1406 = vld [vmem:[#allocation2 + $0x1848] sm:$0xff]
    %v1407 = vld [vmem:[#allocation2 + $0x1850] sm:$0xff]
    %v1408 = vld [vmem:[#allocation2 + $0x1858] sm:$0xff]
    %v1409 = vld [vmem:[#allocation2 + $0x1860] sm:$0xff]
    %v1410 = vld [vmem:[#allocation2 + $0x1868] sm:$0xff]
    %v1411 = vld [vmem:[#allocation2 + $0x1870] sm:$0xff]
    %v1412 = vld [vmem:[#allocation2 + $0x1878] sm:$0xff]
    %v1413 = vld [vmem:[#allocation2 + $0x1880] sm:$0xff]
    %v1414 = vld [vmem:[#allocation2 + $0x1888] sm:$0xff]
    %v1415 = vld [vmem:[#allocation2 + $0x1890] sm:$0xff]
    %v1416 = vld [vmem:[#allocation2 + $0x1898] sm:$0xff]
    %v1417 = vld [vmem:[#allocation2 + $0x18a0] sm:$0xff]
    %v1418 = vld [vmem:[#allocation2 + $0x18a8] sm:$0xff]
    %v1419 = vld [vmem:[#allocation2 + $0x18b0] sm:$0xff]
    %v1420 = vld [vmem:[#allocation2 + $0x18b8] sm:$0xff]
    %v1421 = vld [vmem:[#allocation2 + $0x18c0] sm:$0xff]
    %v1422 = vld [vmem:[#allocation2 + $0x18c8] sm:$0xff]
    %v1423 = vld [vmem:[#allocation2 + $0x18d0] sm:$0xff]
    %v1424 = vld [vmem:[#allocation2 + $0x18d8] sm:$0xff]
    %v1425 = vld [vmem:[#allocation2 + $0x18e0] sm:$0xff]
    %v1426 = vld [vmem:[#allocation2 + $0x18e8] sm:$0xff]
    %v1427 = vld [vmem:[#allocation2 + $0x18f0] sm:$0xff]
    %v1428 = vld [vmem:[#allocation2 + $0x18f8] sm:$0xff]
    %v1429 = vld [vmem:[#allocation4] sm:$0x3]
    %v1431 = vperm.slane %v1429, 0
    %v1432 = vperm.slane %v1429, 1
    %v2235 = vunpack.c.l.b16 %v629
    %v2236 = vunpack.c.h.b16 %v629
    %v2237 = vunpack.c.l.b16 %v630
    %v2238 = vunpack.c.h.b16 %v630
    %v2239 = vunpack.c.l.b16 %v631
    %v2240 = vunpack.c.h.b16 %v631
    %v2241 = vunpack.c.l.b16 %v632
    %v2242 = vunpack.c.h.b16 %v632
    %v2243 = vunpack.c.l.b16 %v633
    %v2244 = vunpack.c.h.b16 %v633
    %v2245 = vunpack.c.l.b16 %v634
    %v2246 = vunpack.c.h.b16 %v634
    %v2247 = vunpack.c.l.b16 %v635
    %v2248 = vunpack.c.h.b16 %v635
    %v2249 = vunpack.c.l.b16 %v636
    %v2250 = vunpack.c.h.b16 %v636
    %v2251 = vunpack.c.l.b16 %v637
    %v2252 = vunpack.c.h.b16 %v637
    %v2253 = vunpack.c.l.b16 %v638
    %v2254 = vunpack.c.h.b16 %v638
    %v2255 = vunpack.c.l.b16 %v639
    %v2256 = vunpack.c.h.b16 %v639
    %v2257 = vunpack.c.l.b16 %v640
    %v2258 = vunpack.c.h.b16 %v640
    %v2259 = vunpack.c.l.b16 %v641
    %v2260 = vunpack.c.h.b16 %v641
    %v2261 = vunpack.c.l.b16 %v642
    %v2262 = vunpack.c.h.b16 %v642
    %v2263 = vunpack.c.l.b16 %v643
    %v2264 = vunpack.c.h.b16 %v643
    %v2265 = vunpack.c.l.b16 %v644
    %v2266 = vunpack.c.h.b16 %v644
    %v2267 = vunpack.c.l.b16 %v645
    %v2268 = vunpack.c.h.b16 %v645
    %v2269 = vunpack.c.l.b16 %v646
    %v2270 = vunpack.c.h.b16 %v646
    %v2271 = vunpack.c.l.b16 %v647
    %v2272 = vunpack.c.h.b16 %v647
    %v2273 = vunpack.c.l.b16 %v648
    %v2274 = vunpack.c.h.b16 %v648
    %v2275 = vunpack.c.l.b16 %v649
    %v2276 = vunpack.c.h.b16 %v649
    %v2277 = vunpack.c.l.b16 %v650
    %v2278 = vunpack.c.h.b16 %v650
    %v2279 = vunpack.c.l.b16 %v651
    %v2280 = vunpack.c.h.b16 %v651
    %v2281 = vunpack.c.l.b16 %v652
    %v2282 = vunpack.c.h.b16 %v652
    %v2283 = vunpack.c.l.b16 %v653
    %v2284 = vunpack.c.h.b16 %v653
    %v2285 = vunpack.c.l.b16 %v654
    %v2286 = vunpack.c.h.b16 %v654
    %v2287 = vunpack.c.l.b16 %v655
    %v2288 = vunpack.c.h.b16 %v655
    %v2289 = vunpack.c.l.b16 %v656
    %v2290 = vunpack.c.h.b16 %v656
    %v2291 = vunpack.c.l.b16 %v657
    %v2292 = vunpack.c.h.b16 %v657
    %v2293 = vunpack.c.l.b16 %v658
    %v2294 = vunpack.c.h.b16 %v658
    %v2295 = vunpack.c.l.b16 %v659
    %v2296 = vunpack.c.h.b16 %v659
    %v2297 = vunpack.c.l.b16 %v660
    %v2298 = vunpack.c.h.b16 %v660
    %v2299 = vunpack.c.l.b16 %v661
    %v2300 = vunpack.c.h.b16 %v661
    %v2301 = vunpack.c.l.b16 %v662
    %v2302 = vunpack.c.h.b16 %v662
    %v2303 = vunpack.c.l.b16 %v663
    %v2304 = vunpack.c.h.b16 %v663
    %v2305 = vunpack.c.l.b16 %v664
    %v2306 = vunpack.c.h.b16 %v664
    %v2307 = vunpack.c.l.b16 %v665
    %v2308 = vunpack.c.h.b16 %v665
    %v2309 = vunpack.c.l.b16 %v666
    %v2310 = vunpack.c.h.b16 %v666
    %v2311 = vunpack.c.l.b16 %v667
    %v2312 = vunpack.c.h.b16 %v667
    %v2313 = vunpack.c.l.b16 %v668
    %v2314 = vunpack.c.h.b16 %v668
    %v2315 = vunpack.c.l.b16 %v669
    %v2316 = vunpack.c.h.b16 %v669
    %v2317 = vunpack.c.l.b16 %v670
    %v2318 = vunpack.c.h.b16 %v670
    %v2319 = vunpack.c.l.b16 %v671
    %v2320 = vunpack.c.h.b16 %v671
    %v2321 = vunpack.c.l.b16 %v672
    %v2322 = vunpack.c.h.b16 %v672
    %v2323 = vunpack.c.l.b16 %v673
    %v2324 = vunpack.c.h.b16 %v673
    %v2325 = vunpack.c.l.b16 %v674
    %v2326 = vunpack.c.h.b16 %v674
    %v2327 = vunpack.c.l.b16 %v675
    %v2328 = vunpack.c.h.b16 %v675
    %v2329 = vunpack.c.l.b16 %v676
    %v2330 = vunpack.c.h.b16 %v676
    %v2331 = vunpack.c.l.b16 %v677
    %v2332 = vunpack.c.h.b16 %v677
    %v2333 = vunpack.c.l.b16 %v678
    %v2334 = vunpack.c.h.b16 %v678
    %v2335 = vunpack.c.l.b16 %v679
    %v2336 = vunpack.c.h.b16 %v679
    %v2337 = vunpack.c.l.b16 %v680
    %v2338 = vunpack.c.h.b16 %v680
    %v2339 = vunpack.c.l.b16 %v681
    %v2340 = vunpack.c.h.b16 %v681
    %v2341 = vunpack.c.l.b16 %v682
    %v2342 = vunpack.c.h.b16 %v682
    %v2343 = vunpack.c.l.b16 %v683
    %v2344 = vunpack.c.h.b16 %v683
    %v2345 = vunpack.c.l.b16 %v684
    %v2346 = vunpack.c.h.b16 %v684
    %v2347 = vunpack.c.l.b16 %v685
    %v2348 = vunpack.c.h.b16 %v685
    %v2349 = vunpack.c.l.b16 %v686
    %v2350 = vunpack.c.h.b16 %v686
    %v2351 = vunpack.c.l.b16 %v687
    %v2352 = vunpack.c.h.b16 %v687
    %v2353 = vunpack.c.l.b16 %v688
    %v2354 = vunpack.c.h.b16 %v688
    %v2355 = vunpack.c.l.b16 %v689
    %v2356 = vunpack.c.h.b16 %v689
    %v2357 = vunpack.c.l.b16 %v690
    %v2358 = vunpack.c.h.b16 %v690
    %v2359 = vunpack.c.l.b16 %v691
    %v2360 = vunpack.c.h.b16 %v691
    %v2361 = vunpack.c.l.b16 %v692
    %v2362 = vunpack.c.h.b16 %v692
    %v2363 = vunpack.c.l.b16 %v693
    %v2364 = vunpack.c.h.b16 %v693
    %v2365 = vunpack.c.l.b16 %v694
    %v2366 = vunpack.c.h.b16 %v694
    %v2367 = vunpack.c.l.b16 %v695
    %v2368 = vunpack.c.h.b16 %v695
    %v2369 = vunpack.c.l.b16 %v696
    %v2370 = vunpack.c.h.b16 %v696
    %v2371 = vunpack.c.l.b16 %v697
    %v2372 = vunpack.c.h.b16 %v697
    %v2373 = vunpack.c.l.b16 %v698
    %v2374 = vunpack.c.h.b16 %v698
    %v2375 = vunpack.c.l.b16 %v699
    %v2376 = vunpack.c.h.b16 %v699
    %v2377 = vunpack.c.l.b16 %v700
    %v2378 = vunpack.c.h.b16 %v700
    %v2379 = vunpack.c.l.b16 %v701
    %v2380 = vunpack.c.h.b16 %v701
    %v2381 = vunpack.c.l.b16 %v702
    %v2382 = vunpack.c.h.b16 %v702
    %v2383 = vunpack.c.l.b16 %v703
    %v2384 = vunpack.c.h.b16 %v703
    %v2385 = vunpack.c.l.b16 %v704
    %v2386 = vunpack.c.h.b16 %v704
    %v2387 = vunpack.c.l.b16 %v705
    %v2388 = vunpack.c.h.b16 %v705
    %v2389 = vunpack.c.l.b16 %v706
    %v2390 = vunpack.c.h.b16 %v706
    %v2391 = vunpack.c.l.b16 %v707
    %v2392 = vunpack.c.h.b16 %v707
    %v2393 = vunpack.c.l.b16 %v708
    %v2394 = vunpack.c.h.b16 %v708
    %v2395 = vunpack.c.l.b16 %v709
    %v2396 = vunpack.c.h.b16 %v709
    %v2397 = vunpack.c.l.b16 %v710
    %v2398 = vunpack.c.h.b16 %v710
    %v2399 = vunpack.c.l.b16 %v711
    %v2400 = vunpack.c.h.b16 %v711
    %v2401 = vunpack.c.l.b16 %v712
    %v2402 = vunpack.c.h.b16 %v712
    %v2403 = vunpack.c.l.b16 %v713
    %v2404 = vunpack.c.h.b16 %v713
    %v2405 = vunpack.c.l.b16 %v714
    %v2406 = vunpack.c.h.b16 %v714
    %v2407 = vunpack.c.l.b16 %v715
    %v2408 = vunpack.c.h.b16 %v715
    %v2409 = vunpack.c.l.b16 %v716
    %v2410 = vunpack.c.h.b16 %v716
    %v2411 = vunpack.c.l.b16 %v717
    %v2412 = vunpack.c.h.b16 %v717
    %v2413 = vunpack.c.l.b16 %v718
    %v2414 = vunpack.c.h.b16 %v718
    %v2415 = vunpack.c.l.b16 %v719
    %v2416 = vunpack.c.h.b16 %v719
    %v2417 = vunpack.c.l.b16 %v720
    %v2418 = vunpack.c.h.b16 %v720
    %v2419 = vunpack.c.l.b16 %v721
    %v2420 = vunpack.c.h.b16 %v721
    %v2421 = vunpack.c.l.b16 %v722
    %v2422 = vunpack.c.h.b16 %v722
    %v2423 = vunpack.c.l.b16 %v723
    %v2424 = vunpack.c.h.b16 %v723
    %v2425 = vunpack.c.l.b16 %v724
    %v2426 = vunpack.c.h.b16 %v724
    %v2427 = vunpack.c.l.b16 %v725
    %v2428 = vunpack.c.h.b16 %v725
    %v2429 = vunpack.c.l.b16 %v726
    %v2430 = vunpack.c.h.b16 %v726
    %v2431 = vunpack.c.l.b16 %v727
    %v2432 = vunpack.c.h.b16 %v727
    %v2433 = vunpack.c.l.b16 %v728
    %v2434 = vunpack.c.h.b16 %v728
    %v2435 = vunpack.c.l.b16 %v729
    %v2436 = vunpack.c.h.b16 %v729
    %v2437 = vunpack.c.l.b16 %v730
    %v2438 = vunpack.c.h.b16 %v730
    %v2439 = vunpack.c.l.b16 %v731
    %v2440 = vunpack.c.h.b16 %v731
    %v2441 = vunpack.c.l.b16 %v732
    %v2442 = vunpack.c.h.b16 %v732
    %v2443 = vunpack.c.l.b16 %v733
    %v2444 = vunpack.c.h.b16 %v733
    %v2445 = vunpack.c.l.b16 %v734
    %v2446 = vunpack.c.h.b16 %v734
    %v2447 = vunpack.c.l.b16 %v735
    %v2448 = vunpack.c.h.b16 %v735
    %v2449 = vunpack.c.l.b16 %v736
    %v2450 = vunpack.c.h.b16 %v736
    %v2451 = vunpack.c.l.b16 %v737
    %v2452 = vunpack.c.h.b16 %v737
    %v2453 = vunpack.c.l.b16 %v738
    %v2454 = vunpack.c.h.b16 %v738
    %v2455 = vunpack.c.l.b16 %v739
    %v2456 = vunpack.c.h.b16 %v739
    %v2457 = vunpack.c.l.b16 %v740
    %v2458 = vunpack.c.h.b16 %v740
    %v2459 = vunpack.c.l.b16 %v741
    %v2460 = vunpack.c.h.b16 %v741
    %v2461 = vunpack.c.l.b16 %v742
    %v2462 = vunpack.c.h.b16 %v742
    %v2463 = vunpack.c.l.b16 %v743
    %v2464 = vunpack.c.h.b16 %v743
    %v2465 = vunpack.c.l.b16 %v744
    %v2466 = vunpack.c.h.b16 %v744
    %v2467 = vunpack.c.l.b16 %v745
    %v2468 = vunpack.c.h.b16 %v745
    %v2469 = vunpack.c.l.b16 %v746
    %v2470 = vunpack.c.h.b16 %v746
    %v2471 = vunpack.c.l.b16 %v747
    %v2472 = vunpack.c.h.b16 %v747
    %v2473 = vunpack.c.l.b16 %v748
    %v2474 = vunpack.c.h.b16 %v748
    %v2475 = vunpack.c.l.b16 %v749
    %v2476 = vunpack.c.h.b16 %v749
    %v2477 = vunpack.c.l.b16 %v750
    %v2478 = vunpack.c.h.b16 %v750
    %v2479 = vunpack.c.l.b16 %v751
    %v2480 = vunpack.c.h.b16 %v751
    %v2481 = vunpack.c.l.b16 %v752
    %v2482 = vunpack.c.h.b16 %v752
    %v2483 = vunpack.c.l.b16 %v753
    %v2484 = vunpack.c.h.b16 %v753
    %v2485 = vunpack.c.l.b16 %v754
    %v2486 = vunpack.c.h.b16 %v754
    %v2487 = vunpack.c.l.b16 %v755
    %v2488 = vunpack.c.h.b16 %v755
    %v2489 = vunpack.c.l.b16 %v756
    %v2490 = vunpack.c.h.b16 %v756
    %v2491 = vunpack.c.l.b16 %v757
    %v2492 = vunpack.c.h.b16 %v757
    %v2493 = vunpack.c.l.b16 %v758
    %v2494 = vunpack.c.h.b16 %v758
    %v2495 = vunpack.c.l.b16 %v759
    %v2496 = vunpack.c.h.b16 %v759
    %v2497 = vunpack.c.l.b16 %v760
    %v2498 = vunpack.c.h.b16 %v760
    %v2499 = vunpack.c.l.b16 %v761
    %v2500 = vunpack.c.h.b16 %v761
    %v2501 = vunpack.c.l.b16 %v762
    %v2502 = vunpack.c.h.b16 %v762
    %v2503 = vunpack.c.l.b16 %v763
    %v2504 = vunpack.c.h.b16 %v763
    %v2505 = vunpack.c.l.b16 %v764
    %v2506 = vunpack.c.h.b16 %v764
    %v2507 = vunpack.c.l.b16 %v765
    %v2508 = vunpack.c.h.b16 %v765
    %v2509 = vunpack.c.l.b16 %v766
    %v2510 = vunpack.c.h.b16 %v766
    %v2511 = vunpack.c.l.b16 %v767
    %v2512 = vunpack.c.h.b16 %v767
    %v2513 = vunpack.c.l.b16 %v768
    %v2514 = vunpack.c.h.b16 %v768
    %v2515 = vunpack.c.l.b16 %v769
    %v2516 = vunpack.c.h.b16 %v769
    %v2517 = vunpack.c.l.b16 %v770
    %v2518 = vunpack.c.h.b16 %v770
    %v2519 = vunpack.c.l.b16 %v771
    %v2520 = vunpack.c.h.b16 %v771
    %v2521 = vunpack.c.l.b16 %v772
    %v2522 = vunpack.c.h.b16 %v772
    %v2523 = vunpack.c.l.b16 %v773
    %v2524 = vunpack.c.h.b16 %v773
    %v2525 = vunpack.c.l.b16 %v774
    %v2526 = vunpack.c.h.b16 %v774
    %v2527 = vunpack.c.l.b16 %v775
    %v2528 = vunpack.c.h.b16 %v775
    %v2529 = vunpack.c.l.b16 %v776
    %v2530 = vunpack.c.h.b16 %v776
    %v2531 = vunpack.c.l.b16 %v777
    %v2532 = vunpack.c.h.b16 %v777
    %v2533 = vunpack.c.l.b16 %v778
    %v2534 = vunpack.c.h.b16 %v778
    %v2535 = vunpack.c.l.b16 %v779
    %v2536 = vunpack.c.h.b16 %v779
    %v2537 = vunpack.c.l.b16 %v780
    %v2538 = vunpack.c.h.b16 %v780
    %v2539 = vunpack.c.l.b16 %v781
    %v2540 = vunpack.c.h.b16 %v781
    %v2541 = vunpack.c.l.b16 %v782
    %v2542 = vunpack.c.h.b16 %v782
    %v2543 = vunpack.c.l.b16 %v783
    %v2544 = vunpack.c.h.b16 %v783
    %v2545 = vunpack.c.l.b16 %v784
    %v2546 = vunpack.c.h.b16 %v784
    %v2547 = vunpack.c.l.b16 %v785
    %v2548 = vunpack.c.h.b16 %v785
    %v2549 = vunpack.c.l.b16 %v786
    %v2550 = vunpack.c.h.b16 %v786
    %v2551 = vunpack.c.l.b16 %v787
    %v2552 = vunpack.c.h.b16 %v787
    %v2553 = vunpack.c.l.b16 %v788
    %v2554 = vunpack.c.h.b16 %v788
    %v2555 = vunpack.c.l.b16 %v789
    %v2556 = vunpack.c.h.b16 %v789
    %v2557 = vunpack.c.l.b16 %v790
    %v2558 = vunpack.c.h.b16 %v790
    %v2559 = vunpack.c.l.b16 %v791
    %v2560 = vunpack.c.h.b16 %v791
    %v2561 = vunpack.c.l.b16 %v792
    %v2562 = vunpack.c.h.b16 %v792
    %v2563 = vunpack.c.l.b16 %v793
    %v2564 = vunpack.c.h.b16 %v793
    %v2565 = vunpack.c.l.b16 %v794
    %v2566 = vunpack.c.h.b16 %v794
    %v2567 = vunpack.c.l.b16 %v795
    %v2568 = vunpack.c.h.b16 %v795
    %v2569 = vunpack.c.l.b16 %v796
    %v2570 = vunpack.c.h.b16 %v796
    %v2571 = vunpack.c.l.b16 %v797
    %v2572 = vunpack.c.h.b16 %v797
    %v2573 = vunpack.c.l.b16 %v798
    %v2574 = vunpack.c.h.b16 %v798
    %v2575 = vunpack.c.l.b16 %v799
    %v2576 = vunpack.c.h.b16 %v799
    %v2577 = vunpack.c.l.b16 %v800
    %v2578 = vunpack.c.h.b16 %v800
    %v2579 = vunpack.c.l.b16 %v801
    %v2580 = vunpack.c.h.b16 %v801
    %v2581 = vunpack.c.l.b16 %v802
    %v2582 = vunpack.c.h.b16 %v802
    %v2583 = vunpack.c.l.b16 %v803
    %v2584 = vunpack.c.h.b16 %v803
    %v2585 = vunpack.c.l.b16 %v804
    %v2586 = vunpack.c.h.b16 %v804
    %v2587 = vunpack.c.l.b16 %v805
    %v2588 = vunpack.c.h.b16 %v805
    %v2589 = vunpack.c.l.b16 %v806
    %v2590 = vunpack.c.h.b16 %v806
    %v2591 = vunpack.c.l.b16 %v807
    %v2592 = vunpack.c.h.b16 %v807
    %v2593 = vunpack.c.l.b16 %v808
    %v2594 = vunpack.c.h.b16 %v808
    %v2595 = vunpack.c.l.b16 %v809
    %v2596 = vunpack.c.h.b16 %v809
    %v2597 = vunpack.c.l.b16 %v810
    %v2598 = vunpack.c.h.b16 %v810
    %v2599 = vunpack.c.l.b16 %v811
    %v2600 = vunpack.c.h.b16 %v811
    %v2601 = vunpack.c.l.b16 %v812
    %v2602 = vunpack.c.h.b16 %v812
    %v2603 = vunpack.c.l.b16 %v813
    %v2604 = vunpack.c.h.b16 %v813
    %v2605 = vunpack.c.l.b16 %v814
    %v2606 = vunpack.c.h.b16 %v814
    %v2607 = vunpack.c.l.b16 %v815
    %v2608 = vunpack.c.h.b16 %v815
    %v2609 = vunpack.c.l.b16 %v816
    %v2610 = vunpack.c.h.b16 %v816
    %v2611 = vunpack.c.l.b16 %v817
    %v2612 = vunpack.c.h.b16 %v817
    %v2613 = vunpack.c.l.b16 %v818
    %v2614 = vunpack.c.h.b16 %v818
    %v2615 = vunpack.c.l.b16 %v819
    %v2616 = vunpack.c.h.b16 %v819
    %v2617 = vunpack.c.l.b16 %v820
    %v2618 = vunpack.c.h.b16 %v820
    %v2619 = vunpack.c.l.b16 %v821
    %v2620 = vunpack.c.h.b16 %v821
    %v2621 = vunpack.c.l.b16 %v822
    %v2622 = vunpack.c.h.b16 %v822
    %v2623 = vunpack.c.l.b16 %v823
    %v2624 = vunpack.c.h.b16 %v823
    %v2625 = vunpack.c.l.b16 %v824
    %v2626 = vunpack.c.h.b16 %v824
    %v2627 = vunpack.c.l.b16 %v825
    %v2628 = vunpack.c.h.b16 %v825
    %v2629 = vunpack.c.l.b16 %v826
    %v2630 = vunpack.c.h.b16 %v826
    %v2631 = vunpack.c.l.b16 %v827
    %v2632 = vunpack.c.h.b16 %v827
    %v2633 = vunpack.c.l.b16 %v828
    %v2634 = vunpack.c.h.b16 %v828
    %v2635 = vunpack.c.l.b16 %v829
    %v2636 = vunpack.c.h.b16 %v829
    %v2637 = vunpack.c.l.b16 %v830
    %v2638 = vunpack.c.h.b16 %v830
    %v2639 = vunpack.c.l.b16 %v831
    %v2640 = vunpack.c.h.b16 %v831
    %v2641 = vunpack.c.l.b16 %v832
    %v2642 = vunpack.c.h.b16 %v832
    %v2643 = vunpack.c.l.b16 %v833
    %v2644 = vunpack.c.h.b16 %v833
    %v2645 = vunpack.c.l.b16 %v834
    %v2646 = vunpack.c.h.b16 %v834
    %v2647 = vunpack.c.l.b16 %v835
    %v2648 = vunpack.c.h.b16 %v835
    %v2649 = vunpack.c.l.b16 %v836
    %v2650 = vunpack.c.h.b16 %v836
    %v2651 = vunpack.c.l.b16 %v837
    %v2652 = vunpack.c.h.b16 %v837
    %v2653 = vunpack.c.l.b16 %v838
    %v2654 = vunpack.c.h.b16 %v838
    %v2655 = vunpack.c.l.b16 %v839
    %v2656 = vunpack.c.h.b16 %v839
    %v2657 = vunpack.c.l.b16 %v840
    %v2658 = vunpack.c.h.b16 %v840
    %v2659 = vunpack.c.l.b16 %v841
    %v2660 = vunpack.c.h.b16 %v841
    %v2661 = vunpack.c.l.b16 %v842
    %v2662 = vunpack.c.h.b16 %v842
    %v2663 = vunpack.c.l.b16 %v843
    %v2664 = vunpack.c.h.b16 %v843
    %v2665 = vunpack.c.l.b16 %v844
    %v2666 = vunpack.c.h.b16 %v844
    %v2667 = vunpack.c.l.b16 %v845
    %v2668 = vunpack.c.h.b16 %v845
    %v2669 = vunpack.c.l.b16 %v846
    %v2670 = vunpack.c.h.b16 %v846
    %v2671 = vunpack.c.l.b16 %v847
    %v2672 = vunpack.c.h.b16 %v847
    %v2673 = vunpack.c.l.b16 %v848
    %v2674 = vunpack.c.h.b16 %v848
    %v2675 = vunpack.c.l.b16 %v849
    %v2676 = vunpack.c.h.b16 %v849
    %v2677 = vunpack.c.l.b16 %v850
    %v2678 = vunpack.c.h.b16 %v850
    %v2679 = vunpack.c.l.b16 %v851
    %v2680 = vunpack.c.h.b16 %v851
    %v2681 = vunpack.c.l.b16 %v852
    %v2682 = vunpack.c.h.b16 %v852
    %v2683 = vunpack.c.l.b16 %v853
    %v2684 = vunpack.c.h.b16 %v853
    %v2685 = vunpack.c.l.b16 %v854
    %v2686 = vunpack.c.h.b16 %v854
    %v2687 = vunpack.c.l.b16 %v855
    %v2688 = vunpack.c.h.b16 %v855
    %v2689 = vunpack.c.l.b16 %v856
    %v2690 = vunpack.c.h.b16 %v856
    %v2691 = vunpack.c.l.b16 %v857
    %v2692 = vunpack.c.h.b16 %v857
    %v2693 = vunpack.c.l.b16 %v858
    %v2694 = vunpack.c.h.b16 %v858
    %v2695 = vunpack.c.l.b16 %v859
    %v2696 = vunpack.c.h.b16 %v859
    %v2697 = vunpack.c.l.b16 %v860
    %v2698 = vunpack.c.h.b16 %v860
    %v2699 = vunpack.c.l.b16 %v861
    %v2700 = vunpack.c.h.b16 %v861
    %v2701 = vunpack.c.l.b16 %v862
    %v2702 = vunpack.c.h.b16 %v862
    %v2703 = vunpack.c.l.b16 %v863
    %v2704 = vunpack.c.h.b16 %v863
    %v2705 = vunpack.c.l.b16 %v864
    %v2706 = vunpack.c.h.b16 %v864
    %v2707 = vunpack.c.l.b16 %v865
    %v2708 = vunpack.c.h.b16 %v865
    %v2709 = vunpack.c.l.b16 %v866
    %v2710 = vunpack.c.h.b16 %v866
    %v2711 = vunpack.c.l.b16 %v867
    %v2712 = vunpack.c.h.b16 %v867
    %v2713 = vunpack.c.l.b16 %v868
    %v2714 = vunpack.c.h.b16 %v868
    %v2715 = vunpack.c.l.b16 %v869
    %v2716 = vunpack.c.h.b16 %v869
    %v2717 = vunpack.c.l.b16 %v870
    %v2718 = vunpack.c.h.b16 %v870
    %v2719 = vunpack.c.l.b16 %v871
    %v2720 = vunpack.c.h.b16 %v871
    %v2721 = vunpack.c.l.b16 %v872
    %v2722 = vunpack.c.h.b16 %v872
    %v2723 = vunpack.c.l.b16 %v873
    %v2724 = vunpack.c.h.b16 %v873
    %v2725 = vunpack.c.l.b16 %v874
    %v2726 = vunpack.c.h.b16 %v874
    %v2727 = vunpack.c.l.b16 %v875
    %v2728 = vunpack.c.h.b16 %v875
    %v2729 = vunpack.c.l.b16 %v876
    %v2730 = vunpack.c.h.b16 %v876
    %v2731 = vunpack.c.l.b16 %v877
    %v2732 = vunpack.c.h.b16 %v877
    %v2733 = vunpack.c.l.b16 %v878
    %v2734 = vunpack.c.h.b16 %v878
    %v2735 = vunpack.c.l.b16 %v879
    %v2736 = vunpack.c.h.b16 %v879
    %v2737 = vunpack.c.l.b16 %v880
    %v2738 = vunpack.c.h.b16 %v880
    %v2739 = vunpack.c.l.b16 %v881
    %v2740 = vunpack.c.h.b16 %v881
    %v2741 = vunpack.c.l.b16 %v882
    %v2742 = vunpack.c.h.b16 %v882
    %v2743 = vunpack.c.l.b16 %v883
    %v2744 = vunpack.c.h.b16 %v883
    %v2745 = vunpack.c.l.b16 %v884
    %v2746 = vunpack.c.h.b16 %v884
    %v2747 = vunpack.c.l.b16 %v885
    %v2748 = vunpack.c.h.b16 %v885
    %v2749 = vunpack.c.l.b16 %v886
    %v2750 = vunpack.c.h.b16 %v886
    %v2751 = vunpack.c.l.b16 %v887
    %v2752 = vunpack.c.h.b16 %v887
    %v2753 = vunpack.c.l.b16 %v888
    %v2754 = vunpack.c.h.b16 %v888
    %v2755 = vunpack.c.l.b16 %v889
    %v2756 = vunpack.c.h.b16 %v889
    %v2757 = vunpack.c.l.b16 %v890
    %v2758 = vunpack.c.h.b16 %v890
    %v2759 = vunpack.c.l.b16 %v891
    %v2760 = vunpack.c.h.b16 %v891
    %v2761 = vunpack.c.l.b16 %v892
    %v2762 = vunpack.c.h.b16 %v892
    %v2763 = vunpack.c.l.b16 %v893
    %v2764 = vunpack.c.h.b16 %v893
    %v2765 = vunpack.c.l.b16 %v894
    %v2766 = vunpack.c.h.b16 %v894
    %v2767 = vunpack.c.l.b16 %v895
    %v2768 = vunpack.c.h.b16 %v895
    %v2769 = vunpack.c.l.b16 %v896
    %v2770 = vunpack.c.h.b16 %v896
    %v2771 = vunpack.c.l.b16 %v897
    %v2772 = vunpack.c.h.b16 %v897
    %v2773 = vunpack.c.l.b16 %v898
    %v2774 = vunpack.c.h.b16 %v898
    %v2775 = vunpack.c.l.b16 %v899
    %v2776 = vunpack.c.h.b16 %v899
    %v2777 = vunpack.c.l.b16 %v900
    %v2778 = vunpack.c.h.b16 %v900
    %v2779 = vunpack.c.l.b16 %v901
    %v2780 = vunpack.c.h.b16 %v901
    %v2781 = vunpack.c.l.b16 %v902
    %v2782 = vunpack.c.h.b16 %v902
    %v2783 = vunpack.c.l.b16 %v903
    %v2784 = vunpack.c.h.b16 %v903
    %v2785 = vunpack.c.l.b16 %v904
    %v2786 = vunpack.c.h.b16 %v904
    %v2787 = vunpack.c.l.b16 %v905
    %v2788 = vunpack.c.h.b16 %v905
    %v2789 = vunpack.c.l.b16 %v906
    %v2790 = vunpack.c.h.b16 %v906
    %v2791 = vunpack.c.l.b16 %v907
    %v2792 = vunpack.c.h.b16 %v907
    %v2793 = vunpack.c.l.b16 %v908
    %v2794 = vunpack.c.h.b16 %v908
    %v2795 = vunpack.c.l.b16 %v909
    %v2796 = vunpack.c.h.b16 %v909
    %v2797 = vunpack.c.l.b16 %v910
    %v2798 = vunpack.c.h.b16 %v910
    %v2799 = vunpack.c.l.b16 %v911
    %v2800 = vunpack.c.h.b16 %v911
    %v2801 = vunpack.c.l.b16 %v912
    %v2802 = vunpack.c.h.b16 %v912
    %v2803 = vunpack.c.l.b16 %v913
    %v2804 = vunpack.c.h.b16 %v913
    %v2805 = vunpack.c.l.b16 %v914
    %v2806 = vunpack.c.h.b16 %v914
    %v2807 = vunpack.c.l.b16 %v915
    %v2808 = vunpack.c.h.b16 %v915
    %v2809 = vunpack.c.l.b16 %v916
    %v2810 = vunpack.c.h.b16 %v916
    %v2811 = vunpack.c.l.b16 %v917
    %v2812 = vunpack.c.h.b16 %v917
    %v2813 = vunpack.c.l.b16 %v918
    %v2814 = vunpack.c.h.b16 %v918
    %v2815 = vunpack.c.l.b16 %v919
    %v2816 = vunpack.c.h.b16 %v919
    %v2817 = vunpack.c.l.b16 %v920
    %v2818 = vunpack.c.h.b16 %v920
    %v2819 = vunpack.c.l.b16 %v921
    %v2820 = vunpack.c.h.b16 %v921
    %v2821 = vunpack.c.l.b16 %v922
    %v2822 = vunpack.c.h.b16 %v922
    %v2823 = vunpack.c.l.b16 %v923
    %v2824 = vunpack.c.h.b16 %v923
    %v2825 = vunpack.c.l.b16 %v924
    %v2826 = vunpack.c.h.b16 %v924
    %v2827 = vunpack.c.l.b16 %v925
    %v2828 = vunpack.c.h.b16 %v925
    %v2829 = vunpack.c.l.b16 %v926
    %v2830 = vunpack.c.h.b16 %v926
    %v2831 = vunpack.c.l.b16 %v927
    %v2832 = vunpack.c.h.b16 %v927
    %v2833 = vunpack.c.l.b16 %v928
    %v2834 = vunpack.c.h.b16 %v928
    %v2835 = vunpack.c.l.b16 %v929
    %v2836 = vunpack.c.h.b16 %v929
    %v2837 = vunpack.c.l.b16 %v930
    %v2838 = vunpack.c.h.b16 %v930
    %v2839 = vunpack.c.l.b16 %v931
    %v2840 = vunpack.c.h.b16 %v931
    %v2841 = vunpack.c.l.b16 %v932
    %v2842 = vunpack.c.h.b16 %v932
    %v2843 = vunpack.c.l.b16 %v933
    %v2844 = vunpack.c.h.b16 %v933
    %v2845 = vunpack.c.l.b16 %v934
    %v2846 = vunpack.c.h.b16 %v934
    %v2847 = vunpack.c.l.b16 %v935
    %v2848 = vunpack.c.h.b16 %v935
    %v2849 = vunpack.c.l.b16 %v936
    %v2850 = vunpack.c.h.b16 %v936
    %v2851 = vunpack.c.l.b16 %v937
    %v2852 = vunpack.c.h.b16 %v937
    %v2853 = vunpack.c.l.b16 %v938
    %v2854 = vunpack.c.h.b16 %v938
    %v2855 = vunpack.c.l.b16 %v939
    %v2856 = vunpack.c.h.b16 %v939
    %v2857 = vunpack.c.l.b16 %v940
    %v2858 = vunpack.c.h.b16 %v940
    %v2859 = vunpack.c.l.b16 %v941
    %v2860 = vunpack.c.h.b16 %v941
    %v2861 = vunpack.c.l.b16 %v942
    %v2862 = vunpack.c.h.b16 %v942
    %v2863 = vunpack.c.l.b16 %v943
    %v2864 = vunpack.c.h.b16 %v943
    %v2865 = vunpack.c.l.b16 %v944
    %v2866 = vunpack.c.h.b16 %v944
    %v2867 = vunpack.c.l.b16 %v945
    %v2868 = vunpack.c.h.b16 %v945
    %v2869 = vunpack.c.l.b16 %v946
    %v2870 = vunpack.c.h.b16 %v946
    %v2871 = vunpack.c.l.b16 %v947
    %v2872 = vunpack.c.h.b16 %v947
    %v2873 = vunpack.c.l.b16 %v948
    %v2874 = vunpack.c.h.b16 %v948
    %v2875 = vunpack.c.l.b16 %v949
    %v2876 = vunpack.c.h.b16 %v949
    %v2877 = vunpack.c.l.b16 %v950
    %v2878 = vunpack.c.h.b16 %v950
    %v2879 = vunpack.c.l.b16 %v951
    %v2880 = vunpack.c.h.b16 %v951
    %v2881 = vunpack.c.l.b16 %v952
    %v2882 = vunpack.c.h.b16 %v952
    %v2883 = vunpack.c.l.b16 %v953
    %v2884 = vunpack.c.h.b16 %v953
    %v2885 = vunpack.c.l.b16 %v954
    %v2886 = vunpack.c.h.b16 %v954
    %v2887 = vunpack.c.l.b16 %v955
    %v2888 = vunpack.c.h.b16 %v955
    %v2889 = vunpack.c.l.b16 %v956
    %v2890 = vunpack.c.h.b16 %v956
    %v2891 = vunpack.c.l.b16 %v957
    %v2892 = vunpack.c.h.b16 %v957
    %v2893 = vunpack.c.l.b16 %v958
    %v2894 = vunpack.c.h.b16 %v958
    %v2895 = vunpack.c.l.b16 %v959
    %v2896 = vunpack.c.h.b16 %v959
    %v2897 = vunpack.c.l.b16 %v960
    %v2898 = vunpack.c.h.b16 %v960
    %v2899 = vunpack.c.l.b16 %v961
    %v2900 = vunpack.c.h.b16 %v961
    %v2901 = vunpack.c.l.b16 %v962
    %v2902 = vunpack.c.h.b16 %v962
    %v2903 = vunpack.c.l.b16 %v963
    %v2904 = vunpack.c.h.b16 %v963
    %v2905 = vunpack.c.l.b16 %v964
    %v2906 = vunpack.c.h.b16 %v964
    %v2907 = vunpack.c.l.b16 %v965
    %v2908 = vunpack.c.h.b16 %v965
    %v2909 = vunpack.c.l.b16 %v966
    %v2910 = vunpack.c.h.b16 %v966
    %v2911 = vunpack.c.l.b16 %v967
    %v2912 = vunpack.c.h.b16 %v967
    %v2913 = vunpack.c.l.b16 %v968
    %v2914 = vunpack.c.h.b16 %v968
    %v2915 = vunpack.c.l.b16 %v969
    %v2916 = vunpack.c.h.b16 %v969
    %v2917 = vunpack.c.l.b16 %v970
    %v2918 = vunpack.c.h.b16 %v970
    %v2919 = vunpack.c.l.b16 %v971
    %v2920 = vunpack.c.h.b16 %v971
    %v2921 = vunpack.c.l.b16 %v972
    %v2922 = vunpack.c.h.b16 %v972
    %v2923 = vunpack.c.l.b16 %v973
    %v2924 = vunpack.c.h.b16 %v973
    %v2925 = vunpack.c.l.b16 %v974
    %v2926 = vunpack.c.h.b16 %v974
    %v2927 = vunpack.c.l.b16 %v975
    %v2928 = vunpack.c.h.b16 %v975
    %v2929 = vunpack.c.l.b16 %v976
    %v2930 = vunpack.c.h.b16 %v976
    %v2931 = vunpack.c.l.b16 %v977
    %v2932 = vunpack.c.h.b16 %v977
    %v2933 = vunpack.c.l.b16 %v978
    %v2934 = vunpack.c.h.b16 %v978
    %v2935 = vunpack.c.l.b16 %v979
    %v2936 = vunpack.c.h.b16 %v979
    %v2937 = vunpack.c.l.b16 %v980
    %v2938 = vunpack.c.h.b16 %v980
    %v2939 = vunpack.c.l.b16 %v981
    %v2940 = vunpack.c.h.b16 %v981
    %v2941 = vunpack.c.l.b16 %v982
    %v2942 = vunpack.c.h.b16 %v982
    %v2943 = vunpack.c.l.b16 %v983
    %v2944 = vunpack.c.h.b16 %v983
    %v2945 = vunpack.c.l.b16 %v984
    %v2946 = vunpack.c.h.b16 %v984
    %v2947 = vunpack.c.l.b16 %v985
    %v2948 = vunpack.c.h.b16 %v985
    %v2949 = vunpack.c.l.b16 %v986
    %v2950 = vunpack.c.h.b16 %v986
    %v2951 = vunpack.c.l.b16 %v987
    %v2952 = vunpack.c.h.b16 %v987
    %v2953 = vunpack.c.l.b16 %v988
    %v2954 = vunpack.c.h.b16 %v988
    %v2955 = vunpack.c.l.b16 %v989
    %v2956 = vunpack.c.h.b16 %v989
    %v2957 = vunpack.c.l.b16 %v990
    %v2958 = vunpack.c.h.b16 %v990
    %v2959 = vunpack.c.l.b16 %v991
    %v2960 = vunpack.c.h.b16 %v991
    %v2961 = vunpack.c.l.b16 %v992
    %v2962 = vunpack.c.h.b16 %v992
    %v2963 = vunpack.c.l.b16 %v993
    %v2964 = vunpack.c.h.b16 %v993
    %v2965 = vunpack.c.l.b16 %v994
    %v2966 = vunpack.c.h.b16 %v994
    %v2967 = vunpack.c.l.b16 %v995
    %v2968 = vunpack.c.h.b16 %v995
    %v2969 = vunpack.c.l.b16 %v996
    %v2970 = vunpack.c.h.b16 %v996
    %v2971 = vunpack.c.l.b16 %v997
    %v2972 = vunpack.c.h.b16 %v997
    %v2973 = vunpack.c.l.b16 %v998
    %v2974 = vunpack.c.h.b16 %v998
    %v2975 = vunpack.c.l.b16 %v999
    %v2976 = vunpack.c.h.b16 %v999
    %v2977 = vunpack.c.l.b16 %v1000
    %v2978 = vunpack.c.h.b16 %v1000
    %v2979 = vunpack.c.l.b16 %v1001
    %v2980 = vunpack.c.h.b16 %v1001
    %v2981 = vunpack.c.l.b16 %v1002
    %v2982 = vunpack.c.h.b16 %v1002
    %v2983 = vunpack.c.l.b16 %v1003
    %v2984 = vunpack.c.h.b16 %v1003
    %v2985 = vunpack.c.l.b16 %v1004
    %v2986 = vunpack.c.h.b16 %v1004
    %v2987 = vunpack.c.l.b16 %v1005
    %v2988 = vunpack.c.h.b16 %v1005
    %v2989 = vunpack.c.l.b16 %v1006
    %v2990 = vunpack.c.h.b16 %v1006
    %v2991 = vunpack.c.l.b16 %v1007
    %v2992 = vunpack.c.h.b16 %v1007
    %v2993 = vunpack.c.l.b16 %v1008
    %v2994 = vunpack.c.h.b16 %v1008
    %v2995 = vunpack.c.l.b16 %v1009
    %v2996 = vunpack.c.h.b16 %v1009
    %v2997 = vunpack.c.l.b16 %v1010
    %v2998 = vunpack.c.h.b16 %v1010
    %v2999 = vunpack.c.l.b16 %v1011
    %v3000 = vunpack.c.h.b16 %v1011
    %v3001 = vunpack.c.l.b16 %v1012
    %v3002 = vunpack.c.h.b16 %v1012
    %v3003 = vunpack.c.l.b16 %v1013
    %v3004 = vunpack.c.h.b16 %v1013
    %v3005 = vunpack.c.l.b16 %v1014
    %v3006 = vunpack.c.h.b16 %v1014
    %v3007 = vunpack.c.l.b16 %v1015
    %v3008 = vunpack.c.h.b16 %v1015
    %v3009 = vunpack.c.l.b16 %v1016
    %v3010 = vunpack.c.h.b16 %v1016
    %v3011 = vunpack.c.l.b16 %v1017
    %v3012 = vunpack.c.h.b16 %v1017
    %v3013 = vunpack.c.l.b16 %v1018
    %v3014 = vunpack.c.h.b16 %v1018
    %v3015 = vunpack.c.l.b16 %v1019
    %v3016 = vunpack.c.h.b16 %v1019
    %v3017 = vunpack.c.l.b16 %v1020
    %v3018 = vunpack.c.h.b16 %v1020
    %v3019 = vunpack.c.l.b16 %v1021
    %v3020 = vunpack.c.h.b16 %v1021
    %v3021 = vunpack.c.l.b16 %v1022
    %v3022 = vunpack.c.h.b16 %v1022
    %v3023 = vunpack.c.l.b16 %v1023
    %v3024 = vunpack.c.h.b16 %v1023
    %v3025 = vunpack.c.l.b16 %v1024
    %v3026 = vunpack.c.h.b16 %v1024
    %v3027 = vunpack.c.l.b16 %v1025
    %v3028 = vunpack.c.h.b16 %v1025
    %v3029 = vunpack.c.l.b16 %v1026
    %v3030 = vunpack.c.h.b16 %v1026
    %v3031 = vunpack.c.l.b16 %v1027
    %v3032 = vunpack.c.h.b16 %v1027
    %v3033 = vunpack.c.l.b16 %v1028
    %v3034 = vunpack.c.h.b16 %v1028
    %v3035 = vunpack.c.l.b16 %v1029
    %v3036 = vunpack.c.h.b16 %v1029
    %v3037 = vunpack.c.l.b16 %v1030
    %v3038 = vunpack.c.h.b16 %v1030
    %v3039 = vunpack.c.l.b16 %v1031
    %v3040 = vunpack.c.h.b16 %v1031
    %v3041 = vunpack.c.l.b16 %v1032
    %v3042 = vunpack.c.h.b16 %v1032
    %v3043 = vunpack.c.l.b16 %v1033
    %v3044 = vunpack.c.h.b16 %v1033
    %v3045 = vunpack.c.l.b16 %v1034
    %v3046 = vunpack.c.h.b16 %v1034
    %v3047 = vunpack.c.l.b16 %v1035
    %v3048 = vunpack.c.h.b16 %v1035
    %v3049 = vunpack.c.l.b16 %v1036
    %v3050 = vunpack.c.h.b16 %v1036
    %v3051 = vunpack.c.l.b16 %v1037
    %v3052 = vunpack.c.h.b16 %v1037
    %v3053 = vunpack.c.l.b16 %v1038
    %v3054 = vunpack.c.h.b16 %v1038
    %v3055 = vunpack.c.l.b16 %v1039
    %v3056 = vunpack.c.h.b16 %v1039
    %v3057 = vunpack.c.l.b16 %v1040
    %v3058 = vunpack.c.h.b16 %v1040
    %v3059 = vunpack.c.l.b16 %v1041
    %v3060 = vunpack.c.h.b16 %v1041
    %v3061 = vunpack.c.l.b16 %v1042
    %v3062 = vunpack.c.h.b16 %v1042
    %v3063 = vunpack.c.l.b16 %v1043
    %v3064 = vunpack.c.h.b16 %v1043
    %v3065 = vunpack.c.l.b16 %v1044
    %v3066 = vunpack.c.h.b16 %v1044
    %v3067 = vunpack.c.l.b16 %v1045
    %v3068 = vunpack.c.h.b16 %v1045
    %v3069 = vunpack.c.l.b16 %v1046
    %v3070 = vunpack.c.h.b16 %v1046
    %v3071 = vunpack.c.l.b16 %v1047
    %v3072 = vunpack.c.h.b16 %v1047
    %v3073 = vunpack.c.l.b16 %v1048
    %v3074 = vunpack.c.h.b16 %v1048
    %v3075 = vunpack.c.l.b16 %v1049
    %v3076 = vunpack.c.h.b16 %v1049
    %v3077 = vunpack.c.l.b16 %v1050
    %v3078 = vunpack.c.h.b16 %v1050
    %v3079 = vunpack.c.l.b16 %v1051
    %v3080 = vunpack.c.h.b16 %v1051
    %v3081 = vunpack.c.l.b16 %v1052
    %v3082 = vunpack.c.h.b16 %v1052
    %v3083 = vunpack.c.l.b16 %v1053
    %v3084 = vunpack.c.h.b16 %v1053
    %v3085 = vunpack.c.l.b16 %v1054
    %v3086 = vunpack.c.h.b16 %v1054
    %v3087 = vunpack.c.l.b16 %v1055
    %v3088 = vunpack.c.h.b16 %v1055
    %v3089 = vunpack.c.l.b16 %v1056
    %v3090 = vunpack.c.h.b16 %v1056
    %v3091 = vunpack.c.l.b16 %v1057
    %v3092 = vunpack.c.h.b16 %v1057
    %v3093 = vunpack.c.l.b16 %v1058
    %v3094 = vunpack.c.h.b16 %v1058
    %v3095 = vunpack.c.l.b16 %v1059
    %v3096 = vunpack.c.h.b16 %v1059
    %v3097 = vunpack.c.l.b16 %v1060
    %v3098 = vunpack.c.h.b16 %v1060
    %v3099 = vunpack.c.l.b16 %v1061
    %v3100 = vunpack.c.h.b16 %v1061
    %v3101 = vunpack.c.l.b16 %v1062
    %v3102 = vunpack.c.h.b16 %v1062
    %v3103 = vunpack.c.l.b16 %v1063
    %v3104 = vunpack.c.h.b16 %v1063
    %v3105 = vunpack.c.l.b16 %v1064
    %v3106 = vunpack.c.h.b16 %v1064
    %v3107 = vunpack.c.l.b16 %v1065
    %v3108 = vunpack.c.h.b16 %v1065
    %v3109 = vunpack.c.l.b16 %v1066
    %v3110 = vunpack.c.h.b16 %v1066
    %v3111 = vunpack.c.l.b16 %v1067
    %v3112 = vunpack.c.h.b16 %v1067
    %v3113 = vunpack.c.l.b16 %v1068
    %v3114 = vunpack.c.h.b16 %v1068
    %v3115 = vunpack.c.l.b16 %v1069
    %v3116 = vunpack.c.h.b16 %v1069
    %v3117 = vunpack.c.l.b16 %v1070
    %v3118 = vunpack.c.h.b16 %v1070
    %v3119 = vunpack.c.l.b16 %v1071
    %v3120 = vunpack.c.h.b16 %v1071
    %v3121 = vunpack.c.l.b16 %v1072
    %v3122 = vunpack.c.h.b16 %v1072
    %v3123 = vunpack.c.l.b16 %v1073
    %v3124 = vunpack.c.h.b16 %v1073
    %v3125 = vunpack.c.l.b16 %v1074
    %v3126 = vunpack.c.h.b16 %v1074
    %v3127 = vunpack.c.l.b16 %v1075
    %v3128 = vunpack.c.h.b16 %v1075
    %v3129 = vunpack.c.l.b16 %v1076
    %v3130 = vunpack.c.h.b16 %v1076
    %v3131 = vunpack.c.l.b16 %v1077
    %v3132 = vunpack.c.h.b16 %v1077
    %v3133 = vunpack.c.l.b16 %v1078
    %v3134 = vunpack.c.h.b16 %v1078
    %v3135 = vunpack.c.l.b16 %v1079
    %v3136 = vunpack.c.h.b16 %v1079
    %v3137 = vunpack.c.l.b16 %v1080
    %v3138 = vunpack.c.h.b16 %v1080
    %v3139 = vunpack.c.l.b16 %v1081
    %v3140 = vunpack.c.h.b16 %v1081
    %v3141 = vunpack.c.l.b16 %v1082
    %v3142 = vunpack.c.h.b16 %v1082
    %v3143 = vunpack.c.l.b16 %v1083
    %v3144 = vunpack.c.h.b16 %v1083
    %v3145 = vunpack.c.l.b16 %v1084
    %v3146 = vunpack.c.h.b16 %v1084
    %v3147 = vunpack.c.l.b16 %v1085
    %v3148 = vunpack.c.h.b16 %v1085
    %v3149 = vunpack.c.l.b16 %v1086
    %v3150 = vunpack.c.h.b16 %v1086
    %v3151 = vunpack.c.l.b16 %v1087
    %v3152 = vunpack.c.h.b16 %v1087
    %v3153 = vunpack.c.l.b16 %v1088
    %v3154 = vunpack.c.h.b16 %v1088
    %v3155 = vunpack.c.l.b16 %v1089
    %v3156 = vunpack.c.h.b16 %v1089
    %v3157 = vunpack.c.l.b16 %v1090
    %v3158 = vunpack.c.h.b16 %v1090
    %v3159 = vunpack.c.l.b16 %v1091
    %v3160 = vunpack.c.h.b16 %v1091
    %v3161 = vunpack.c.l.b16 %v1092
    %v3162 = vunpack.c.h.b16 %v1092
    %v3163 = vunpack.c.l.b16 %v1093
    %v3164 = vunpack.c.h.b16 %v1093
    %v3165 = vunpack.c.l.b16 %v1094
    %v3166 = vunpack.c.h.b16 %v1094
    %v3167 = vunpack.c.l.b16 %v1095
    %v3168 = vunpack.c.h.b16 %v1095
    %v3169 = vunpack.c.l.b16 %v1096
    %v3170 = vunpack.c.h.b16 %v1096
    %v3171 = vunpack.c.l.b16 %v1097
    %v3172 = vunpack.c.h.b16 %v1097
    %v3173 = vunpack.c.l.b16 %v1098
    %v3174 = vunpack.c.h.b16 %v1098
    %v3175 = vunpack.c.l.b16 %v1099
    %v3176 = vunpack.c.h.b16 %v1099
    %v3177 = vunpack.c.l.b16 %v1100
    %v3178 = vunpack.c.h.b16 %v1100
    %v3179 = vunpack.c.l.b16 %v1101
    %v3180 = vunpack.c.h.b16 %v1101
    %v3181 = vunpack.c.l.b16 %v1102
    %v3182 = vunpack.c.h.b16 %v1102
    %v3183 = vunpack.c.l.b16 %v1103
    %v3184 = vunpack.c.h.b16 %v1103
    %v3185 = vunpack.c.l.b16 %v1104
    %v3186 = vunpack.c.h.b16 %v1104
    %v3187 = vunpack.c.l.b16 %v1105
    %v3188 = vunpack.c.h.b16 %v1105
    %v3189 = vunpack.c.l.b16 %v1106
    %v3190 = vunpack.c.h.b16 %v1106
    %v3191 = vunpack.c.l.b16 %v1107
    %v3192 = vunpack.c.h.b16 %v1107
    %v3193 = vunpack.c.l.b16 %v1108
    %v3194 = vunpack.c.h.b16 %v1108
    %v3195 = vunpack.c.l.b16 %v1109
    %v3196 = vunpack.c.h.b16 %v1109
    %v3197 = vunpack.c.l.b16 %v1110
    %v3198 = vunpack.c.h.b16 %v1110
    %v3199 = vunpack.c.l.b16 %v1111
    %v3200 = vunpack.c.h.b16 %v1111
    %v3201 = vunpack.c.l.b16 %v1112
    %v3202 = vunpack.c.h.b16 %v1112
    %v3203 = vunpack.c.l.b16 %v1113
    %v3204 = vunpack.c.h.b16 %v1113
    %v3205 = vunpack.c.l.b16 %v1114
    %v3206 = vunpack.c.h.b16 %v1114
    %v3207 = vunpack.c.l.b16 %v1115
    %v3208 = vunpack.c.h.b16 %v1115
    %v3209 = vunpack.c.l.b16 %v1116
    %v3210 = vunpack.c.h.b16 %v1116
    %v3211 = vunpack.c.l.b16 %v1117
    %v3212 = vunpack.c.h.b16 %v1117
    %v3213 = vunpack.c.l.b16 %v1118
    %v3214 = vunpack.c.h.b16 %v1118
    %v3215 = vunpack.c.l.b16 %v1119
    %v3216 = vunpack.c.h.b16 %v1119
    %v3217 = vunpack.c.l.b16 %v1120
    %v3218 = vunpack.c.h.b16 %v1120
    %v3219 = vunpack.c.l.b16 %v1121
    %v3220 = vunpack.c.h.b16 %v1121
    %v3221 = vunpack.c.l.b16 %v1122
    %v3222 = vunpack.c.h.b16 %v1122
    %v3223 = vunpack.c.l.b16 %v1123
    %v3224 = vunpack.c.h.b16 %v1123
    %v3225 = vunpack.c.l.b16 %v1124
    %v3226 = vunpack.c.h.b16 %v1124
    %v3227 = vunpack.c.l.b16 %v1125
    %v3228 = vunpack.c.h.b16 %v1125
    %v3229 = vunpack.c.l.b16 %v1126
    %v3230 = vunpack.c.h.b16 %v1126
    %v3231 = vunpack.c.l.b16 %v1127
    %v3232 = vunpack.c.h.b16 %v1127
    %v3233 = vunpack.c.l.b16 %v1128
    %v3234 = vunpack.c.h.b16 %v1128
    %v3235 = vunpack.c.l.b16 %v1129
    %v3236 = vunpack.c.h.b16 %v1129
    %v3237 = vunpack.c.l.b16 %v1130
    %v3238 = vunpack.c.h.b16 %v1130
    %v3239 = vunpack.c.l.b16 %v1131
    %v3240 = vunpack.c.h.b16 %v1131
    %v3241 = vunpack.c.l.b16 %v1132
    %v3242 = vunpack.c.h.b16 %v1132
    %v3243 = vunpack.c.l.b16 %v1133
    %v3244 = vunpack.c.h.b16 %v1133
    %v3245 = vunpack.c.l.b16 %v1134
    %v3246 = vunpack.c.h.b16 %v1134
    %v3247 = vunpack.c.l.b16 %v1135
    %v3248 = vunpack.c.h.b16 %v1135
    %v3249 = vunpack.c.l.b16 %v1136
    %v3250 = vunpack.c.h.b16 %v1136
    %v3251 = vunpack.c.l.b16 %v1137
    %v3252 = vunpack.c.h.b16 %v1137
    %v3253 = vunpack.c.l.b16 %v1138
    %v3254 = vunpack.c.h.b16 %v1138
    %v3255 = vunpack.c.l.b16 %v1139
    %v3256 = vunpack.c.h.b16 %v1139
    %v3257 = vunpack.c.l.b16 %v1140
    %v3258 = vunpack.c.h.b16 %v1140
    %v3259 = vunpack.c.l.b16 %v1141
    %v3260 = vunpack.c.h.b16 %v1141
    %v3261 = vunpack.c.l.b16 %v1142
    %v3262 = vunpack.c.h.b16 %v1142
    %v3263 = vunpack.c.l.b16 %v1143
    %v3264 = vunpack.c.h.b16 %v1143
    %v3265 = vunpack.c.l.b16 %v1144
    %v3266 = vunpack.c.h.b16 %v1144
    %v3267 = vunpack.c.l.b16 %v1145
    %v3268 = vunpack.c.h.b16 %v1145
    %v3269 = vunpack.c.l.b16 %v1146
    %v3270 = vunpack.c.h.b16 %v1146
    %v3271 = vunpack.c.l.b16 %v1147
    %v3272 = vunpack.c.h.b16 %v1147
    %v3273 = vunpack.c.l.b16 %v1148
    %v3274 = vunpack.c.h.b16 %v1148
    %v3275 = vunpack.c.l.b16 %v1149
    %v3276 = vunpack.c.h.b16 %v1149
    %v3277 = vunpack.c.l.b16 %v1150
    %v3278 = vunpack.c.h.b16 %v1150
    %v3279 = vunpack.c.l.b16 %v1151
    %v3280 = vunpack.c.h.b16 %v1151
    %v3281 = vunpack.c.l.b16 %v1152
    %v3282 = vunpack.c.h.b16 %v1152
    %v3283 = vunpack.c.l.b16 %v1153
    %v3284 = vunpack.c.h.b16 %v1153
    %v3285 = vunpack.c.l.b16 %v1154
    %v3286 = vunpack.c.h.b16 %v1154
    %v3287 = vunpack.c.l.b16 %v1155
    %v3288 = vunpack.c.h.b16 %v1155
    %v3289 = vunpack.c.l.b16 %v1156
    %v3290 = vunpack.c.h.b16 %v1156
    %v3291 = vunpack.c.l.b16 %v1157
    %v3292 = vunpack.c.h.b16 %v1157
    %v3293 = vunpack.c.l.b16 %v1158
    %v3294 = vunpack.c.h.b16 %v1158
    %v3295 = vunpack.c.l.b16 %v1159
    %v3296 = vunpack.c.h.b16 %v1159
    %v3297 = vunpack.c.l.b16 %v1160
    %v3298 = vunpack.c.h.b16 %v1160
    %v3299 = vunpack.c.l.b16 %v1161
    %v3300 = vunpack.c.h.b16 %v1161
    %v3301 = vunpack.c.l.b16 %v1162
    %v3302 = vunpack.c.h.b16 %v1162
    %v3303 = vunpack.c.l.b16 %v1163
    %v3304 = vunpack.c.h.b16 %v1163
    %v3305 = vunpack.c.l.b16 %v1164
    %v3306 = vunpack.c.h.b16 %v1164
    %v3307 = vunpack.c.l.b16 %v1165
    %v3308 = vunpack.c.h.b16 %v1165
    %v3309 = vunpack.c.l.b16 %v1166
    %v3310 = vunpack.c.h.b16 %v1166
    %v3311 = vunpack.c.l.b16 %v1167
    %v3312 = vunpack.c.h.b16 %v1167
    %v3313 = vunpack.c.l.b16 %v1168
    %v3314 = vunpack.c.h.b16 %v1168
    %v3315 = vunpack.c.l.b16 %v1169
    %v3316 = vunpack.c.h.b16 %v1169
    %v3317 = vunpack.c.l.b16 %v1170
    %v3318 = vunpack.c.h.b16 %v1170
    %v3319 = vunpack.c.l.b16 %v1171
    %v3320 = vunpack.c.h.b16 %v1171
    %v3321 = vunpack.c.l.b16 %v1172
    %v3322 = vunpack.c.h.b16 %v1172
    %v3323 = vunpack.c.l.b16 %v1173
    %v3324 = vunpack.c.h.b16 %v1173
    %v3325 = vunpack.c.l.b16 %v1174
    %v3326 = vunpack.c.h.b16 %v1174
    %v3327 = vunpack.c.l.b16 %v1175
    %v3328 = vunpack.c.h.b16 %v1175
    %v3329 = vunpack.c.l.b16 %v1176
    %v3330 = vunpack.c.h.b16 %v1176
    %v3331 = vunpack.c.l.b16 %v1177
    %v3332 = vunpack.c.h.b16 %v1177
    %v3333 = vunpack.c.l.b16 %v1178
    %v3334 = vunpack.c.h.b16 %v1178
    %v3335 = vunpack.c.l.b16 %v1179
    %v3336 = vunpack.c.h.b16 %v1179
    %v3337 = vunpack.c.l.b16 %v1180
    %v3338 = vunpack.c.h.b16 %v1180
    %v3339 = vunpack.c.l.b16 %v1181
    %v3340 = vunpack.c.h.b16 %v1181
    %v3341 = vunpack.c.l.b16 %v1182
    %v3342 = vunpack.c.h.b16 %v1182
    %v3343 = vunpack.c.l.b16 %v1183
    %v3344 = vunpack.c.h.b16 %v1183
    %v3345 = vunpack.c.l.b16 %v1184
    %v3346 = vunpack.c.h.b16 %v1184
    %v3347 = vunpack.c.l.b16 %v1185
    %v3348 = vunpack.c.h.b16 %v1185
    %v3349 = vunpack.c.l.b16 %v1186
    %v3350 = vunpack.c.h.b16 %v1186
    %v3351 = vunpack.c.l.b16 %v1187
    %v3352 = vunpack.c.h.b16 %v1187
    %v3353 = vunpack.c.l.b16 %v1188
    %v3354 = vunpack.c.h.b16 %v1188
    %v3355 = vunpack.c.l.b16 %v1189
    %v3356 = vunpack.c.h.b16 %v1189
    %v3357 = vunpack.c.l.b16 %v1190
    %v3358 = vunpack.c.h.b16 %v1190
    %v3359 = vunpack.c.l.b16 %v1191
    %v3360 = vunpack.c.h.b16 %v1191
    %v3361 = vunpack.c.l.b16 %v1192
    %v3362 = vunpack.c.h.b16 %v1192
    %v3363 = vunpack.c.l.b16 %v1193
    %v3364 = vunpack.c.h.b16 %v1193
    %v3365 = vunpack.c.l.b16 %v1194
    %v3366 = vunpack.c.h.b16 %v1194
    %v3367 = vunpack.c.l.b16 %v1195
    %v3368 = vunpack.c.h.b16 %v1195
    %v3369 = vunpack.c.l.b16 %v1196
    %v3370 = vunpack.c.h.b16 %v1196
    %v3371 = vunpack.c.l.b16 %v1197
    %v3372 = vunpack.c.h.b16 %v1197
    %v3373 = vunpack.c.l.b16 %v1198
    %v3374 = vunpack.c.h.b16 %v1198
    %v3375 = vunpack.c.l.b16 %v1199
    %v3376 = vunpack.c.h.b16 %v1199
    %v3377 = vunpack.c.l.b16 %v1200
    %v3378 = vunpack.c.h.b16 %v1200
    %v3379 = vunpack.c.l.b16 %v1201
    %v3380 = vunpack.c.h.b16 %v1201
    %v3381 = vunpack.c.l.b16 %v1202
    %v3382 = vunpack.c.h.b16 %v1202
    %v3383 = vunpack.c.l.b16 %v1203
    %v3384 = vunpack.c.h.b16 %v1203
    %v3385 = vunpack.c.l.b16 %v1204
    %v3386 = vunpack.c.h.b16 %v1204
    %v3387 = vunpack.c.l.b16 %v1205
    %v3388 = vunpack.c.h.b16 %v1205
    %v3389 = vunpack.c.l.b16 %v1206
    %v3390 = vunpack.c.h.b16 %v1206
    %v3391 = vunpack.c.l.b16 %v1207
    %v3392 = vunpack.c.h.b16 %v1207
    %v3393 = vunpack.c.l.b16 %v1208
    %v3394 = vunpack.c.h.b16 %v1208
    %v3395 = vunpack.c.l.b16 %v1209
    %v3396 = vunpack.c.h.b16 %v1209
    %v3397 = vunpack.c.l.b16 %v1210
    %v3398 = vunpack.c.h.b16 %v1210
    %v3399 = vunpack.c.l.b16 %v1211
    %v3400 = vunpack.c.h.b16 %v1211
    %v3401 = vunpack.c.l.b16 %v1212
    %v3402 = vunpack.c.h.b16 %v1212
    %v3403 = vunpack.c.l.b16 %v1213
    %v3404 = vunpack.c.h.b16 %v1213
    %v3405 = vunpack.c.l.b16 %v1214
    %v3406 = vunpack.c.h.b16 %v1214
    %v3407 = vunpack.c.l.b16 %v1215
    %v3408 = vunpack.c.h.b16 %v1215
    %v3409 = vunpack.c.l.b16 %v1216
    %v3410 = vunpack.c.h.b16 %v1216
    %v3411 = vunpack.c.l.b16 %v1217
    %v3412 = vunpack.c.h.b16 %v1217
    %v3413 = vunpack.c.l.b16 %v1218
    %v3414 = vunpack.c.h.b16 %v1218
    %v3415 = vunpack.c.l.b16 %v1219
    %v3416 = vunpack.c.h.b16 %v1219
    %v3417 = vunpack.c.l.b16 %v1220
    %v3418 = vunpack.c.h.b16 %v1220
    %v3419 = vunpack.c.l.b16 %v1221
    %v3420 = vunpack.c.h.b16 %v1221
    %v3421 = vunpack.c.l.b16 %v1222
    %v3422 = vunpack.c.h.b16 %v1222
    %v3423 = vunpack.c.l.b16 %v1223
    %v3424 = vunpack.c.h.b16 %v1223
    %v3425 = vunpack.c.l.b16 %v1224
    %v3426 = vunpack.c.h.b16 %v1224
    %v3427 = vunpack.c.l.b16 %v1225
    %v3428 = vunpack.c.h.b16 %v1225
    %v3429 = vunpack.c.l.b16 %v1226
    %v3430 = vunpack.c.h.b16 %v1226
    %v3431 = vunpack.c.l.b16 %v1227
    %v3432 = vunpack.c.h.b16 %v1227
    %v3433 = vunpack.c.l.b16 %v1228
    %v3434 = vunpack.c.h.b16 %v1228
    %v3435 = vunpack.c.l.b16 %v1229
    %v3436 = vunpack.c.h.b16 %v1229
    %v3437 = vunpack.c.l.b16 %v1230
    %v3438 = vunpack.c.h.b16 %v1230
    %v3439 = vunpack.c.l.b16 %v1231
    %v3440 = vunpack.c.h.b16 %v1231
    %v3441 = vunpack.c.l.b16 %v1232
    %v3442 = vunpack.c.h.b16 %v1232
    %v3443 = vunpack.c.l.b16 %v1233
    %v3444 = vunpack.c.h.b16 %v1233
    %v3445 = vunpack.c.l.b16 %v1234
    %v3446 = vunpack.c.h.b16 %v1234
    %v3447 = vunpack.c.l.b16 %v1235
    %v3448 = vunpack.c.h.b16 %v1235
    %v3449 = vunpack.c.l.b16 %v1236
    %v3450 = vunpack.c.h.b16 %v1236
    %v3451 = vunpack.c.l.b16 %v1237
    %v3452 = vunpack.c.h.b16 %v1237
    %v3453 = vunpack.c.l.b16 %v1238
    %v3454 = vunpack.c.h.b16 %v1238
    %v3455 = vunpack.c.l.b16 %v1239
    %v3456 = vunpack.c.h.b16 %v1239
    %v3457 = vunpack.c.l.b16 %v1240
    %v3458 = vunpack.c.h.b16 %v1240
    %v3459 = vunpack.c.l.b16 %v1241
    %v3460 = vunpack.c.h.b16 %v1241
    %v3461 = vunpack.c.l.b16 %v1242
    %v3462 = vunpack.c.h.b16 %v1242
    %v3463 = vunpack.c.l.b16 %v1243
    %v3464 = vunpack.c.h.b16 %v1243
    %v3465 = vunpack.c.l.b16 %v1244
    %v3466 = vunpack.c.h.b16 %v1244
    %v3467 = vunpack.c.l.b16 %v1245
    %v3468 = vunpack.c.h.b16 %v1245
    %v3469 = vunpack.c.l.b16 %v1246
    %v3470 = vunpack.c.h.b16 %v1246
    %v3471 = vunpack.c.l.b16 %v1247
    %v3472 = vunpack.c.h.b16 %v1247
    %v3473 = vunpack.c.l.b16 %v1248
    %v3474 = vunpack.c.h.b16 %v1248
    %v3475 = vunpack.c.l.b16 %v1249
    %v3476 = vunpack.c.h.b16 %v1249
    %v3477 = vunpack.c.l.b16 %v1250
    %v3478 = vunpack.c.h.b16 %v1250
    %v3479 = vunpack.c.l.b16 %v1251
    %v3480 = vunpack.c.h.b16 %v1251
    %v3481 = vunpack.c.l.b16 %v1252
    %v3482 = vunpack.c.h.b16 %v1252
    %v3483 = vunpack.c.l.b16 %v1253
    %v3484 = vunpack.c.h.b16 %v1253
    %v3485 = vunpack.c.l.b16 %v1254
    %v3486 = vunpack.c.h.b16 %v1254
    %v3487 = vunpack.c.l.b16 %v1255
    %v3488 = vunpack.c.h.b16 %v1255
    %v3489 = vunpack.c.l.b16 %v1256
    %v3490 = vunpack.c.h.b16 %v1256
    %v3491 = vunpack.c.l.b16 %v1257
    %v3492 = vunpack.c.h.b16 %v1257
    %v3493 = vunpack.c.l.b16 %v1258
    %v3494 = vunpack.c.h.b16 %v1258
    %v3495 = vunpack.c.l.b16 %v1259
    %v3496 = vunpack.c.h.b16 %v1259
    %v3497 = vunpack.c.l.b16 %v1260
    %v3498 = vunpack.c.h.b16 %v1260
    %v3499 = vunpack.c.l.b16 %v1261
    %v3500 = vunpack.c.h.b16 %v1261
    %v3501 = vunpack.c.l.b16 %v1262
    %v3502 = vunpack.c.h.b16 %v1262
    %v3503 = vunpack.c.l.b16 %v1263
    %v3504 = vunpack.c.h.b16 %v1263
    %v3505 = vunpack.c.l.b16 %v1264
    %v3506 = vunpack.c.h.b16 %v1264
    %v3507 = vunpack.c.l.b16 %v1265
    %v3508 = vunpack.c.h.b16 %v1265
    %v3509 = vunpack.c.l.b16 %v1266
    %v3510 = vunpack.c.h.b16 %v1266
    %v3511 = vunpack.c.l.b16 %v1267
    %v3512 = vunpack.c.h.b16 %v1267
    %v3513 = vunpack.c.l.b16 %v1268
    %v3514 = vunpack.c.h.b16 %v1268
    %v3515 = vunpack.c.l.b16 %v1269
    %v3516 = vunpack.c.h.b16 %v1269
    %v3517 = vunpack.c.l.b16 %v1270
    %v3518 = vunpack.c.h.b16 %v1270
    %v3519 = vunpack.c.l.b16 %v1271
    %v3520 = vunpack.c.h.b16 %v1271
    %v3521 = vunpack.c.l.b16 %v1272
    %v3522 = vunpack.c.h.b16 %v1272
    %v3523 = vunpack.c.l.b16 %v1273
    %v3524 = vunpack.c.h.b16 %v1273
    %v3525 = vunpack.c.l.b16 %v1274
    %v3526 = vunpack.c.h.b16 %v1274
    %v3527 = vunpack.c.l.b16 %v1275
    %v3528 = vunpack.c.h.b16 %v1275
    %v3529 = vunpack.c.l.b16 %v1276
    %v3530 = vunpack.c.h.b16 %v1276
    %v3531 = vunpack.c.l.b16 %v1277
    %v3532 = vunpack.c.h.b16 %v1277
    %v3533 = vunpack.c.l.b16 %v1278
    %v3534 = vunpack.c.h.b16 %v1278
    %v3535 = vunpack.c.l.b16 %v1279
    %v3536 = vunpack.c.h.b16 %v1279
    %v3537 = vunpack.c.l.b16 %v1280
    %v3538 = vunpack.c.h.b16 %v1280
    %v3539 = vunpack.c.l.b16 %v1281
    %v3540 = vunpack.c.h.b16 %v1281
    %v3541 = vunpack.c.l.b16 %v1282
    %v3542 = vunpack.c.h.b16 %v1282
    %v3543 = vunpack.c.l.b16 %v1283
    %v3544 = vunpack.c.h.b16 %v1283
    %v3545 = vunpack.c.l.b16 %v1284
    %v3546 = vunpack.c.h.b16 %v1284
    %v3547 = vunpack.c.l.b16 %v1285
    %v3548 = vunpack.c.h.b16 %v1285
    %v3549 = vunpack.c.l.b16 %v1286
    %v3550 = vunpack.c.h.b16 %v1286
    %v3551 = vunpack.c.l.b16 %v1287
    %v3552 = vunpack.c.h.b16 %v1287
    %v3553 = vunpack.c.l.b16 %v1288
    %v3554 = vunpack.c.h.b16 %v1288
    %v3555 = vunpack.c.l.b16 %v1289
    %v3556 = vunpack.c.h.b16 %v1289
    %v3557 = vunpack.c.l.b16 %v1290
    %v3558 = vunpack.c.h.b16 %v1290
    %v3559 = vunpack.c.l.b16 %v1291
    %v3560 = vunpack.c.h.b16 %v1291
    %v3561 = vunpack.c.l.b16 %v1292
    %v3562 = vunpack.c.h.b16 %v1292
    %v3563 = vunpack.c.l.b16 %v1293
    %v3564 = vunpack.c.h.b16 %v1293
    %v3565 = vunpack.c.l.b16 %v1294
    %v3566 = vunpack.c.h.b16 %v1294
    %v3567 = vunpack.c.l.b16 %v1295
    %v3568 = vunpack.c.h.b16 %v1295
    %v3569 = vunpack.c.l.b16 %v1296
    %v3570 = vunpack.c.h.b16 %v1296
    %v3571 = vunpack.c.l.b16 %v1297
    %v3572 = vunpack.c.h.b16 %v1297
    %v3573 = vunpack.c.l.b16 %v1298
    %v3574 = vunpack.c.h.b16 %v1298
    %v3575 = vunpack.c.l.b16 %v1299
    %v3576 = vunpack.c.h.b16 %v1299
    %v3577 = vunpack.c.l.b16 %v1300
    %v3578 = vunpack.c.h.b16 %v1300
    %v3579 = vunpack.c.l.b16 %v1301
    %v3580 = vunpack.c.h.b16 %v1301
    %v3581 = vunpack.c.l.b16 %v1302
    %v3582 = vunpack.c.h.b16 %v1302
    %v3583 = vunpack.c.l.b16 %v1303
    %v3584 = vunpack.c.h.b16 %v1303
    %v3585 = vunpack.c.l.b16 %v1304
    %v3586 = vunpack.c.h.b16 %v1304
    %v3587 = vunpack.c.l.b16 %v1305
    %v3588 = vunpack.c.h.b16 %v1305
    %v3589 = vunpack.c.l.b16 %v1306
    %v3590 = vunpack.c.h.b16 %v1306
    %v3591 = vunpack.c.l.b16 %v1307
    %v3592 = vunpack.c.h.b16 %v1307
    %v3593 = vunpack.c.l.b16 %v1308
    %v3594 = vunpack.c.h.b16 %v1308
    %v3595 = vunpack.c.l.b16 %v1309
    %v3596 = vunpack.c.h.b16 %v1309
    %v3597 = vunpack.c.l.b16 %v1310
    %v3598 = vunpack.c.h.b16 %v1310
    %v3599 = vunpack.c.l.b16 %v1311
    %v3600 = vunpack.c.h.b16 %v1311
    %v3601 = vunpack.c.l.b16 %v1312
    %v3602 = vunpack.c.h.b16 %v1312
    %v3603 = vunpack.c.l.b16 %v1313
    %v3604 = vunpack.c.h.b16 %v1313
    %v3605 = vunpack.c.l.b16 %v1314
    %v3606 = vunpack.c.h.b16 %v1314
    %v3607 = vunpack.c.l.b16 %v1315
    %v3608 = vunpack.c.h.b16 %v1315
    %v3609 = vunpack.c.l.b16 %v1316
    %v3610 = vunpack.c.h.b16 %v1316
    %v3611 = vunpack.c.l.b16 %v1317
    %v3612 = vunpack.c.h.b16 %v1317
    %v3613 = vunpack.c.l.b16 %v1318
    %v3614 = vunpack.c.h.b16 %v1318
    %v3615 = vunpack.c.l.b16 %v1319
    %v3616 = vunpack.c.h.b16 %v1319
    %v3617 = vunpack.c.l.b16 %v1320
    %v3618 = vunpack.c.h.b16 %v1320
    %v3619 = vunpack.c.l.b16 %v1321
    %v3620 = vunpack.c.h.b16 %v1321
    %v3621 = vunpack.c.l.b16 %v1322
    %v3622 = vunpack.c.h.b16 %v1322
    %v3623 = vunpack.c.l.b16 %v1323
    %v3624 = vunpack.c.h.b16 %v1323
    %v3625 = vunpack.c.l.b16 %v1324
    %v3626 = vunpack.c.h.b16 %v1324
    %v3627 = vunpack.c.l.b16 %v1325
    %v3628 = vunpack.c.h.b16 %v1325
    %v3629 = vunpack.c.l.b16 %v1326
    %v3630 = vunpack.c.h.b16 %v1326
    %v3631 = vunpack.c.l.b16 %v1327
    %v3632 = vunpack.c.h.b16 %v1327
    %v3633 = vunpack.c.l.b16 %v1328
    %v3634 = vunpack.c.h.b16 %v1328
    %v3635 = vunpack.c.l.b16 %v1329
    %v3636 = vunpack.c.h.b16 %v1329
    %v3637 = vunpack.c.l.b16 %v1330
    %v3638 = vunpack.c.h.b16 %v1330
    %v3639 = vunpack.c.l.b16 %v1331
    %v3640 = vunpack.c.h.b16 %v1331
    %v3641 = vunpack.c.l.b16 %v1332
    %v3642 = vunpack.c.h.b16 %v1332
    %v3643 = vunpack.c.l.b16 %v1333
    %v3644 = vunpack.c.h.b16 %v1333
    %v3645 = vunpack.c.l.b16 %v1334
    %v3646 = vunpack.c.h.b16 %v1334
    %v3647 = vunpack.c.l.b16 %v1335
    %v3648 = vunpack.c.h.b16 %v1335
    %v3649 = vunpack.c.l.b16 %v1336
    %v3650 = vunpack.c.h.b16 %v1336
    %v3651 = vunpack.c.l.b16 %v1337
    %v3652 = vunpack.c.h.b16 %v1337
    %v3653 = vunpack.c.l.b16 %v1338
    %v3654 = vunpack.c.h.b16 %v1338
    %v3655 = vunpack.c.l.b16 %v1339
    %v3656 = vunpack.c.h.b16 %v1339
    %v3657 = vunpack.c.l.b16 %v1340
    %v3658 = vunpack.c.h.b16 %v1340
    %v3659 = vunpack.c.l.b16 %v1341
    %v3660 = vunpack.c.h.b16 %v1341
    %v3661 = vunpack.c.l.b16 %v1342
    %v3662 = vunpack.c.h.b16 %v1342
    %v3663 = vunpack.c.l.b16 %v1343
    %v3664 = vunpack.c.h.b16 %v1343
    %v3665 = vunpack.c.l.b16 %v1344
    %v3666 = vunpack.c.h.b16 %v1344
    %v3667 = vunpack.c.l.b16 %v1345
    %v3668 = vunpack.c.h.b16 %v1345
    %v3669 = vunpack.c.l.b16 %v1346
    %v3670 = vunpack.c.h.b16 %v1346
    %v3671 = vunpack.c.l.b16 %v1347
    %v3672 = vunpack.c.h.b16 %v1347
    %v3673 = vunpack.c.l.b16 %v1348
    %v3674 = vunpack.c.h.b16 %v1348
    %v3675 = vunpack.c.l.b16 %v1349
    %v3676 = vunpack.c.h.b16 %v1349
    %v3677 = vunpack.c.l.b16 %v1350
    %v3678 = vunpack.c.h.b16 %v1350
    %v3679 = vunpack.c.l.b16 %v1351
    %v3680 = vunpack.c.h.b16 %v1351
    %v3681 = vunpack.c.l.b16 %v1352
    %v3682 = vunpack.c.h.b16 %v1352
    %v3683 = vunpack.c.l.b16 %v1353
    %v3684 = vunpack.c.h.b16 %v1353
    %v3685 = vunpack.c.l.b16 %v1354
    %v3686 = vunpack.c.h.b16 %v1354
    %v3687 = vunpack.c.l.b16 %v1355
    %v3688 = vunpack.c.h.b16 %v1355
    %v3689 = vunpack.c.l.b16 %v1356
    %v3690 = vunpack.c.h.b16 %v1356
    %v3691 = vunpack.c.l.b16 %v1357
    %v3692 = vunpack.c.h.b16 %v1357
    %v3693 = vunpack.c.l.b16 %v1358
    %v3694 = vunpack.c.h.b16 %v1358
    %v3695 = vunpack.c.l.b16 %v1359
    %v3696 = vunpack.c.h.b16 %v1359
    %v3697 = vunpack.c.l.b16 %v1360
    %v3698 = vunpack.c.h.b16 %v1360
    %v3699 = vunpack.c.l.b16 %v1361
    %v3700 = vunpack.c.h.b16 %v1361
    %v3701 = vunpack.c.l.b16 %v1362
    %v3702 = vunpack.c.h.b16 %v1362
    %v3703 = vunpack.c.l.b16 %v1363
    %v3704 = vunpack.c.h.b16 %v1363
    %v3705 = vunpack.c.l.b16 %v1364
    %v3706 = vunpack.c.h.b16 %v1364
    %v3707 = vunpack.c.l.b16 %v1365
    %v3708 = vunpack.c.h.b16 %v1365
    %v3709 = vunpack.c.l.b16 %v1366
    %v3710 = vunpack.c.h.b16 %v1366
    %v3711 = vunpack.c.l.b16 %v1367
    %v3712 = vunpack.c.h.b16 %v1367
    %v3713 = vunpack.c.l.b16 %v1368
    %v3714 = vunpack.c.h.b16 %v1368
    %v3715 = vunpack.c.l.b16 %v1369
    %v3716 = vunpack.c.h.b16 %v1369
    %v3717 = vunpack.c.l.b16 %v1370
    %v3718 = vunpack.c.h.b16 %v1370
    %v3719 = vunpack.c.l.b16 %v1371
    %v3720 = vunpack.c.h.b16 %v1371
    %v3721 = vunpack.c.l.b16 %v1372
    %v3722 = vunpack.c.h.b16 %v1372
    %v3723 = vunpack.c.l.b16 %v1373
    %v3724 = vunpack.c.h.b16 %v1373
    %v3725 = vunpack.c.l.b16 %v1374
    %v3726 = vunpack.c.h.b16 %v1374
    %v3727 = vunpack.c.l.b16 %v1375
    %v3728 = vunpack.c.h.b16 %v1375
    %v3729 = vunpack.c.l.b16 %v1376
    %v3730 = vunpack.c.h.b16 %v1376
    %v3731 = vunpack.c.l.b16 %v1377
    %v3732 = vunpack.c.h.b16 %v1377
    %v3733 = vunpack.c.l.b16 %v1378
    %v3734 = vunpack.c.h.b16 %v1378
    %v3735 = vunpack.c.l.b16 %v1379
    %v3736 = vunpack.c.h.b16 %v1379
    %v3737 = vunpack.c.l.b16 %v1380
    %v3738 = vunpack.c.h.b16 %v1380
    %v3739 = vunpack.c.l.b16 %v1381
    %v3740 = vunpack.c.h.b16 %v1381
    %v3741 = vunpack.c.l.b16 %v1382
    %v3742 = vunpack.c.h.b16 %v1382
    %v3743 = vunpack.c.l.b16 %v1383
    %v3744 = vunpack.c.h.b16 %v1383
    %v3745 = vunpack.c.l.b16 %v1384
    %v3746 = vunpack.c.h.b16 %v1384
    %v3747 = vunpack.c.l.b16 %v1385
    %v3748 = vunpack.c.h.b16 %v1385
    %v3749 = vunpack.c.l.b16 %v1386
    %v3750 = vunpack.c.h.b16 %v1386
    %v3751 = vunpack.c.l.b16 %v1387
    %v3752 = vunpack.c.h.b16 %v1387
    %v3753 = vunpack.c.l.b16 %v1388
    %v3754 = vunpack.c.h.b16 %v1388
    %v3755 = vunpack.c.l.b16 %v1389
    %v3756 = vunpack.c.h.b16 %v1389
    %v3757 = vunpack.c.l.b16 %v1390
    %v3758 = vunpack.c.h.b16 %v1390
    %v3759 = vunpack.c.l.b16 %v1391
    %v3760 = vunpack.c.h.b16 %v1391
    %v3761 = vunpack.c.l.b16 %v1392
    %v3762 = vunpack.c.h.b16 %v1392
    %v3763 = vunpack.c.l.b16 %v1393
    %v3764 = vunpack.c.h.b16 %v1393
    %v3765 = vunpack.c.l.b16 %v1394
    %v3766 = vunpack.c.h.b16 %v1394
    %v3767 = vunpack.c.l.b16 %v1395
    %v3768 = vunpack.c.h.b16 %v1395
    %v3769 = vunpack.c.l.b16 %v1396
    %v3770 = vunpack.c.h.b16 %v1396
    %v3771 = vunpack.c.l.b16 %v1397
    %v3772 = vunpack.c.h.b16 %v1397
    %v3773 = vunpack.c.l.b16 %v1398
    %v3774 = vunpack.c.h.b16 %v1398
    %v3775 = vunpack.c.l.b16 %v1399
    %v3776 = vunpack.c.h.b16 %v1399
    %v3777 = vunpack.c.l.b16 %v1400
    %v3778 = vunpack.c.h.b16 %v1400
    %v3779 = vunpack.c.l.b16 %v1401
    %v3780 = vunpack.c.h.b16 %v1401
    %v3781 = vunpack.c.l.b16 %v1402
    %v3782 = vunpack.c.h.b16 %v1402
    %v3783 = vunpack.c.l.b16 %v1403
    %v3784 = vunpack.c.h.b16 %v1403
    %v3785 = vunpack.c.l.b16 %v1404
    %v3786 = vunpack.c.h.b16 %v1404
    %v3787 = vunpack.c.l.b16 %v1405
    %v3788 = vunpack.c.h.b16 %v1405
    %v3789 = vunpack.c.l.b16 %v1406
    %v3790 = vunpack.c.h.b16 %v1406
    %v3791 = vunpack.c.l.b16 %v1407
    %v3792 = vunpack.c.h.b16 %v1407
    %v3793 = vunpack.c.l.b16 %v1408
    %v3794 = vunpack.c.h.b16 %v1408
    %v3795 = vunpack.c.l.b16 %v1409
    %v3796 = vunpack.c.h.b16 %v1409
    %v3797 = vunpack.c.l.b16 %v1410
    %v3798 = vunpack.c.h.b16 %v1410
    %v3799 = vunpack.c.l.b16 %v1411
    %v3800 = vunpack.c.h.b16 %v1411
    %v3801 = vunpack.c.l.b16 %v1412
    %v3802 = vunpack.c.h.b16 %v1412
    %v3803 = vunpack.c.l.b16 %v1413
    %v3804 = vunpack.c.h.b16 %v1413
    %v3805 = vunpack.c.l.b16 %v1414
    %v3806 = vunpack.c.h.b16 %v1414
    %v3807 = vunpack.c.l.b16 %v1415
    %v3808 = vunpack.c.h.b16 %v1415
    %v3809 = vunpack.c.l.b16 %v1416
    %v3810 = vunpack.c.h.b16 %v1416
    %v3811 = vunpack.c.l.b16 %v1417
    %v3812 = vunpack.c.h.b16 %v1417
    %v3813 = vunpack.c.l.b16 %v1418
    %v3814 = vunpack.c.h.b16 %v1418
    %v3815 = vunpack.c.l.b16 %v1419
    %v3816 = vunpack.c.h.b16 %v1419
    %v3817 = vunpack.c.l.b16 %v1420
    %v3818 = vunpack.c.h.b16 %v1420
    %v3819 = vunpack.c.l.b16 %v1421
    %v3820 = vunpack.c.h.b16 %v1421
    %v3821 = vunpack.c.l.b16 %v1422
    %v3822 = vunpack.c.h.b16 %v1422
    %v3823 = vunpack.c.l.b16 %v1423
    %v3824 = vunpack.c.h.b16 %v1423
    %v3825 = vunpack.c.l.b16 %v1424
    %v3826 = vunpack.c.h.b16 %v1424
    %v3827 = vunpack.c.l.b16 %v1425
    %v3828 = vunpack.c.h.b16 %v1425
    %v3829 = vunpack.c.l.b16 %v1426
    %v3830 = vunpack.c.h.b16 %v1426
    %v3831 = vunpack.c.l.b16 %v1427
    %v3832 = vunpack.c.h.b16 %v1427
    %v3833 = vunpack.c.l.b16 %v1428
    %v3834 = vunpack.c.h.b16 %v1428
    %v3835 = vpack.c.b16 %v2237, %v2235
    %v3836 = vpack.c.b16 %v2238, %v2236
    %v3837 = vpack.c.b16 %v2241, %v2239
    %v3838 = vpack.c.b16 %v2242, %v2240
    %v3839 = vpack.c.b16 %v2245, %v2243
    %v3840 = vpack.c.b16 %v2246, %v2244
    %v3841 = vpack.c.b16 %v2249, %v2247
    %v3842 = vpack.c.b16 %v2250, %v2248
    %v3843 = vpack.c.b16 %v2253, %v2251
    %v3844 = vpack.c.b16 %v2254, %v2252
    %v3845 = vpack.c.b16 %v2257, %v2255
    %v3846 = vpack.c.b16 %v2258, %v2256
    %v3847 = vpack.c.b16 %v2261, %v2259
    %v3848 = vpack.c.b16 %v2262, %v2260
    %v3849 = vpack.c.b16 %v2265, %v2263
    %v3850 = vpack.c.b16 %v2266, %v2264
    %v3851 = vpack.c.b16 %v2269, %v2267
    %v3852 = vpack.c.b16 %v2270, %v2268
    %v3853 = vpack.c.b16 %v2273, %v2271
    %v3854 = vpack.c.b16 %v2274, %v2272
    %v3855 = vpack.c.b16 %v2277, %v2275
    %v3856 = vpack.c.b16 %v2278, %v2276
    %v3857 = vpack.c.b16 %v2281, %v2279
    %v3858 = vpack.c.b16 %v2282, %v2280
    %v3859 = vpack.c.b16 %v2285, %v2283
    %v3860 = vpack.c.b16 %v2286, %v2284
    %v3861 = vpack.c.b16 %v2289, %v2287
    %v3862 = vpack.c.b16 %v2290, %v2288
    %v3863 = vpack.c.b16 %v2293, %v2291
    %v3864 = vpack.c.b16 %v2294, %v2292
    %v3865 = vpack.c.b16 %v2297, %v2295
    %v3866 = vpack.c.b16 %v2298, %v2296
    %v3867 = vpack.c.b16 %v2301, %v2299
    %v3868 = vpack.c.b16 %v2302, %v2300
    %v3869 = vpack.c.b16 %v2305, %v2303
    %v3870 = vpack.c.b16 %v2306, %v2304
    %v3871 = vpack.c.b16 %v2309, %v2307
    %v3872 = vpack.c.b16 %v2310, %v2308
    %v3873 = vpack.c.b16 %v2313, %v2311
    %v3874 = vpack.c.b16 %v2314, %v2312
    %v3875 = vpack.c.b16 %v2317, %v2315
    %v3876 = vpack.c.b16 %v2318, %v2316
    %v3877 = vpack.c.b16 %v2321, %v2319
    %v3878 = vpack.c.b16 %v2322, %v2320
    %v3879 = vpack.c.b16 %v2325, %v2323
    %v3880 = vpack.c.b16 %v2326, %v2324
    %v3881 = vpack.c.b16 %v2329, %v2327
    %v3882 = vpack.c.b16 %v2330, %v2328
    %v3883 = vpack.c.b16 %v2333, %v2331
    %v3884 = vpack.c.b16 %v2334, %v2332
    %v3885 = vpack.c.b16 %v2337, %v2335
    %v3886 = vpack.c.b16 %v2338, %v2336
    %v3887 = vpack.c.b16 %v2341, %v2339
    %v3888 = vpack.c.b16 %v2342, %v2340
    %v3889 = vpack.c.b16 %v2345, %v2343
    %v3890 = vpack.c.b16 %v2346, %v2344
    %v3891 = vpack.c.b16 %v2349, %v2347
    %v3892 = vpack.c.b16 %v2350, %v2348
    %v3893 = vpack.c.b16 %v2353, %v2351
    %v3894 = vpack.c.b16 %v2354, %v2352
    %v3895 = vpack.c.b16 %v2357, %v2355
    %v3896 = vpack.c.b16 %v2358, %v2356
    %v3897 = vpack.c.b16 %v2361, %v2359
    %v3898 = vpack.c.b16 %v2362, %v2360
    %v3899 = vpack.c.b16 %v2365, %v2363
    %v3900 = vpack.c.b16 %v2366, %v2364
    %v3901 = vpack.c.b16 %v2369, %v2367
    %v3902 = vpack.c.b16 %v2370, %v2368
    %v3903 = vpack.c.b16 %v2373, %v2371
    %v3904 = vpack.c.b16 %v2374, %v2372
    %v3905 = vpack.c.b16 %v2377, %v2375
    %v3906 = vpack.c.b16 %v2378, %v2376
    %v3907 = vpack.c.b16 %v2381, %v2379
    %v3908 = vpack.c.b16 %v2382, %v2380
    %v3909 = vpack.c.b16 %v2385, %v2383
    %v3910 = vpack.c.b16 %v2386, %v2384
    %v3911 = vpack.c.b16 %v2389, %v2387
    %v3912 = vpack.c.b16 %v2390, %v2388
    %v3913 = vpack.c.b16 %v2393, %v2391
    %v3914 = vpack.c.b16 %v2394, %v2392
    %v3915 = vpack.c.b16 %v2397, %v2395
    %v3916 = vpack.c.b16 %v2398, %v2396
    %v3917 = vpack.c.b16 %v2401, %v2399
    %v3918 = vpack.c.b16 %v2402, %v2400
    %v3919 = vpack.c.b16 %v2405, %v2403
    %v3920 = vpack.c.b16 %v2406, %v2404
    %v3921 = vpack.c.b16 %v2409, %v2407
    %v3922 = vpack.c.b16 %v2410, %v2408
    %v3923 = vpack.c.b16 %v2413, %v2411
    %v3924 = vpack.c.b16 %v2414, %v2412
    %v3925 = vpack.c.b16 %v2417, %v2415
    %v3926 = vpack.c.b16 %v2418, %v2416
    %v3927 = vpack.c.b16 %v2421, %v2419
    %v3928 = vpack.c.b16 %v2422, %v2420
    %v3929 = vpack.c.b16 %v2425, %v2423
    %v3930 = vpack.c.b16 %v2426, %v2424
    %v3931 = vpack.c.b16 %v2429, %v2427
    %v3932 = vpack.c.b16 %v2430, %v2428
    %v3933 = vpack.c.b16 %v2433, %v2431
    %v3934 = vpack.c.b16 %v2434, %v2432
    %v3935 = vpack.c.b16 %v2437, %v2435
    %v3936 = vpack.c.b16 %v2438, %v2436
    %v3937 = vpack.c.b16 %v2441, %v2439
    %v3938 = vpack.c.b16 %v2442, %v2440
    %v3939 = vpack.c.b16 %v2445, %v2443
    %v3940 = vpack.c.b16 %v2446, %v2444
    %v3941 = vpack.c.b16 %v2449, %v2447
    %v3942 = vpack.c.b16 %v2450, %v2448
    %v3943 = vpack.c.b16 %v2453, %v2451
    %v3944 = vpack.c.b16 %v2454, %v2452
    %v3945 = vpack.c.b16 %v2457, %v2455
    %v3946 = vpack.c.b16 %v2458, %v2456
    %v3947 = vpack.c.b16 %v2461, %v2459
    %v3948 = vpack.c.b16 %v2462, %v2460
    %v3949 = vpack.c.b16 %v2465, %v2463
    %v3950 = vpack.c.b16 %v2466, %v2464
    %v3951 = vpack.c.b16 %v2469, %v2467
    %v3952 = vpack.c.b16 %v2470, %v2468
    %v3953 = vpack.c.b16 %v2473, %v2471
    %v3954 = vpack.c.b16 %v2474, %v2472
    %v3955 = vpack.c.b16 %v2477, %v2475
    %v3956 = vpack.c.b16 %v2478, %v2476
    %v3957 = vpack.c.b16 %v2481, %v2479
    %v3958 = vpack.c.b16 %v2482, %v2480
    %v3959 = vpack.c.b16 %v2485, %v2483
    %v3960 = vpack.c.b16 %v2486, %v2484
    %v3961 = vpack.c.b16 %v2489, %v2487
    %v3962 = vpack.c.b16 %v2490, %v2488
    %v3963 = vpack.c.b16 %v2493, %v2491
    %v3964 = vpack.c.b16 %v2494, %v2492
    %v3965 = vpack.c.b16 %v2497, %v2495
    %v3966 = vpack.c.b16 %v2498, %v2496
    %v3967 = vpack.c.b16 %v2501, %v2499
    %v3968 = vpack.c.b16 %v2502, %v2500
    %v3969 = vpack.c.b16 %v2505, %v2503
    %v3970 = vpack.c.b16 %v2506, %v2504
    %v3971 = vpack.c.b16 %v2509, %v2507
    %v3972 = vpack.c.b16 %v2510, %v2508
    %v3973 = vpack.c.b16 %v2513, %v2511
    %v3974 = vpack.c.b16 %v2514, %v2512
    %v3975 = vpack.c.b16 %v2517, %v2515
    %v3976 = vpack.c.b16 %v2518, %v2516
    %v3977 = vpack.c.b16 %v2521, %v2519
    %v3978 = vpack.c.b16 %v2522, %v2520
    %v3979 = vpack.c.b16 %v2525, %v2523
    %v3980 = vpack.c.b16 %v2526, %v2524
    %v3981 = vpack.c.b16 %v2529, %v2527
    %v3982 = vpack.c.b16 %v2530, %v2528
    %v3983 = vpack.c.b16 %v2533, %v2531
    %v3984 = vpack.c.b16 %v2534, %v2532
    %v3985 = vpack.c.b16 %v2537, %v2535
    %v3986 = vpack.c.b16 %v2538, %v2536
    %v3987 = vpack.c.b16 %v2541, %v2539
    %v3988 = vpack.c.b16 %v2542, %v2540
    %v3989 = vpack.c.b16 %v2545, %v2543
    %v3990 = vpack.c.b16 %v2546, %v2544
    %v3991 = vpack.c.b16 %v2549, %v2547
    %v3992 = vpack.c.b16 %v2550, %v2548
    %v3993 = vpack.c.b16 %v2553, %v2551
    %v3994 = vpack.c.b16 %v2554, %v2552
    %v3995 = vpack.c.b16 %v2557, %v2555
    %v3996 = vpack.c.b16 %v2558, %v2556
    %v3997 = vpack.c.b16 %v2561, %v2559
    %v3998 = vpack.c.b16 %v2562, %v2560
    %v3999 = vpack.c.b16 %v2565, %v2563
    %v4000 = vpack.c.b16 %v2566, %v2564
    %v4001 = vpack.c.b16 %v2569, %v2567
    %v4002 = vpack.c.b16 %v2570, %v2568
    %v4003 = vpack.c.b16 %v2573, %v2571
    %v4004 = vpack.c.b16 %v2574, %v2572
    %v4005 = vpack.c.b16 %v2577, %v2575
    %v4006 = vpack.c.b16 %v2578, %v2576
    %v4007 = vpack.c.b16 %v2581, %v2579
    %v4008 = vpack.c.b16 %v2582, %v2580
    %v4009 = vpack.c.b16 %v2585, %v2583
    %v4010 = vpack.c.b16 %v2586, %v2584
    %v4011 = vpack.c.b16 %v2589, %v2587
    %v4012 = vpack.c.b16 %v2590, %v2588
    %v4013 = vpack.c.b16 %v2593, %v2591
    %v4014 = vpack.c.b16 %v2594, %v2592
    %v4015 = vpack.c.b16 %v2597, %v2595
    %v4016 = vpack.c.b16 %v2598, %v2596
    %v4017 = vpack.c.b16 %v2601, %v2599
    %v4018 = vpack.c.b16 %v2602, %v2600
    %v4019 = vpack.c.b16 %v2605, %v2603
    %v4020 = vpack.c.b16 %v2606, %v2604
    %v4021 = vpack.c.b16 %v2609, %v2607
    %v4022 = vpack.c.b16 %v2610, %v2608
    %v4023 = vpack.c.b16 %v2613, %v2611
    %v4024 = vpack.c.b16 %v2614, %v2612
    %v4025 = vpack.c.b16 %v2617, %v2615
    %v4026 = vpack.c.b16 %v2618, %v2616
    %v4027 = vpack.c.b16 %v2621, %v2619
    %v4028 = vpack.c.b16 %v2622, %v2620
    %v4029 = vpack.c.b16 %v2625, %v2623
    %v4030 = vpack.c.b16 %v2626, %v2624
    %v4031 = vpack.c.b16 %v2629, %v2627
    %v4032 = vpack.c.b16 %v2630, %v2628
    %v4033 = vpack.c.b16 %v2633, %v2631
    %v4034 = vpack.c.b16 %v2634, %v2632
    %v4035 = vpack.c.b16 %v2637, %v2635
    %v4036 = vpack.c.b16 %v2638, %v2636
    %v4037 = vpack.c.b16 %v2641, %v2639
    %v4038 = vpack.c.b16 %v2642, %v2640
    %v4039 = vpack.c.b16 %v2645, %v2643
    %v4040 = vpack.c.b16 %v2646, %v2644
    %v4041 = vpack.c.b16 %v2649, %v2647
    %v4042 = vpack.c.b16 %v2650, %v2648
    %v4043 = vpack.c.b16 %v2653, %v2651
    %v4044 = vpack.c.b16 %v2654, %v2652
    %v4045 = vpack.c.b16 %v2657, %v2655
    %v4046 = vpack.c.b16 %v2658, %v2656
    %v4047 = vpack.c.b16 %v2661, %v2659
    %v4048 = vpack.c.b16 %v2662, %v2660
    %v4049 = vpack.c.b16 %v2665, %v2663
    %v4050 = vpack.c.b16 %v2666, %v2664
    %v4051 = vpack.c.b16 %v2669, %v2667
    %v4052 = vpack.c.b16 %v2670, %v2668
    %v4053 = vpack.c.b16 %v2673, %v2671
    %v4054 = vpack.c.b16 %v2674, %v2672
    %v4055 = vpack.c.b16 %v2677, %v2675
    %v4056 = vpack.c.b16 %v2678, %v2676
    %v4057 = vpack.c.b16 %v2681, %v2679
    %v4058 = vpack.c.b16 %v2682, %v2680
    %v4059 = vpack.c.b16 %v2685, %v2683
    %v4060 = vpack.c.b16 %v2686, %v2684
    %v4061 = vpack.c.b16 %v2689, %v2687
    %v4062 = vpack.c.b16 %v2690, %v2688
    %v4063 = vpack.c.b16 %v2693, %v2691
    %v4064 = vpack.c.b16 %v2694, %v2692
    %v4065 = vpack.c.b16 %v2697, %v2695
    %v4066 = vpack.c.b16 %v2698, %v2696
    %v4067 = vpack.c.b16 %v2701, %v2699
    %v4068 = vpack.c.b16 %v2702, %v2700
    %v4069 = vpack.c.b16 %v2705, %v2703
    %v4070 = vpack.c.b16 %v2706, %v2704
    %v4071 = vpack.c.b16 %v2709, %v2707
    %v4072 = vpack.c.b16 %v2710, %v2708
    %v4073 = vpack.c.b16 %v2713, %v2711
    %v4074 = vpack.c.b16 %v2714, %v2712
    %v4075 = vpack.c.b16 %v2717, %v2715
    %v4076 = vpack.c.b16 %v2718, %v2716
    %v4077 = vpack.c.b16 %v2721, %v2719
    %v4078 = vpack.c.b16 %v2722, %v2720
    %v4079 = vpack.c.b16 %v2725, %v2723
    %v4080 = vpack.c.b16 %v2726, %v2724
    %v4081 = vpack.c.b16 %v2729, %v2727
    %v4082 = vpack.c.b16 %v2730, %v2728
    %v4083 = vpack.c.b16 %v2733, %v2731
    %v4084 = vpack.c.b16 %v2734, %v2732
    %v4085 = vpack.c.b16 %v2737, %v2735
    %v4086 = vpack.c.b16 %v2738, %v2736
    %v4087 = vpack.c.b16 %v2741, %v2739
    %v4088 = vpack.c.b16 %v2742, %v2740
    %v4089 = vpack.c.b16 %v2745, %v2743
    %v4090 = vpack.c.b16 %v2746, %v2744
    %v4091 = vpack.c.b16 %v2749, %v2747
    %v4092 = vpack.c.b16 %v2750, %v2748
    %v4093 = vpack.c.b16 %v2753, %v2751
    %v4094 = vpack.c.b16 %v2754, %v2752
    %v4095 = vpack.c.b16 %v2757, %v2755
    %v4096 = vpack.c.b16 %v2758, %v2756
    %v4097 = vpack.c.b16 %v2761, %v2759
    %v4098 = vpack.c.b16 %v2762, %v2760
    %v4099 = vpack.c.b16 %v2765, %v2763
    %v4100 = vpack.c.b16 %v2766, %v2764
    %v4101 = vpack.c.b16 %v2769, %v2767
    %v4102 = vpack.c.b16 %v2770, %v2768
    %v4103 = vpack.c.b16 %v2773, %v2771
    %v4104 = vpack.c.b16 %v2774, %v2772
    %v4105 = vpack.c.b16 %v2777, %v2775
    %v4106 = vpack.c.b16 %v2778, %v2776
    %v4107 = vpack.c.b16 %v2781, %v2779
    %v4108 = vpack.c.b16 %v2782, %v2780
    %v4109 = vpack.c.b16 %v2785, %v2783
    %v4110 = vpack.c.b16 %v2786, %v2784
    %v4111 = vpack.c.b16 %v2789, %v2787
    %v4112 = vpack.c.b16 %v2790, %v2788
    %v4113 = vpack.c.b16 %v2793, %v2791
    %v4114 = vpack.c.b16 %v2794, %v2792
    %v4115 = vpack.c.b16 %v2797, %v2795
    %v4116 = vpack.c.b16 %v2798, %v2796
    %v4117 = vpack.c.b16 %v2801, %v2799
    %v4118 = vpack.c.b16 %v2802, %v2800
    %v4119 = vpack.c.b16 %v2805, %v2803
    %v4120 = vpack.c.b16 %v2806, %v2804
    %v4121 = vpack.c.b16 %v2809, %v2807
    %v4122 = vpack.c.b16 %v2810, %v2808
    %v4123 = vpack.c.b16 %v2813, %v2811
    %v4124 = vpack.c.b16 %v2814, %v2812
    %v4125 = vpack.c.b16 %v2817, %v2815
    %v4126 = vpack.c.b16 %v2818, %v2816
    %v4127 = vpack.c.b16 %v2821, %v2819
    %v4128 = vpack.c.b16 %v2822, %v2820
    %v4129 = vpack.c.b16 %v2825, %v2823
    %v4130 = vpack.c.b16 %v2826, %v2824
    %v4131 = vpack.c.b16 %v2829, %v2827
    %v4132 = vpack.c.b16 %v2830, %v2828
    %v4133 = vpack.c.b16 %v2833, %v2831
    %v4134 = vpack.c.b16 %v2834, %v2832
    %v4135 = vpack.c.b16 %v2837, %v2835
    %v4136 = vpack.c.b16 %v2838, %v2836
    %v4137 = vpack.c.b16 %v2841, %v2839
    %v4138 = vpack.c.b16 %v2842, %v2840
    %v4139 = vpack.c.b16 %v2845, %v2843
    %v4140 = vpack.c.b16 %v2846, %v2844
    %v4141 = vpack.c.b16 %v2849, %v2847
    %v4142 = vpack.c.b16 %v2850, %v2848
    %v4143 = vpack.c.b16 %v2853, %v2851
    %v4144 = vpack.c.b16 %v2854, %v2852
    %v4145 = vpack.c.b16 %v2857, %v2855
    %v4146 = vpack.c.b16 %v2858, %v2856
    %v4147 = vpack.c.b16 %v2861, %v2859
    %v4148 = vpack.c.b16 %v2862, %v2860
    %v4149 = vpack.c.b16 %v2865, %v2863
    %v4150 = vpack.c.b16 %v2866, %v2864
    %v4151 = vpack.c.b16 %v2869, %v2867
    %v4152 = vpack.c.b16 %v2870, %v2868
    %v4153 = vpack.c.b16 %v2873, %v2871
    %v4154 = vpack.c.b16 %v2874, %v2872
    %v4155 = vpack.c.b16 %v2877, %v2875
    %v4156 = vpack.c.b16 %v2878, %v2876
    %v4157 = vpack.c.b16 %v2881, %v2879
    %v4158 = vpack.c.b16 %v2882, %v2880
    %v4159 = vpack.c.b16 %v2885, %v2883
    %v4160 = vpack.c.b16 %v2886, %v2884
    %v4161 = vpack.c.b16 %v2889, %v2887
    %v4162 = vpack.c.b16 %v2890, %v2888
    %v4163 = vpack.c.b16 %v2893, %v2891
    %v4164 = vpack.c.b16 %v2894, %v2892
    %v4165 = vpack.c.b16 %v2897, %v2895
    %v4166 = vpack.c.b16 %v2898, %v2896
    %v4167 = vpack.c.b16 %v2901, %v2899
    %v4168 = vpack.c.b16 %v2902, %v2900
    %v4169 = vpack.c.b16 %v2905, %v2903
    %v4170 = vpack.c.b16 %v2906, %v2904
    %v4171 = vpack.c.b16 %v2909, %v2907
    %v4172 = vpack.c.b16 %v2910, %v2908
    %v4173 = vpack.c.b16 %v2913, %v2911
    %v4174 = vpack.c.b16 %v2914, %v2912
    %v4175 = vpack.c.b16 %v2917, %v2915
    %v4176 = vpack.c.b16 %v2918, %v2916
    %v4177 = vpack.c.b16 %v2921, %v2919
    %v4178 = vpack.c.b16 %v2922, %v2920
    %v4179 = vpack.c.b16 %v2925, %v2923
    %v4180 = vpack.c.b16 %v2926, %v2924
    %v4181 = vpack.c.b16 %v2929, %v2927
    %v4182 = vpack.c.b16 %v2930, %v2928
    %v4183 = vpack.c.b16 %v2933, %v2931
    %v4184 = vpack.c.b16 %v2934, %v2932
    %v4185 = vpack.c.b16 %v2937, %v2935
    %v4186 = vpack.c.b16 %v2938, %v2936
    %v4187 = vpack.c.b16 %v2941, %v2939
    %v4188 = vpack.c.b16 %v2942, %v2940
    %v4189 = vpack.c.b16 %v2945, %v2943
    %v4190 = vpack.c.b16 %v2946, %v2944
    %v4191 = vpack.c.b16 %v2949, %v2947
    %v4192 = vpack.c.b16 %v2950, %v2948
    %v4193 = vpack.c.b16 %v2953, %v2951
    %v4194 = vpack.c.b16 %v2954, %v2952
    %v4195 = vpack.c.b16 %v2957, %v2955
    %v4196 = vpack.c.b16 %v2958, %v2956
    %v4197 = vpack.c.b16 %v2961, %v2959
    %v4198 = vpack.c.b16 %v2962, %v2960
    %v4199 = vpack.c.b16 %v2965, %v2963
    %v4200 = vpack.c.b16 %v2966, %v2964
    %v4201 = vpack.c.b16 %v2969, %v2967
    %v4202 = vpack.c.b16 %v2970, %v2968
    %v4203 = vpack.c.b16 %v2973, %v2971
    %v4204 = vpack.c.b16 %v2974, %v2972
    %v4205 = vpack.c.b16 %v2977, %v2975
    %v4206 = vpack.c.b16 %v2978, %v2976
    %v4207 = vpack.c.b16 %v2981, %v2979
    %v4208 = vpack.c.b16 %v2982, %v2980
    %v4209 = vpack.c.b16 %v2985, %v2983
    %v4210 = vpack.c.b16 %v2986, %v2984
    %v4211 = vpack.c.b16 %v2989, %v2987
    %v4212 = vpack.c.b16 %v2990, %v2988
    %v4213 = vpack.c.b16 %v2993, %v2991
    %v4214 = vpack.c.b16 %v2994, %v2992
    %v4215 = vpack.c.b16 %v2997, %v2995
    %v4216 = vpack.c.b16 %v2998, %v2996
    %v4217 = vpack.c.b16 %v3001, %v2999
    %v4218 = vpack.c.b16 %v3002, %v3000
    %v4219 = vpack.c.b16 %v3005, %v3003
    %v4220 = vpack.c.b16 %v3006, %v3004
    %v4221 = vpack.c.b16 %v3009, %v3007
    %v4222 = vpack.c.b16 %v3010, %v3008
    %v4223 = vpack.c.b16 %v3013, %v3011
    %v4224 = vpack.c.b16 %v3014, %v3012
    %v4225 = vpack.c.b16 %v3017, %v3015
    %v4226 = vpack.c.b16 %v3018, %v3016
    %v4227 = vpack.c.b16 %v3021, %v3019
    %v4228 = vpack.c.b16 %v3022, %v3020
    %v4229 = vpack.c.b16 %v3025, %v3023
    %v4230 = vpack.c.b16 %v3026, %v3024
    %v4231 = vpack.c.b16 %v3029, %v3027
    %v4232 = vpack.c.b16 %v3030, %v3028
    %v4233 = vpack.c.b16 %v3033, %v3031
    %v4234 = vpack.c.b16 %v3034, %v3032
    %v4235 = vpack.c.b16 %v3037, %v3035
    %v4236 = vpack.c.b16 %v3038, %v3036
    %v4237 = vpack.c.b16 %v3041, %v3039
    %v4238 = vpack.c.b16 %v3042, %v3040
    %v4239 = vpack.c.b16 %v3045, %v3043
    %v4240 = vpack.c.b16 %v3046, %v3044
    %v4241 = vpack.c.b16 %v3049, %v3047
    %v4242 = vpack.c.b16 %v3050, %v3048
    %v4243 = vpack.c.b16 %v3053, %v3051
    %v4244 = vpack.c.b16 %v3054, %v3052
    %v4245 = vpack.c.b16 %v3057, %v3055
    %v4246 = vpack.c.b16 %v3058, %v3056
    %v4247 = vpack.c.b16 %v3061, %v3059
    %v4248 = vpack.c.b16 %v3062, %v3060
    %v4249 = vpack.c.b16 %v3065, %v3063
    %v4250 = vpack.c.b16 %v3066, %v3064
    %v4251 = vpack.c.b16 %v3069, %v3067
    %v4252 = vpack.c.b16 %v3070, %v3068
    %v4253 = vpack.c.b16 %v3073, %v3071
    %v4254 = vpack.c.b16 %v3074, %v3072
    %v4255 = vpack.c.b16 %v3077, %v3075
    %v4256 = vpack.c.b16 %v3078, %v3076
    %v4257 = vpack.c.b16 %v3081, %v3079
    %v4258 = vpack.c.b16 %v3082, %v3080
    %v4259 = vpack.c.b16 %v3085, %v3083
    %v4260 = vpack.c.b16 %v3086, %v3084
    %v4261 = vpack.c.b16 %v3089, %v3087
    %v4262 = vpack.c.b16 %v3090, %v3088
    %v4263 = vpack.c.b16 %v3093, %v3091
    %v4264 = vpack.c.b16 %v3094, %v3092
    %v4265 = vpack.c.b16 %v3097, %v3095
    %v4266 = vpack.c.b16 %v3098, %v3096
    %v4267 = vpack.c.b16 %v3101, %v3099
    %v4268 = vpack.c.b16 %v3102, %v3100
    %v4269 = vpack.c.b16 %v3105, %v3103
    %v4270 = vpack.c.b16 %v3106, %v3104
    %v4271 = vpack.c.b16 %v3109, %v3107
    %v4272 = vpack.c.b16 %v3110, %v3108
    %v4273 = vpack.c.b16 %v3113, %v3111
    %v4274 = vpack.c.b16 %v3114, %v3112
    %v4275 = vpack.c.b16 %v3117, %v3115
    %v4276 = vpack.c.b16 %v3118, %v3116
    %v4277 = vpack.c.b16 %v3121, %v3119
    %v4278 = vpack.c.b16 %v3122, %v3120
    %v4279 = vpack.c.b16 %v3125, %v3123
    %v4280 = vpack.c.b16 %v3126, %v3124
    %v4281 = vpack.c.b16 %v3129, %v3127
    %v4282 = vpack.c.b16 %v3130, %v3128
    %v4283 = vpack.c.b16 %v3133, %v3131
    %v4284 = vpack.c.b16 %v3134, %v3132
    %v4285 = vpack.c.b16 %v3137, %v3135
    %v4286 = vpack.c.b16 %v3138, %v3136
    %v4287 = vpack.c.b16 %v3141, %v3139
    %v4288 = vpack.c.b16 %v3142, %v3140
    %v4289 = vpack.c.b16 %v3145, %v3143
    %v4290 = vpack.c.b16 %v3146, %v3144
    %v4291 = vpack.c.b16 %v3149, %v3147
    %v4292 = vpack.c.b16 %v3150, %v3148
    %v4293 = vpack.c.b16 %v3153, %v3151
    %v4294 = vpack.c.b16 %v3154, %v3152
    %v4295 = vpack.c.b16 %v3157, %v3155
    %v4296 = vpack.c.b16 %v3158, %v3156
    %v4297 = vpack.c.b16 %v3161, %v3159
    %v4298 = vpack.c.b16 %v3162, %v3160
    %v4299 = vpack.c.b16 %v3165, %v3163
    %v4300 = vpack.c.b16 %v3166, %v3164
    %v4301 = vpack.c.b16 %v3169, %v3167
    %v4302 = vpack.c.b16 %v3170, %v3168
    %v4303 = vpack.c.b16 %v3173, %v3171
    %v4304 = vpack.c.b16 %v3174, %v3172
    %v4305 = vpack.c.b16 %v3177, %v3175
    %v4306 = vpack.c.b16 %v3178, %v3176
    %v4307 = vpack.c.b16 %v3181, %v3179
    %v4308 = vpack.c.b16 %v3182, %v3180
    %v4309 = vpack.c.b16 %v3185, %v3183
    %v4310 = vpack.c.b16 %v3186, %v3184
    %v4311 = vpack.c.b16 %v3189, %v3187
    %v4312 = vpack.c.b16 %v3190, %v3188
    %v4313 = vpack.c.b16 %v3193, %v3191
    %v4314 = vpack.c.b16 %v3194, %v3192
    %v4315 = vpack.c.b16 %v3197, %v3195
    %v4316 = vpack.c.b16 %v3198, %v3196
    %v4317 = vpack.c.b16 %v3201, %v3199
    %v4318 = vpack.c.b16 %v3202, %v3200
    %v4319 = vpack.c.b16 %v3205, %v3203
    %v4320 = vpack.c.b16 %v3206, %v3204
    %v4321 = vpack.c.b16 %v3209, %v3207
    %v4322 = vpack.c.b16 %v3210, %v3208
    %v4323 = vpack.c.b16 %v3213, %v3211
    %v4324 = vpack.c.b16 %v3214, %v3212
    %v4325 = vpack.c.b16 %v3217, %v3215
    %v4326 = vpack.c.b16 %v3218, %v3216
    %v4327 = vpack.c.b16 %v3221, %v3219
    %v4328 = vpack.c.b16 %v3222, %v3220
    %v4329 = vpack.c.b16 %v3225, %v3223
    %v4330 = vpack.c.b16 %v3226, %v3224
    %v4331 = vpack.c.b16 %v3229, %v3227
    %v4332 = vpack.c.b16 %v3230, %v3228
    %v4333 = vpack.c.b16 %v3233, %v3231
    %v4334 = vpack.c.b16 %v3234, %v3232
    %v4335 = vpack.c.b16 %v3237, %v3235
    %v4336 = vpack.c.b16 %v3238, %v3236
    %v4337 = vpack.c.b16 %v3241, %v3239
    %v4338 = vpack.c.b16 %v3242, %v3240
    %v4339 = vpack.c.b16 %v3245, %v3243
    %v4340 = vpack.c.b16 %v3246, %v3244
    %v4341 = vpack.c.b16 %v3249, %v3247
    %v4342 = vpack.c.b16 %v3250, %v3248
    %v4343 = vpack.c.b16 %v3253, %v3251
    %v4344 = vpack.c.b16 %v3254, %v3252
    %v4345 = vpack.c.b16 %v3257, %v3255
    %v4346 = vpack.c.b16 %v3258, %v3256
    %v4347 = vpack.c.b16 %v3261, %v3259
    %v4348 = vpack.c.b16 %v3262, %v3260
    %v4349 = vpack.c.b16 %v3265, %v3263
    %v4350 = vpack.c.b16 %v3266, %v3264
    %v4351 = vpack.c.b16 %v3269, %v3267
    %v4352 = vpack.c.b16 %v3270, %v3268
    %v4353 = vpack.c.b16 %v3273, %v3271
    %v4354 = vpack.c.b16 %v3274, %v3272
    %v4355 = vpack.c.b16 %v3277, %v3275
    %v4356 = vpack.c.b16 %v3278, %v3276
    %v4357 = vpack.c.b16 %v3281, %v3279
    %v4358 = vpack.c.b16 %v3282, %v3280
    %v4359 = vpack.c.b16 %v3285, %v3283
    %v4360 = vpack.c.b16 %v3286, %v3284
    %v4361 = vpack.c.b16 %v3289, %v3287
    %v4362 = vpack.c.b16 %v3290, %v3288
    %v4363 = vpack.c.b16 %v3293, %v3291
    %v4364 = vpack.c.b16 %v3294, %v3292
    %v4365 = vpack.c.b16 %v3297, %v3295
    %v4366 = vpack.c.b16 %v3298, %v3296
    %v4367 = vpack.c.b16 %v3301, %v3299
    %v4368 = vpack.c.b16 %v3302, %v3300
    %v4369 = vpack.c.b16 %v3305, %v3303
    %v4370 = vpack.c.b16 %v3306, %v3304
    %v4371 = vpack.c.b16 %v3309, %v3307
    %v4372 = vpack.c.b16 %v3310, %v3308
    %v4373 = vpack.c.b16 %v3313, %v3311
    %v4374 = vpack.c.b16 %v3314, %v3312
    %v4375 = vpack.c.b16 %v3317, %v3315
    %v4376 = vpack.c.b16 %v3318, %v3316
    %v4377 = vpack.c.b16 %v3321, %v3319
    %v4378 = vpack.c.b16 %v3322, %v3320
    %v4379 = vpack.c.b16 %v3325, %v3323
    %v4380 = vpack.c.b16 %v3326, %v3324
    %v4381 = vpack.c.b16 %v3329, %v3327
    %v4382 = vpack.c.b16 %v3330, %v3328
    %v4383 = vpack.c.b16 %v3333, %v3331
    %v4384 = vpack.c.b16 %v3334, %v3332
    %v4385 = vpack.c.b16 %v3337, %v3335
    %v4386 = vpack.c.b16 %v3338, %v3336
    %v4387 = vpack.c.b16 %v3341, %v3339
    %v4388 = vpack.c.b16 %v3342, %v3340
    %v4389 = vpack.c.b16 %v3345, %v3343
    %v4390 = vpack.c.b16 %v3346, %v3344
    %v4391 = vpack.c.b16 %v3349, %v3347
    %v4392 = vpack.c.b16 %v3350, %v3348
    %v4393 = vpack.c.b16 %v3353, %v3351
    %v4394 = vpack.c.b16 %v3354, %v3352
    %v4395 = vpack.c.b16 %v3357, %v3355
    %v4396 = vpack.c.b16 %v3358, %v3356
    %v4397 = vpack.c.b16 %v3361, %v3359
    %v4398 = vpack.c.b16 %v3362, %v3360
    %v4399 = vpack.c.b16 %v3365, %v3363
    %v4400 = vpack.c.b16 %v3366, %v3364
    %v4401 = vpack.c.b16 %v3369, %v3367
    %v4402 = vpack.c.b16 %v3370, %v3368
    %v4403 = vpack.c.b16 %v3373, %v3371
    %v4404 = vpack.c.b16 %v3374, %v3372
    %v4405 = vpack.c.b16 %v3377, %v3375
    %v4406 = vpack.c.b16 %v3378, %v3376
    %v4407 = vpack.c.b16 %v3381, %v3379
    %v4408 = vpack.c.b16 %v3382, %v3380
    %v4409 = vpack.c.b16 %v3385, %v3383
    %v4410 = vpack.c.b16 %v3386, %v3384
    %v4411 = vpack.c.b16 %v3389, %v3387
    %v4412 = vpack.c.b16 %v3390, %v3388
    %v4413 = vpack.c.b16 %v3393, %v3391
    %v4414 = vpack.c.b16 %v3394, %v3392
    %v4415 = vpack.c.b16 %v3397, %v3395
    %v4416 = vpack.c.b16 %v3398, %v3396
    %v4417 = vpack.c.b16 %v3401, %v3399
    %v4418 = vpack.c.b16 %v3402, %v3400
    %v4419 = vpack.c.b16 %v3405, %v3403
    %v4420 = vpack.c.b16 %v3406, %v3404
    %v4421 = vpack.c.b16 %v3409, %v3407
    %v4422 = vpack.c.b16 %v3410, %v3408
    %v4423 = vpack.c.b16 %v3413, %v3411
    %v4424 = vpack.c.b16 %v3414, %v3412
    %v4425 = vpack.c.b16 %v3417, %v3415
    %v4426 = vpack.c.b16 %v3418, %v3416
    %v4427 = vpack.c.b16 %v3421, %v3419
    %v4428 = vpack.c.b16 %v3422, %v3420
    %v4429 = vpack.c.b16 %v3425, %v3423
    %v4430 = vpack.c.b16 %v3426, %v3424
    %v4431 = vpack.c.b16 %v3429, %v3427
    %v4432 = vpack.c.b16 %v3430, %v3428
    %v4433 = vpack.c.b16 %v3433, %v3431
    %v4434 = vpack.c.b16 %v3434, %v3432
    %v4435 = vpack.c.b16 %v3437, %v3435
    %v4436 = vpack.c.b16 %v3438, %v3436
    %v4437 = vpack.c.b16 %v3441, %v3439
    %v4438 = vpack.c.b16 %v3442, %v3440
    %v4439 = vpack.c.b16 %v3445, %v3443
    %v4440 = vpack.c.b16 %v3446, %v3444
    %v4441 = vpack.c.b16 %v3449, %v3447
    %v4442 = vpack.c.b16 %v3450, %v3448
    %v4443 = vpack.c.b16 %v3453, %v3451
    %v4444 = vpack.c.b16 %v3454, %v3452
    %v4445 = vpack.c.b16 %v3457, %v3455
    %v4446 = vpack.c.b16 %v3458, %v3456
    %v4447 = vpack.c.b16 %v3461, %v3459
    %v4448 = vpack.c.b16 %v3462, %v3460
    %v4449 = vpack.c.b16 %v3465, %v3463
    %v4450 = vpack.c.b16 %v3466, %v3464
    %v4451 = vpack.c.b16 %v3469, %v3467
    %v4452 = vpack.c.b16 %v3470, %v3468
    %v4453 = vpack.c.b16 %v3473, %v3471
    %v4454 = vpack.c.b16 %v3474, %v3472
    %v4455 = vpack.c.b16 %v3477, %v3475
    %v4456 = vpack.c.b16 %v3478, %v3476
    %v4457 = vpack.c.b16 %v3481, %v3479
    %v4458 = vpack.c.b16 %v3482, %v3480
    %v4459 = vpack.c.b16 %v3485, %v3483
    %v4460 = vpack.c.b16 %v3486, %v3484
    %v4461 = vpack.c.b16 %v3489, %v3487
    %v4462 = vpack.c.b16 %v3490, %v3488
    %v4463 = vpack.c.b16 %v3493, %v3491
    %v4464 = vpack.c.b16 %v3494, %v3492
    %v4465 = vpack.c.b16 %v3497, %v3495
    %v4466 = vpack.c.b16 %v3498, %v3496
    %v4467 = vpack.c.b16 %v3501, %v3499
    %v4468 = vpack.c.b16 %v3502, %v3500
    %v4469 = vpack.c.b16 %v3505, %v3503
    %v4470 = vpack.c.b16 %v3506, %v3504
    %v4471 = vpack.c.b16 %v3509, %v3507
    %v4472 = vpack.c.b16 %v3510, %v3508
    %v4473 = vpack.c.b16 %v3513, %v3511
    %v4474 = vpack.c.b16 %v3514, %v3512
    %v4475 = vpack.c.b16 %v3517, %v3515
    %v4476 = vpack.c.b16 %v3518, %v3516
    %v4477 = vpack.c.b16 %v3521, %v3519
    %v4478 = vpack.c.b16 %v3522, %v3520
    %v4479 = vpack.c.b16 %v3525, %v3523
    %v4480 = vpack.c.b16 %v3526, %v3524
    %v4481 = vpack.c.b16 %v3529, %v3527
    %v4482 = vpack.c.b16 %v3530, %v3528
    %v4483 = vpack.c.b16 %v3533, %v3531
    %v4484 = vpack.c.b16 %v3534, %v3532
    %v4485 = vpack.c.b16 %v3537, %v3535
    %v4486 = vpack.c.b16 %v3538, %v3536
    %v4487 = vpack.c.b16 %v3541, %v3539
    %v4488 = vpack.c.b16 %v3542, %v3540
    %v4489 = vpack.c.b16 %v3545, %v3543
    %v4490 = vpack.c.b16 %v3546, %v3544
    %v4491 = vpack.c.b16 %v3549, %v3547
    %v4492 = vpack.c.b16 %v3550, %v3548
    %v4493 = vpack.c.b16 %v3553, %v3551
    %v4494 = vpack.c.b16 %v3554, %v3552
    %v4495 = vpack.c.b16 %v3557, %v3555
    %v4496 = vpack.c.b16 %v3558, %v3556
    %v4497 = vpack.c.b16 %v3561, %v3559
    %v4498 = vpack.c.b16 %v3562, %v3560
    %v4499 = vpack.c.b16 %v3565, %v3563
    %v4500 = vpack.c.b16 %v3566, %v3564
    %v4501 = vpack.c.b16 %v3569, %v3567
    %v4502 = vpack.c.b16 %v3570, %v3568
    %v4503 = vpack.c.b16 %v3573, %v3571
    %v4504 = vpack.c.b16 %v3574, %v3572
    %v4505 = vpack.c.b16 %v3577, %v3575
    %v4506 = vpack.c.b16 %v3578, %v3576
    %v4507 = vpack.c.b16 %v3581, %v3579
    %v4508 = vpack.c.b16 %v3582, %v3580
    %v4509 = vpack.c.b16 %v3585, %v3583
    %v4510 = vpack.c.b16 %v3586, %v3584
    %v4511 = vpack.c.b16 %v3589, %v3587
    %v4512 = vpack.c.b16 %v3590, %v3588
    %v4513 = vpack.c.b16 %v3593, %v3591
    %v4514 = vpack.c.b16 %v3594, %v3592
    %v4515 = vpack.c.b16 %v3597, %v3595
    %v4516 = vpack.c.b16 %v3598, %v3596
    %v4517 = vpack.c.b16 %v3601, %v3599
    %v4518 = vpack.c.b16 %v3602, %v3600
    %v4519 = vpack.c.b16 %v3605, %v3603
    %v4520 = vpack.c.b16 %v3606, %v3604
    %v4521 = vpack.c.b16 %v3609, %v3607
    %v4522 = vpack.c.b16 %v3610, %v3608
    %v4523 = vpack.c.b16 %v3613, %v3611
    %v4524 = vpack.c.b16 %v3614, %v3612
    %v4525 = vpack.c.b16 %v3617, %v3615
    %v4526 = vpack.c.b16 %v3618, %v3616
    %v4527 = vpack.c.b16 %v3621, %v3619
    %v4528 = vpack.c.b16 %v3622, %v3620
    %v4529 = vpack.c.b16 %v3625, %v3623
    %v4530 = vpack.c.b16 %v3626, %v3624
    %v4531 = vpack.c.b16 %v3629, %v3627
    %v4532 = vpack.c.b16 %v3630, %v3628
    %v4533 = vpack.c.b16 %v3633, %v3631
    %v4534 = vpack.c.b16 %v3634, %v3632
    %v4535 = vpack.c.b16 %v3637, %v3635
    %v4536 = vpack.c.b16 %v3638, %v3636
    %v4537 = vpack.c.b16 %v3641, %v3639
    %v4538 = vpack.c.b16 %v3642, %v3640
    %v4539 = vpack.c.b16 %v3645, %v3643
    %v4540 = vpack.c.b16 %v3646, %v3644
    %v4541 = vpack.c.b16 %v3649, %v3647
    %v4542 = vpack.c.b16 %v3650, %v3648
    %v4543 = vpack.c.b16 %v3653, %v3651
    %v4544 = vpack.c.b16 %v3654, %v3652
    %v4545 = vpack.c.b16 %v3657, %v3655
    %v4546 = vpack.c.b16 %v3658, %v3656
    %v4547 = vpack.c.b16 %v3661, %v3659
    %v4548 = vpack.c.b16 %v3662, %v3660
    %v4549 = vpack.c.b16 %v3665, %v3663
    %v4550 = vpack.c.b16 %v3666, %v3664
    %v4551 = vpack.c.b16 %v3669, %v3667
    %v4552 = vpack.c.b16 %v3670, %v3668
    %v4553 = vpack.c.b16 %v3673, %v3671
    %v4554 = vpack.c.b16 %v3674, %v3672
    %v4555 = vpack.c.b16 %v3677, %v3675
    %v4556 = vpack.c.b16 %v3678, %v3676
    %v4557 = vpack.c.b16 %v3681, %v3679
    %v4558 = vpack.c.b16 %v3682, %v3680
    %v4559 = vpack.c.b16 %v3685, %v3683
    %v4560 = vpack.c.b16 %v3686, %v3684
    %v4561 = vpack.c.b16 %v3689, %v3687
    %v4562 = vpack.c.b16 %v3690, %v3688
    %v4563 = vpack.c.b16 %v3693, %v3691
    %v4564 = vpack.c.b16 %v3694, %v3692
    %v4565 = vpack.c.b16 %v3697, %v3695
    %v4566 = vpack.c.b16 %v3698, %v3696
    %v4567 = vpack.c.b16 %v3701, %v3699
    %v4568 = vpack.c.b16 %v3702, %v3700
    %v4569 = vpack.c.b16 %v3705, %v3703
    %v4570 = vpack.c.b16 %v3706, %v3704
    %v4571 = vpack.c.b16 %v3709, %v3707
    %v4572 = vpack.c.b16 %v3710, %v3708
    %v4573 = vpack.c.b16 %v3713, %v3711
    %v4574 = vpack.c.b16 %v3714, %v3712
    %v4575 = vpack.c.b16 %v3717, %v3715
    %v4576 = vpack.c.b16 %v3718, %v3716
    %v4577 = vpack.c.b16 %v3721, %v3719
    %v4578 = vpack.c.b16 %v3722, %v3720
    %v4579 = vpack.c.b16 %v3725, %v3723
    %v4580 = vpack.c.b16 %v3726, %v3724
    %v4581 = vpack.c.b16 %v3729, %v3727
    %v4582 = vpack.c.b16 %v3730, %v3728
    %v4583 = vpack.c.b16 %v3733, %v3731
    %v4584 = vpack.c.b16 %v3734, %v3732
    %v4585 = vpack.c.b16 %v3737, %v3735
    %v4586 = vpack.c.b16 %v3738, %v3736
    %v4587 = vpack.c.b16 %v3741, %v3739
    %v4588 = vpack.c.b16 %v3742, %v3740
    %v4589 = vpack.c.b16 %v3745, %v3743
    %v4590 = vpack.c.b16 %v3746, %v3744
    %v4591 = vpack.c.b16 %v3749, %v3747
    %v4592 = vpack.c.b16 %v3750, %v3748
    %v4593 = vpack.c.b16 %v3753, %v3751
    %v4594 = vpack.c.b16 %v3754, %v3752
    %v4595 = vpack.c.b16 %v3757, %v3755
    %v4596 = vpack.c.b16 %v3758, %v3756
    %v4597 = vpack.c.b16 %v3761, %v3759
    %v4598 = vpack.c.b16 %v3762, %v3760
    %v4599 = vpack.c.b16 %v3765, %v3763
    %v4600 = vpack.c.b16 %v3766, %v3764
    %v4601 = vpack.c.b16 %v3769, %v3767
    %v4602 = vpack.c.b16 %v3770, %v3768
    %v4603 = vpack.c.b16 %v3773, %v3771
    %v4604 = vpack.c.b16 %v3774, %v3772
    %v4605 = vpack.c.b16 %v3777, %v3775
    %v4606 = vpack.c.b16 %v3778, %v3776
    %v4607 = vpack.c.b16 %v3781, %v3779
    %v4608 = vpack.c.b16 %v3782, %v3780
    %v4609 = vpack.c.b16 %v3785, %v3783
    %v4610 = vpack.c.b16 %v3786, %v3784
    %v4611 = vpack.c.b16 %v3789, %v3787
    %v4612 = vpack.c.b16 %v3790, %v3788
    %v4613 = vpack.c.b16 %v3793, %v3791
    %v4614 = vpack.c.b16 %v3794, %v3792
    %v4615 = vpack.c.b16 %v3797, %v3795
    %v4616 = vpack.c.b16 %v3798, %v3796
    %v4617 = vpack.c.b16 %v3801, %v3799
    %v4618 = vpack.c.b16 %v3802, %v3800
    %v4619 = vpack.c.b16 %v3805, %v3803
    %v4620 = vpack.c.b16 %v3806, %v3804
    %v4621 = vpack.c.b16 %v3809, %v3807
    %v4622 = vpack.c.b16 %v3810, %v3808
    %v4623 = vpack.c.b16 %v3813, %v3811
    %v4624 = vpack.c.b16 %v3814, %v3812
    %v4625 = vpack.c.b16 %v3817, %v3815
    %v4626 = vpack.c.b16 %v3818, %v3816
    %v4627 = vpack.c.b16 %v3821, %v3819
    %v4628 = vpack.c.b16 %v3822, %v3820
    %v4629 = vpack.c.b16 %v3825, %v3823
    %v4630 = vpack.c.b16 %v3826, %v3824
    %v4631 = vpack.c.b16 %v3829, %v3827
    %v4632 = vpack.c.b16 %v3830, %v3828
    %v4633 = vpack.c.b16 %v3833, %v3831
    %v4634 = vpack.c.b16 %v3834, %v3832
    %5435 = vmatpush.bf16.msra.mxu0 %v3849
    %5436 = vmatpush.bf16.msra.mxu0 %v3847
    %5437 = vmatpush.bf16.msra.mxu0 %v3845
    %5438 = vmatpush.bf16.msra.mxu0 %v3843
    %5439 = vmatpush.bf16.msra.mxu0 %v3841
    %5440 = vmatpush.bf16.msra.mxu0 %v3839
    %5441 = vmatpush.bf16.msra.mxu0 %v3837
    %5442 = vmatpush.bf16.msra.mxu0 %v3835
    %5443 = vmatmul.bf16.gmra.mxu0 %v529
    %v5444 = vpop.f32.mrf.mxu0
    %v5445 = vadd.f32 %v1431, %v5444
    %v5446 = vpop.f32.mrf.mxu0
    %v5447 = vadd.f32 %v1431, %v5446
    %5448 = vmatmul.bf16.gmra.mxu0 %v579
    %v5449 = vpop.f32.mrf.mxu0
    %v5450 = vadd.f32 %v1431, %v5449
    %v5451 = vpop.f32.mrf.mxu0
    %v5452 = vadd.f32 %v1431, %v5451
    %5453 = vdwg.mxu0
    %5454 = vmatpush.bf16.msra.mxu0 %v3865
    %5455 = vmatpush.bf16.msra.mxu0 %v3863
    %5456 = vmatpush.bf16.msra.mxu0 %v3861
    %5457 = vmatpush.bf16.msra.mxu0 %v3859
    %5458 = vmatpush.bf16.msra.mxu0 %v3857
    %5459 = vmatpush.bf16.msra.mxu0 %v3855
    %5460 = vmatpush.bf16.msra.mxu0 %v3853
    %5461 = vmatpush.bf16.msra.mxu0 %v3851
    %5462 = vmatmul.bf16.gmra.mxu0 %v530
    %v5463 = vpop.f32.mrf.mxu0
    %v5464 = vadd.f32 %v5445, %v5463
    %v5465 = vpop.f32.mrf.mxu0
    %v5466 = vadd.f32 %v5447, %v5465
    %5467 = vmatmul.bf16.gmra.mxu0 %v580
    %v5468 = vpop.f32.mrf.mxu0
    %v5469 = vadd.f32 %v5450, %v5468
    %v5470 = vpop.f32.mrf.mxu0
    %v5471 = vadd.f32 %v5452, %v5470
    %5472 = vdwg.mxu0
    %5473 = vmatpush.bf16.msra.mxu0 %v3881
    %5474 = vmatpush.bf16.msra.mxu0 %v3879
    %5475 = vmatpush.bf16.msra.mxu0 %v3877
    %5476 = vmatpush.bf16.msra.mxu0 %v3875
    %5477 = vmatpush.bf16.msra.mxu0 %v3873
    %5478 = vmatpush.bf16.msra.mxu0 %v3871
    %5479 = vmatpush.bf16.msra.mxu0 %v3869
    %5480 = vmatpush.bf16.msra.mxu0 %v3867
    %5481 = vmatmul.bf16.gmra.mxu0 %v531
    %v5482 = vpop.f32.mrf.mxu0
    %v5483 = vadd.f32 %v5464, %v5482
    %v5484 = vpop.f32.mrf.mxu0
    %v5485 = vadd.f32 %v5466, %v5484
    %5486 = vmatmul.bf16.gmra.mxu0 %v581
    %v5487 = vpop.f32.mrf.mxu0
    %v5488 = vadd.f32 %v5469, %v5487
    %v5489 = vpop.f32.mrf.mxu0
    %v5490 = vadd.f32 %v5471, %v5489
    %5491 = vdwg.mxu0
    %5492 = vmatpush.bf16.msra.mxu0 %v3897
    %5493 = vmatpush.bf16.msra.mxu0 %v3895
    %5494 = vmatpush.bf16.msra.mxu0 %v3893
    %5495 = vmatpush.bf16.msra.mxu0 %v3891
    %5496 = vmatpush.bf16.msra.mxu0 %v3889
    %5497 = vmatpush.bf16.msra.mxu0 %v3887
    %5498 = vmatpush.bf16.msra.mxu0 %v3885
    %5499 = vmatpush.bf16.msra.mxu0 %v3883
    %5500 = vmatmul.bf16.gmra.mxu0 %v532
    %v5501 = vpop.f32.mrf.mxu0
    %v5502 = vadd.f32 %v5483, %v5501
    %v5503 = vpop.f32.mrf.mxu0
    %v5504 = vadd.f32 %v5485, %v5503
    %5505 = vmatmul.bf16.gmra.mxu0 %v582
    %v5506 = vpop.f32.mrf.mxu0
    %v5507 = vadd.f32 %v5488, %v5506
    %v5508 = vpop.f32.mrf.mxu0
    %v5509 = vadd.f32 %v5490, %v5508
    %5510 = vdwg.mxu0
    %5511 = vmatpush.bf16.msra.mxu0 %v3913
    %5512 = vmatpush.bf16.msra.mxu0 %v3911
    %5513 = vmatpush.bf16.msra.mxu0 %v3909
    %5514 = vmatpush.bf16.msra.mxu0 %v3907
    %5515 = vmatpush.bf16.msra.mxu0 %v3905
    %5516 = vmatpush.bf16.msra.mxu0 %v3903
    %5517 = vmatpush.bf16.msra.mxu0 %v3901
    %5518 = vmatpush.bf16.msra.mxu0 %v3899
    %5519 = vmatmul.bf16.gmra.mxu0 %v533
    %v5520 = vpop.f32.mrf.mxu0
    %v5521 = vadd.f32 %v5502, %v5520
    %v5522 = vpop.f32.mrf.mxu0
    %v5523 = vadd.f32 %v5504, %v5522
    %5524 = vmatmul.bf16.gmra.mxu0 %v583
    %v5525 = vpop.f32.mrf.mxu0
    %v5526 = vadd.f32 %v5507, %v5525
    %v5527 = vpop.f32.mrf.mxu0
    %v5528 = vadd.f32 %v5509, %v5527
    %5529 = vdwg.mxu0
    %5530 = vmatpush.bf16.msra.mxu0 %v3929
    %5531 = vmatpush.bf16.msra.mxu0 %v3927
    %5532 = vmatpush.bf16.msra.mxu0 %v3925
    %5533 = vmatpush.bf16.msra.mxu0 %v3923
    %5534 = vmatpush.bf16.msra.mxu0 %v3921
    %5535 = vmatpush.bf16.msra.mxu0 %v3919
    %5536 = vmatpush.bf16.msra.mxu0 %v3917
    %5537 = vmatpush.bf16.msra.mxu0 %v3915
    %5538 = vmatmul.bf16.gmra.mxu0 %v534
    %v5539 = vpop.f32.mrf.mxu0
    %v5540 = vadd.f32 %v5521, %v5539
    %v5541 = vpop.f32.mrf.mxu0
    %v5542 = vadd.f32 %v5523, %v5541
    %5543 = vmatmul.bf16.gmra.mxu0 %v584
    %v5544 = vpop.f32.mrf.mxu0
    %v5545 = vadd.f32 %v5526, %v5544
    %v5546 = vpop.f32.mrf.mxu0
    %v5547 = vadd.f32 %v5528, %v5546
    %5548 = vdwg.mxu0
    %5549 = vmatpush.bf16.msra.mxu0 %v3945
    %5550 = vmatpush.bf16.msra.mxu0 %v3943
    %5551 = vmatpush.bf16.msra.mxu0 %v3941
    %5552 = vmatpush.bf16.msra.mxu0 %v3939
    %5553 = vmatpush.bf16.msra.mxu0 %v3937
    %5554 = vmatpush.bf16.msra.mxu0 %v3935
    %5555 = vmatpush.bf16.msra.mxu0 %v3933
    %5556 = vmatpush.bf16.msra.mxu0 %v3931
    %5557 = vmatmul.bf16.gmra.mxu0 %v535
    %v5558 = vpop.f32.mrf.mxu0
    %v5559 = vadd.f32 %v5540, %v5558
    %v5560 = vpop.f32.mrf.mxu0
    %v5561 = vadd.f32 %v5542, %v5560
    %5562 = vmatmul.bf16.gmra.mxu0 %v585
    %v5563 = vpop.f32.mrf.mxu0
    %v5564 = vadd.f32 %v5545, %v5563
    %v5565 = vpop.f32.mrf.mxu0
    %v5566 = vadd.f32 %v5547, %v5565
    %5567 = vdwg.mxu0
    %5568 = vmatpush.bf16.msra.mxu0 %v3961
    %5569 = vmatpush.bf16.msra.mxu0 %v3959
    %5570 = vmatpush.bf16.msra.mxu0 %v3957
    %5571 = vmatpush.bf16.msra.mxu0 %v3955
    %5572 = vmatpush.bf16.msra.mxu0 %v3953
    %5573 = vmatpush.bf16.msra.mxu0 %v3951
    %5574 = vmatpush.bf16.msra.mxu0 %v3949
    %5575 = vmatpush.bf16.msra.mxu0 %v3947
    %5576 = vmatmul.bf16.gmra.mxu0 %v536
    %v5577 = vpop.f32.mrf.mxu0
    %v5578 = vadd.f32 %v5559, %v5577
    %v5579 = vpop.f32.mrf.mxu0
    %v5580 = vadd.f32 %v5561, %v5579
    %5581 = vmatmul.bf16.gmra.mxu0 %v586
    %v5582 = vpop.f32.mrf.mxu0
    %v5583 = vadd.f32 %v5564, %v5582
    %v5584 = vpop.f32.mrf.mxu0
    %v5585 = vadd.f32 %v5566, %v5584
    %5586 = vdwg.mxu0
    %5587 = vmatpush.bf16.msra.mxu0 %v3977
    %5588 = vmatpush.bf16.msra.mxu0 %v3975
    %5589 = vmatpush.bf16.msra.mxu0 %v3973
    %5590 = vmatpush.bf16.msra.mxu0 %v3971
    %5591 = vmatpush.bf16.msra.mxu0 %v3969
    %5592 = vmatpush.bf16.msra.mxu0 %v3967
    %5593 = vmatpush.bf16.msra.mxu0 %v3965
    %5594 = vmatpush.bf16.msra.mxu0 %v3963
    %5595 = vmatmul.bf16.gmra.mxu0 %v537
    %v5596 = vpop.f32.mrf.mxu0
    %v5597 = vadd.f32 %v5578, %v5596
    %v5598 = vpop.f32.mrf.mxu0
    %v5599 = vadd.f32 %v5580, %v5598
    %5600 = vmatmul.bf16.gmra.mxu0 %v587
    %v5601 = vpop.f32.mrf.mxu0
    %v5602 = vadd.f32 %v5583, %v5601
    %v5603 = vpop.f32.mrf.mxu0
    %v5604 = vadd.f32 %v5585, %v5603
    %5605 = vdwg.mxu0
    %5606 = vmatpush.bf16.msra.mxu0 %v3993
    %5607 = vmatpush.bf16.msra.mxu0 %v3991
    %5608 = vmatpush.bf16.msra.mxu0 %v3989
    %5609 = vmatpush.bf16.msra.mxu0 %v3987
    %5610 = vmatpush.bf16.msra.mxu0 %v3985
    %5611 = vmatpush.bf16.msra.mxu0 %v3983
    %5612 = vmatpush.bf16.msra.mxu0 %v3981
    %5613 = vmatpush.bf16.msra.mxu0 %v3979
    %5614 = vmatmul.bf16.gmra.mxu0 %v538
    %v5615 = vpop.f32.mrf.mxu0
    %v5616 = vadd.f32 %v5597, %v5615
    %v5617 = vpop.f32.mrf.mxu0
    %v5618 = vadd.f32 %v5599, %v5617
    %5619 = vmatmul.bf16.gmra.mxu0 %v588
    %v5620 = vpop.f32.mrf.mxu0
    %v5621 = vadd.f32 %v5602, %v5620
    %v5622 = vpop.f32.mrf.mxu0
    %v5623 = vadd.f32 %v5604, %v5622
    %5624 = vdwg.mxu0
    %5625 = vmatpush.bf16.msra.mxu0 %v4009
    %5626 = vmatpush.bf16.msra.mxu0 %v4007
    %5627 = vmatpush.bf16.msra.mxu0 %v4005
    %5628 = vmatpush.bf16.msra.mxu0 %v4003
    %5629 = vmatpush.bf16.msra.mxu0 %v4001
    %5630 = vmatpush.bf16.msra.mxu0 %v3999
    %5631 = vmatpush.bf16.msra.mxu0 %v3997
    %5632 = vmatpush.bf16.msra.mxu0 %v3995
    %5633 = vmatmul.bf16.gmra.mxu0 %v539
    %v5634 = vpop.f32.mrf.mxu0
    %v5635 = vadd.f32 %v5616, %v5634
    %v5636 = vpop.f32.mrf.mxu0
    %v5637 = vadd.f32 %v5618, %v5636
    %5638 = vmatmul.bf16.gmra.mxu0 %v589
    %v5639 = vpop.f32.mrf.mxu0
    %v5640 = vadd.f32 %v5621, %v5639
    %v5641 = vpop.f32.mrf.mxu0
    %v5642 = vadd.f32 %v5623, %v5641
    %5643 = vdwg.mxu0
    %5644 = vmatpush.bf16.msra.mxu0 %v4025
    %5645 = vmatpush.bf16.msra.mxu0 %v4023
    %5646 = vmatpush.bf16.msra.mxu0 %v4021
    %5647 = vmatpush.bf16.msra.mxu0 %v4019
    %5648 = vmatpush.bf16.msra.mxu0 %v4017
    %5649 = vmatpush.bf16.msra.mxu0 %v4015
    %5650 = vmatpush.bf16.msra.mxu0 %v4013
    %5651 = vmatpush.bf16.msra.mxu0 %v4011
    %5652 = vmatmul.bf16.gmra.mxu0 %v540
    %v5653 = vpop.f32.mrf.mxu0
    %v5654 = vadd.f32 %v5635, %v5653
    %v5655 = vpop.f32.mrf.mxu0
    %v5656 = vadd.f32 %v5637, %v5655
    %5657 = vmatmul.bf16.gmra.mxu0 %v590
    %v5658 = vpop.f32.mrf.mxu0
    %v5659 = vadd.f32 %v5640, %v5658
    %v5660 = vpop.f32.mrf.mxu0
    %v5661 = vadd.f32 %v5642, %v5660
    %5662 = vdwg.mxu0
    %5663 = vmatpush.bf16.msra.mxu0 %v4041
    %5664 = vmatpush.bf16.msra.mxu0 %v4039
    %5665 = vmatpush.bf16.msra.mxu0 %v4037
    %5666 = vmatpush.bf16.msra.mxu0 %v4035
    %5667 = vmatpush.bf16.msra.mxu0 %v4033
    %5668 = vmatpush.bf16.msra.mxu0 %v4031
    %5669 = vmatpush.bf16.msra.mxu0 %v4029
    %5670 = vmatpush.bf16.msra.mxu0 %v4027
    %5671 = vmatmul.bf16.gmra.mxu0 %v541
    %v5672 = vpop.f32.mrf.mxu0
    %v5673 = vadd.f32 %v5654, %v5672
    %v5674 = vpop.f32.mrf.mxu0
    %v5675 = vadd.f32 %v5656, %v5674
    %5676 = vmatmul.bf16.gmra.mxu0 %v591
    %v5677 = vpop.f32.mrf.mxu0
    %v5678 = vadd.f32 %v5659, %v5677
    %v5679 = vpop.f32.mrf.mxu0
    %v5680 = vadd.f32 %v5661, %v5679
    %5681 = vdwg.mxu0
    %5682 = vmatpush.bf16.msra.mxu0 %v4057
    %5683 = vmatpush.bf16.msra.mxu0 %v4055
    %5684 = vmatpush.bf16.msra.mxu0 %v4053
    %5685 = vmatpush.bf16.msra.mxu0 %v4051
    %5686 = vmatpush.bf16.msra.mxu0 %v4049
    %5687 = vmatpush.bf16.msra.mxu0 %v4047
    %5688 = vmatpush.bf16.msra.mxu0 %v4045
    %5689 = vmatpush.bf16.msra.mxu0 %v4043
    %5690 = vmatmul.bf16.gmra.mxu0 %v542
    %v5691 = vpop.f32.mrf.mxu0
    %v5692 = vadd.f32 %v5673, %v5691
    %v5693 = vpop.f32.mrf.mxu0
    %v5694 = vadd.f32 %v5675, %v5693
    %5695 = vmatmul.bf16.gmra.mxu0 %v592
    %v5696 = vpop.f32.mrf.mxu0
    %v5697 = vadd.f32 %v5678, %v5696
    %v5698 = vpop.f32.mrf.mxu0
    %v5699 = vadd.f32 %v5680, %v5698
    %5700 = vdwg.mxu0
    %5701 = vmatpush.bf16.msra.mxu0 %v4073
    %5702 = vmatpush.bf16.msra.mxu0 %v4071
    %5703 = vmatpush.bf16.msra.mxu0 %v4069
    %5704 = vmatpush.bf16.msra.mxu0 %v4067
    %5705 = vmatpush.bf16.msra.mxu0 %v4065
    %5706 = vmatpush.bf16.msra.mxu0 %v4063
    %5707 = vmatpush.bf16.msra.mxu0 %v4061
    %5708 = vmatpush.bf16.msra.mxu0 %v4059
    %5709 = vmatmul.bf16.gmra.mxu0 %v543
    %v5710 = vpop.f32.mrf.mxu0
    %v5711 = vadd.f32 %v5692, %v5710
    %v5712 = vpop.f32.mrf.mxu0
    %v5713 = vadd.f32 %v5694, %v5712
    %5714 = vmatmul.bf16.gmra.mxu0 %v593
    %v5715 = vpop.f32.mrf.mxu0
    %v5716 = vadd.f32 %v5697, %v5715
    %v5717 = vpop.f32.mrf.mxu0
    %v5718 = vadd.f32 %v5699, %v5717
    %5719 = vdwg.mxu0
    %5720 = vmatpush.bf16.msra.mxu0 %v4089
    %5721 = vmatpush.bf16.msra.mxu0 %v4087
    %5722 = vmatpush.bf16.msra.mxu0 %v4085
    %5723 = vmatpush.bf16.msra.mxu0 %v4083
    %5724 = vmatpush.bf16.msra.mxu0 %v4081
    %5725 = vmatpush.bf16.msra.mxu0 %v4079
    %5726 = vmatpush.bf16.msra.mxu0 %v4077
    %5727 = vmatpush.bf16.msra.mxu0 %v4075
    %5728 = vmatmul.bf16.gmra.mxu0 %v544
    %v5729 = vpop.f32.mrf.mxu0
    %v5730 = vadd.f32 %v5711, %v5729
    %v5731 = vpop.f32.mrf.mxu0
    %v5732 = vadd.f32 %v5713, %v5731
    %5733 = vmatmul.bf16.gmra.mxu0 %v594
    %v5734 = vpop.f32.mrf.mxu0
    %v5735 = vadd.f32 %v5716, %v5734
    %v5736 = vpop.f32.mrf.mxu0
    %v5737 = vadd.f32 %v5718, %v5736
    %5738 = vdwg.mxu0
    %5739 = vmatpush.bf16.msra.mxu0 %v4105
    %5740 = vmatpush.bf16.msra.mxu0 %v4103
    %5741 = vmatpush.bf16.msra.mxu0 %v4101
    %5742 = vmatpush.bf16.msra.mxu0 %v4099
    %5743 = vmatpush.bf16.msra.mxu0 %v4097
    %5744 = vmatpush.bf16.msra.mxu0 %v4095
    %5745 = vmatpush.bf16.msra.mxu0 %v4093
    %5746 = vmatpush.bf16.msra.mxu0 %v4091
    %5747 = vmatmul.bf16.gmra.mxu0 %v545
    %v5748 = vpop.f32.mrf.mxu0
    %v5749 = vadd.f32 %v5730, %v5748
    %v5750 = vpop.f32.mrf.mxu0
    %v5751 = vadd.f32 %v5732, %v5750
    %5752 = vmatmul.bf16.gmra.mxu0 %v595
    %v5753 = vpop.f32.mrf.mxu0
    %v5754 = vadd.f32 %v5735, %v5753
    %v5755 = vpop.f32.mrf.mxu0
    %v5756 = vadd.f32 %v5737, %v5755
    %5757 = vdwg.mxu0
    %5758 = vmatpush.bf16.msra.mxu0 %v4121
    %5759 = vmatpush.bf16.msra.mxu0 %v4119
    %5760 = vmatpush.bf16.msra.mxu0 %v4117
    %5761 = vmatpush.bf16.msra.mxu0 %v4115
    %5762 = vmatpush.bf16.msra.mxu0 %v4113
    %5763 = vmatpush.bf16.msra.mxu0 %v4111
    %5764 = vmatpush.bf16.msra.mxu0 %v4109
    %5765 = vmatpush.bf16.msra.mxu0 %v4107
    %5766 = vmatmul.bf16.gmra.mxu0 %v546
    %v5767 = vpop.f32.mrf.mxu0
    %v5768 = vadd.f32 %v5749, %v5767
    %v5769 = vpop.f32.mrf.mxu0
    %v5770 = vadd.f32 %v5751, %v5769
    %5771 = vmatmul.bf16.gmra.mxu0 %v596
    %v5772 = vpop.f32.mrf.mxu0
    %v5773 = vadd.f32 %v5754, %v5772
    %v5774 = vpop.f32.mrf.mxu0
    %v5775 = vadd.f32 %v5756, %v5774
    %5776 = vdwg.mxu0
    %5777 = vmatpush.bf16.msra.mxu0 %v4137
    %5778 = vmatpush.bf16.msra.mxu0 %v4135
    %5779 = vmatpush.bf16.msra.mxu0 %v4133
    %5780 = vmatpush.bf16.msra.mxu0 %v4131
    %5781 = vmatpush.bf16.msra.mxu0 %v4129
    %5782 = vmatpush.bf16.msra.mxu0 %v4127
    %5783 = vmatpush.bf16.msra.mxu0 %v4125
    %5784 = vmatpush.bf16.msra.mxu0 %v4123
    %5785 = vmatmul.bf16.gmra.mxu0 %v547
    %v5786 = vpop.f32.mrf.mxu0
    %v5787 = vadd.f32 %v5768, %v5786
    %v5788 = vpop.f32.mrf.mxu0
    %v5789 = vadd.f32 %v5770, %v5788
    %5790 = vmatmul.bf16.gmra.mxu0 %v597
    %v5791 = vpop.f32.mrf.mxu0
    %v5792 = vadd.f32 %v5773, %v5791
    %v5793 = vpop.f32.mrf.mxu0
    %v5794 = vadd.f32 %v5775, %v5793
    %5795 = vdwg.mxu0
    %5796 = vmatpush.bf16.msra.mxu0 %v4153
    %5797 = vmatpush.bf16.msra.mxu0 %v4151
    %5798 = vmatpush.bf16.msra.mxu0 %v4149
    %5799 = vmatpush.bf16.msra.mxu0 %v4147
    %5800 = vmatpush.bf16.msra.mxu0 %v4145
    %5801 = vmatpush.bf16.msra.mxu0 %v4143
    %5802 = vmatpush.bf16.msra.mxu0 %v4141
    %5803 = vmatpush.bf16.msra.mxu0 %v4139
    %5804 = vmatmul.bf16.gmra.mxu0 %v548
    %v5805 = vpop.f32.mrf.mxu0
    %v5806 = vadd.f32 %v5787, %v5805
    %v5807 = vpop.f32.mrf.mxu0
    %v5808 = vadd.f32 %v5789, %v5807
    %5809 = vmatmul.bf16.gmra.mxu0 %v598
    %v5810 = vpop.f32.mrf.mxu0
    %v5811 = vadd.f32 %v5792, %v5810
    %v5812 = vpop.f32.mrf.mxu0
    %v5813 = vadd.f32 %v5794, %v5812
    %5814 = vdwg.mxu0
    %5815 = vmatpush.bf16.msra.mxu0 %v4169
    %5816 = vmatpush.bf16.msra.mxu0 %v4167
    %5817 = vmatpush.bf16.msra.mxu0 %v4165
    %5818 = vmatpush.bf16.msra.mxu0 %v4163
    %5819 = vmatpush.bf16.msra.mxu0 %v4161
    %5820 = vmatpush.bf16.msra.mxu0 %v4159
    %5821 = vmatpush.bf16.msra.mxu0 %v4157
    %5822 = vmatpush.bf16.msra.mxu0 %v4155
    %5823 = vmatmul.bf16.gmra.mxu0 %v549
    %v5824 = vpop.f32.mrf.mxu0
    %v5825 = vadd.f32 %v5806, %v5824
    %v5826 = vpop.f32.mrf.mxu0
    %v5827 = vadd.f32 %v5808, %v5826
    %5828 = vmatmul.bf16.gmra.mxu0 %v599
    %v5829 = vpop.f32.mrf.mxu0
    %v5830 = vadd.f32 %v5811, %v5829
    %v5831 = vpop.f32.mrf.mxu0
    %v5832 = vadd.f32 %v5813, %v5831
    %5833 = vdwg.mxu0
    %5834 = vmatpush.bf16.msra.mxu0 %v4185
    %5835 = vmatpush.bf16.msra.mxu0 %v4183
    %5836 = vmatpush.bf16.msra.mxu0 %v4181
    %5837 = vmatpush.bf16.msra.mxu0 %v4179
    %5838 = vmatpush.bf16.msra.mxu0 %v4177
    %5839 = vmatpush.bf16.msra.mxu0 %v4175
    %5840 = vmatpush.bf16.msra.mxu0 %v4173
    %5841 = vmatpush.bf16.msra.mxu0 %v4171
    %5842 = vmatmul.bf16.gmra.mxu0 %v550
    %v5843 = vpop.f32.mrf.mxu0
    %v5844 = vadd.f32 %v5825, %v5843
    %v5845 = vpop.f32.mrf.mxu0
    %v5846 = vadd.f32 %v5827, %v5845
    %5847 = vmatmul.bf16.gmra.mxu0 %v600
    %v5848 = vpop.f32.mrf.mxu0
    %v5849 = vadd.f32 %v5830, %v5848
    %v5850 = vpop.f32.mrf.mxu0
    %v5851 = vadd.f32 %v5832, %v5850
    %5852 = vdwg.mxu0
    %5853 = vmatpush.bf16.msra.mxu0 %v4201
    %5854 = vmatpush.bf16.msra.mxu0 %v4199
    %5855 = vmatpush.bf16.msra.mxu0 %v4197
    %5856 = vmatpush.bf16.msra.mxu0 %v4195
    %5857 = vmatpush.bf16.msra.mxu0 %v4193
    %5858 = vmatpush.bf16.msra.mxu0 %v4191
    %5859 = vmatpush.bf16.msra.mxu0 %v4189
    %5860 = vmatpush.bf16.msra.mxu0 %v4187
    %5861 = vmatmul.bf16.gmra.mxu0 %v551
    %v5862 = vpop.f32.mrf.mxu0
    %v5863 = vadd.f32 %v5844, %v5862
    %v5864 = vpop.f32.mrf.mxu0
    %v5865 = vadd.f32 %v5846, %v5864
    %5866 = vmatmul.bf16.gmra.mxu0 %v601
    %v5867 = vpop.f32.mrf.mxu0
    %v5868 = vadd.f32 %v5849, %v5867
    %v5869 = vpop.f32.mrf.mxu0
    %v5870 = vadd.f32 %v5851, %v5869
    %5871 = vdwg.mxu0
    %5872 = vmatpush.bf16.msra.mxu0 %v4217
    %5873 = vmatpush.bf16.msra.mxu0 %v4215
    %5874 = vmatpush.bf16.msra.mxu0 %v4213
    %5875 = vmatpush.bf16.msra.mxu0 %v4211
    %5876 = vmatpush.bf16.msra.mxu0 %v4209
    %5877 = vmatpush.bf16.msra.mxu0 %v4207
    %5878 = vmatpush.bf16.msra.mxu0 %v4205
    %5879 = vmatpush.bf16.msra.mxu0 %v4203
    %5880 = vmatmul.bf16.gmra.mxu0 %v552
    %v5881 = vpop.f32.mrf.mxu0
    %v5882 = vadd.f32 %v5863, %v5881
    %v5883 = vpop.f32.mrf.mxu0
    %v5884 = vadd.f32 %v5865, %v5883
    %5885 = vmatmul.bf16.gmra.mxu0 %v602
    %v5886 = vpop.f32.mrf.mxu0
    %v5887 = vadd.f32 %v5868, %v5886
    %v5888 = vpop.f32.mrf.mxu0
    %v5889 = vadd.f32 %v5870, %v5888
    %5890 = vdwg.mxu0
    %5891 = vmatpush.bf16.msra.mxu0 %v4233
    %5892 = vmatpush.bf16.msra.mxu0 %v4231
    %5893 = vmatpush.bf16.msra.mxu0 %v4229
    %5894 = vmatpush.bf16.msra.mxu0 %v4227
    %5895 = vmatpush.bf16.msra.mxu0 %v4225
    %5896 = vmatpush.bf16.msra.mxu0 %v4223
    %5897 = vmatpush.bf16.msra.mxu0 %v4221
    %5898 = vmatpush.bf16.msra.mxu0 %v4219
    %5899 = vmatmul.bf16.gmra.mxu0 %v553
    %v5900 = vpop.f32.mrf.mxu0
    %v5901 = vadd.f32 %v5882, %v5900
    %v5902 = vpop.f32.mrf.mxu0
    %v5903 = vadd.f32 %v5884, %v5902
    %5904 = vmatmul.bf16.gmra.mxu0 %v603
    %v5905 = vpop.f32.mrf.mxu0
    %v5906 = vadd.f32 %v5887, %v5905
    %v5907 = vpop.f32.mrf.mxu0
    %v5908 = vadd.f32 %v5889, %v5907
    %5909 = vdwg.mxu0
    %5910 = vmatpush.bf16.msra.mxu0 %v4249
    %5911 = vmatpush.bf16.msra.mxu0 %v4247
    %5912 = vmatpush.bf16.msra.mxu0 %v4245
    %5913 = vmatpush.bf16.msra.mxu0 %v4243
    %5914 = vmatpush.bf16.msra.mxu0 %v4241
    %5915 = vmatpush.bf16.msra.mxu0 %v4239
    %5916 = vmatpush.bf16.msra.mxu0 %v4237
    %5917 = vmatpush.bf16.msra.mxu0 %v4235
    %5918 = vmatmul.bf16.gmra.mxu0 %v554
    %v5919 = vpop.f32.mrf.mxu0
    %v5920 = vadd.f32 %v5901, %v5919
    %v5921 = vpop.f32.mrf.mxu0
    %v5922 = vadd.f32 %v5903, %v5921
    %5923 = vmatmul.bf16.gmra.mxu0 %v604
    %v5924 = vpop.f32.mrf.mxu0
    %v5925 = vadd.f32 %v5906, %v5924
    %v5926 = vpop.f32.mrf.mxu0
    %v5927 = vadd.f32 %v5908, %v5926
    %5928 = vdwg.mxu0
    %5929 = vmatpush.bf16.msra.mxu0 %v4265
    %5930 = vmatpush.bf16.msra.mxu0 %v4263
    %5931 = vmatpush.bf16.msra.mxu0 %v4261
    %5932 = vmatpush.bf16.msra.mxu0 %v4259
    %5933 = vmatpush.bf16.msra.mxu0 %v4257
    %5934 = vmatpush.bf16.msra.mxu0 %v4255
    %5935 = vmatpush.bf16.msra.mxu0 %v4253
    %5936 = vmatpush.bf16.msra.mxu0 %v4251
    %5937 = vmatmul.bf16.gmra.mxu0 %v555
    %v5938 = vpop.f32.mrf.mxu0
    %v5939 = vadd.f32 %v5920, %v5938
    %v5940 = vpop.f32.mrf.mxu0
    %v5941 = vadd.f32 %v5922, %v5940
    %5942 = vmatmul.bf16.gmra.mxu0 %v605
    %v5943 = vpop.f32.mrf.mxu0
    %v5944 = vadd.f32 %v5925, %v5943
    %v5945 = vpop.f32.mrf.mxu0
    %v5946 = vadd.f32 %v5927, %v5945
    %5947 = vdwg.mxu0
    %5948 = vmatpush.bf16.msra.mxu0 %v4281
    %5949 = vmatpush.bf16.msra.mxu0 %v4279
    %5950 = vmatpush.bf16.msra.mxu0 %v4277
    %5951 = vmatpush.bf16.msra.mxu0 %v4275
    %5952 = vmatpush.bf16.msra.mxu0 %v4273
    %5953 = vmatpush.bf16.msra.mxu0 %v4271
    %5954 = vmatpush.bf16.msra.mxu0 %v4269
    %5955 = vmatpush.bf16.msra.mxu0 %v4267
    %5956 = vmatmul.bf16.gmra.mxu0 %v556
    %v5957 = vpop.f32.mrf.mxu0
    %v5958 = vadd.f32 %v5939, %v5957
    %v5959 = vpop.f32.mrf.mxu0
    %v5960 = vadd.f32 %v5941, %v5959
    %5961 = vmatmul.bf16.gmra.mxu0 %v606
    %v5962 = vpop.f32.mrf.mxu0
    %v5963 = vadd.f32 %v5944, %v5962
    %v5964 = vpop.f32.mrf.mxu0
    %v5965 = vadd.f32 %v5946, %v5964
    %5966 = vdwg.mxu0
    %5967 = vmatpush.bf16.msra.mxu0 %v4297
    %5968 = vmatpush.bf16.msra.mxu0 %v4295
    %5969 = vmatpush.bf16.msra.mxu0 %v4293
    %5970 = vmatpush.bf16.msra.mxu0 %v4291
    %5971 = vmatpush.bf16.msra.mxu0 %v4289
    %5972 = vmatpush.bf16.msra.mxu0 %v4287
    %5973 = vmatpush.bf16.msra.mxu0 %v4285
    %5974 = vmatpush.bf16.msra.mxu0 %v4283
    %5975 = vmatmul.bf16.gmra.mxu0 %v557
    %v5976 = vpop.f32.mrf.mxu0
    %v5977 = vadd.f32 %v5958, %v5976
    %v5978 = vpop.f32.mrf.mxu0
    %v5979 = vadd.f32 %v5960, %v5978
    %5980 = vmatmul.bf16.gmra.mxu0 %v607
    %v5981 = vpop.f32.mrf.mxu0
    %v5982 = vadd.f32 %v5963, %v5981
    %v5983 = vpop.f32.mrf.mxu0
    %v5984 = vadd.f32 %v5965, %v5983
    %5985 = vdwg.mxu0
    %5986 = vmatpush.bf16.msra.mxu0 %v4313
    %5987 = vmatpush.bf16.msra.mxu0 %v4311
    %5988 = vmatpush.bf16.msra.mxu0 %v4309
    %5989 = vmatpush.bf16.msra.mxu0 %v4307
    %5990 = vmatpush.bf16.msra.mxu0 %v4305
    %5991 = vmatpush.bf16.msra.mxu0 %v4303
    %5992 = vmatpush.bf16.msra.mxu0 %v4301
    %5993 = vmatpush.bf16.msra.mxu0 %v4299
    %5994 = vmatmul.bf16.gmra.mxu0 %v558
    %v5995 = vpop.f32.mrf.mxu0
    %v5996 = vadd.f32 %v5977, %v5995
    %v5997 = vpop.f32.mrf.mxu0
    %v5998 = vadd.f32 %v5979, %v5997
    %5999 = vmatmul.bf16.gmra.mxu0 %v608
    %v6000 = vpop.f32.mrf.mxu0
    %v6001 = vadd.f32 %v5982, %v6000
    %v6002 = vpop.f32.mrf.mxu0
    %v6003 = vadd.f32 %v5984, %v6002
    %6004 = vdwg.mxu0
    %6005 = vmatpush.bf16.msra.mxu0 %v4329
    %6006 = vmatpush.bf16.msra.mxu0 %v4327
    %6007 = vmatpush.bf16.msra.mxu0 %v4325
    %6008 = vmatpush.bf16.msra.mxu0 %v4323
    %6009 = vmatpush.bf16.msra.mxu0 %v4321
    %6010 = vmatpush.bf16.msra.mxu0 %v4319
    %6011 = vmatpush.bf16.msra.mxu0 %v4317
    %6012 = vmatpush.bf16.msra.mxu0 %v4315
    %6013 = vmatmul.bf16.gmra.mxu0 %v559
    %v6014 = vpop.f32.mrf.mxu0
    %v6015 = vadd.f32 %v5996, %v6014
    %v6016 = vpop.f32.mrf.mxu0
    %v6017 = vadd.f32 %v5998, %v6016
    %6018 = vmatmul.bf16.gmra.mxu0 %v609
    %v6019 = vpop.f32.mrf.mxu0
    %v6020 = vadd.f32 %v6001, %v6019
    %v6021 = vpop.f32.mrf.mxu0
    %v6022 = vadd.f32 %v6003, %v6021
    %6023 = vdwg.mxu0
    %6024 = vmatpush.bf16.msra.mxu0 %v4345
    %6025 = vmatpush.bf16.msra.mxu0 %v4343
    %6026 = vmatpush.bf16.msra.mxu0 %v4341
    %6027 = vmatpush.bf16.msra.mxu0 %v4339
    %6028 = vmatpush.bf16.msra.mxu0 %v4337
    %6029 = vmatpush.bf16.msra.mxu0 %v4335
    %6030 = vmatpush.bf16.msra.mxu0 %v4333
    %6031 = vmatpush.bf16.msra.mxu0 %v4331
    %6032 = vmatmul.bf16.gmra.mxu0 %v560
    %v6033 = vpop.f32.mrf.mxu0
    %v6034 = vadd.f32 %v6015, %v6033
    %v6035 = vpop.f32.mrf.mxu0
    %v6036 = vadd.f32 %v6017, %v6035
    %6037 = vmatmul.bf16.gmra.mxu0 %v610
    %v6038 = vpop.f32.mrf.mxu0
    %v6039 = vadd.f32 %v6020, %v6038
    %v6040 = vpop.f32.mrf.mxu0
    %v6041 = vadd.f32 %v6022, %v6040
    %6042 = vdwg.mxu0
    %6043 = vmatpush.bf16.msra.mxu0 %v4361
    %6044 = vmatpush.bf16.msra.mxu0 %v4359
    %6045 = vmatpush.bf16.msra.mxu0 %v4357
    %6046 = vmatpush.bf16.msra.mxu0 %v4355
    %6047 = vmatpush.bf16.msra.mxu0 %v4353
    %6048 = vmatpush.bf16.msra.mxu0 %v4351
    %6049 = vmatpush.bf16.msra.mxu0 %v4349
    %6050 = vmatpush.bf16.msra.mxu0 %v4347
    %6051 = vmatmul.bf16.gmra.mxu0 %v561
    %v6052 = vpop.f32.mrf.mxu0
    %v6053 = vadd.f32 %v6034, %v6052
    %v6054 = vpop.f32.mrf.mxu0
    %v6055 = vadd.f32 %v6036, %v6054
    %6056 = vmatmul.bf16.gmra.mxu0 %v611
    %v6057 = vpop.f32.mrf.mxu0
    %v6058 = vadd.f32 %v6039, %v6057
    %v6059 = vpop.f32.mrf.mxu0
    %v6060 = vadd.f32 %v6041, %v6059
    %6061 = vdwg.mxu0
    %6062 = vmatpush.bf16.msra.mxu0 %v4377
    %6063 = vmatpush.bf16.msra.mxu0 %v4375
    %6064 = vmatpush.bf16.msra.mxu0 %v4373
    %6065 = vmatpush.bf16.msra.mxu0 %v4371
    %6066 = vmatpush.bf16.msra.mxu0 %v4369
    %6067 = vmatpush.bf16.msra.mxu0 %v4367
    %6068 = vmatpush.bf16.msra.mxu0 %v4365
    %6069 = vmatpush.bf16.msra.mxu0 %v4363
    %6070 = vmatmul.bf16.gmra.mxu0 %v562
    %v6071 = vpop.f32.mrf.mxu0
    %v6072 = vadd.f32 %v6053, %v6071
    %v6073 = vpop.f32.mrf.mxu0
    %v6074 = vadd.f32 %v6055, %v6073
    %6075 = vmatmul.bf16.gmra.mxu0 %v612
    %v6076 = vpop.f32.mrf.mxu0
    %v6077 = vadd.f32 %v6058, %v6076
    %v6078 = vpop.f32.mrf.mxu0
    %v6079 = vadd.f32 %v6060, %v6078
    %6080 = vdwg.mxu0
    %6081 = vmatpush.bf16.msra.mxu0 %v4393
    %6082 = vmatpush.bf16.msra.mxu0 %v4391
    %6083 = vmatpush.bf16.msra.mxu0 %v4389
    %6084 = vmatpush.bf16.msra.mxu0 %v4387
    %6085 = vmatpush.bf16.msra.mxu0 %v4385
    %6086 = vmatpush.bf16.msra.mxu0 %v4383
    %6087 = vmatpush.bf16.msra.mxu0 %v4381
    %6088 = vmatpush.bf16.msra.mxu0 %v4379
    %6089 = vmatmul.bf16.gmra.mxu0 %v563
    %v6090 = vpop.f32.mrf.mxu0
    %v6091 = vadd.f32 %v6072, %v6090
    %v6092 = vpop.f32.mrf.mxu0
    %v6093 = vadd.f32 %v6074, %v6092
    %6094 = vmatmul.bf16.gmra.mxu0 %v613
    %v6095 = vpop.f32.mrf.mxu0
    %v6096 = vadd.f32 %v6077, %v6095
    %v6097 = vpop.f32.mrf.mxu0
    %v6098 = vadd.f32 %v6079, %v6097
    %6099 = vdwg.mxu0
    %6100 = vmatpush.bf16.msra.mxu0 %v4409
    %6101 = vmatpush.bf16.msra.mxu0 %v4407
    %6102 = vmatpush.bf16.msra.mxu0 %v4405
    %6103 = vmatpush.bf16.msra.mxu0 %v4403
    %6104 = vmatpush.bf16.msra.mxu0 %v4401
    %6105 = vmatpush.bf16.msra.mxu0 %v4399
    %6106 = vmatpush.bf16.msra.mxu0 %v4397
    %6107 = vmatpush.bf16.msra.mxu0 %v4395
    %6108 = vmatmul.bf16.gmra.mxu0 %v564
    %v6109 = vpop.f32.mrf.mxu0
    %v6110 = vadd.f32 %v6091, %v6109
    %v6111 = vpop.f32.mrf.mxu0
    %v6112 = vadd.f32 %v6093, %v6111
    %6113 = vmatmul.bf16.gmra.mxu0 %v614
    %v6114 = vpop.f32.mrf.mxu0
    %v6115 = vadd.f32 %v6096, %v6114
    %v6116 = vpop.f32.mrf.mxu0
    %v6117 = vadd.f32 %v6098, %v6116
    %6118 = vdwg.mxu0
    %6119 = vmatpush.bf16.msra.mxu0 %v4425
    %6120 = vmatpush.bf16.msra.mxu0 %v4423
    %6121 = vmatpush.bf16.msra.mxu0 %v4421
    %6122 = vmatpush.bf16.msra.mxu0 %v4419
    %6123 = vmatpush.bf16.msra.mxu0 %v4417
    %6124 = vmatpush.bf16.msra.mxu0 %v4415
    %6125 = vmatpush.bf16.msra.mxu0 %v4413
    %6126 = vmatpush.bf16.msra.mxu0 %v4411
    %6127 = vmatmul.bf16.gmra.mxu0 %v565
    %v6128 = vpop.f32.mrf.mxu0
    %v6129 = vadd.f32 %v6110, %v6128
    %v6130 = vpop.f32.mrf.mxu0
    %v6131 = vadd.f32 %v6112, %v6130
    %6132 = vmatmul.bf16.gmra.mxu0 %v615
    %v6133 = vpop.f32.mrf.mxu0
    %v6134 = vadd.f32 %v6115, %v6133
    %v6135 = vpop.f32.mrf.mxu0
    %v6136 = vadd.f32 %v6117, %v6135
    %6137 = vdwg.mxu0
    %6138 = vmatpush.bf16.msra.mxu0 %v4441
    %6139 = vmatpush.bf16.msra.mxu0 %v4439
    %6140 = vmatpush.bf16.msra.mxu0 %v4437
    %6141 = vmatpush.bf16.msra.mxu0 %v4435
    %6142 = vmatpush.bf16.msra.mxu0 %v4433
    %6143 = vmatpush.bf16.msra.mxu0 %v4431
    %6144 = vmatpush.bf16.msra.mxu0 %v4429
    %6145 = vmatpush.bf16.msra.mxu0 %v4427
    %6146 = vmatmul.bf16.gmra.mxu0 %v566
    %v6147 = vpop.f32.mrf.mxu0
    %v6148 = vadd.f32 %v6129, %v6147
    %v6149 = vpop.f32.mrf.mxu0
    %v6150 = vadd.f32 %v6131, %v6149
    %6151 = vmatmul.bf16.gmra.mxu0 %v616
    %v6152 = vpop.f32.mrf.mxu0
    %v6153 = vadd.f32 %v6134, %v6152
    %v6154 = vpop.f32.mrf.mxu0
    %v6155 = vadd.f32 %v6136, %v6154
    %6156 = vdwg.mxu0
    %6157 = vmatpush.bf16.msra.mxu0 %v4457
    %6158 = vmatpush.bf16.msra.mxu0 %v4455
    %6159 = vmatpush.bf16.msra.mxu0 %v4453
    %6160 = vmatpush.bf16.msra.mxu0 %v4451
    %6161 = vmatpush.bf16.msra.mxu0 %v4449
    %6162 = vmatpush.bf16.msra.mxu0 %v4447
    %6163 = vmatpush.bf16.msra.mxu0 %v4445
    %6164 = vmatpush.bf16.msra.mxu0 %v4443
    %6165 = vmatmul.bf16.gmra.mxu0 %v567
    %v6166 = vpop.f32.mrf.mxu0
    %v6167 = vadd.f32 %v6148, %v6166
    %v6168 = vpop.f32.mrf.mxu0
    %v6169 = vadd.f32 %v6150, %v6168
    %6170 = vmatmul.bf16.gmra.mxu0 %v617
    %v6171 = vpop.f32.mrf.mxu0
    %v6172 = vadd.f32 %v6153, %v6171
    %v6173 = vpop.f32.mrf.mxu0
    %v6174 = vadd.f32 %v6155, %v6173
    %6175 = vdwg.mxu0
    %6176 = vmatpush.bf16.msra.mxu0 %v4473
    %6177 = vmatpush.bf16.msra.mxu0 %v4471
    %6178 = vmatpush.bf16.msra.mxu0 %v4469
    %6179 = vmatpush.bf16.msra.mxu0 %v4467
    %6180 = vmatpush.bf16.msra.mxu0 %v4465
    %6181 = vmatpush.bf16.msra.mxu0 %v4463
    %6182 = vmatpush.bf16.msra.mxu0 %v4461
    %6183 = vmatpush.bf16.msra.mxu0 %v4459
    %6184 = vmatmul.bf16.gmra.mxu0 %v568
    %v6185 = vpop.f32.mrf.mxu0
    %v6186 = vadd.f32 %v6167, %v6185
    %v6187 = vpop.f32.mrf.mxu0
    %v6188 = vadd.f32 %v6169, %v6187
    %6189 = vmatmul.bf16.gmra.mxu0 %v618
    %v6190 = vpop.f32.mrf.mxu0
    %v6191 = vadd.f32 %v6172, %v6190
    %v6192 = vpop.f32.mrf.mxu0
    %v6193 = vadd.f32 %v6174, %v6192
    %6194 = vdwg.mxu0
    %6195 = vmatpush.bf16.msra.mxu0 %v4489
    %6196 = vmatpush.bf16.msra.mxu0 %v4487
    %6197 = vmatpush.bf16.msra.mxu0 %v4485
    %6198 = vmatpush.bf16.msra.mxu0 %v4483
    %6199 = vmatpush.bf16.msra.mxu0 %v4481
    %6200 = vmatpush.bf16.msra.mxu0 %v4479
    %6201 = vmatpush.bf16.msra.mxu0 %v4477
    %6202 = vmatpush.bf16.msra.mxu0 %v4475
    %6203 = vmatmul.bf16.gmra.mxu0 %v569
    %v6204 = vpop.f32.mrf.mxu0
    %v6205 = vadd.f32 %v6186, %v6204
    %v6206 = vpop.f32.mrf.mxu0
    %v6207 = vadd.f32 %v6188, %v6206
    %6208 = vmatmul.bf16.gmra.mxu0 %v619
    %v6209 = vpop.f32.mrf.mxu0
    %v6210 = vadd.f32 %v6191, %v6209
    %v6211 = vpop.f32.mrf.mxu0
    %v6212 = vadd.f32 %v6193, %v6211
    %6213 = vdwg.mxu0
    %6214 = vmatpush.bf16.msra.mxu0 %v4505
    %6215 = vmatpush.bf16.msra.mxu0 %v4503
    %6216 = vmatpush.bf16.msra.mxu0 %v4501
    %6217 = vmatpush.bf16.msra.mxu0 %v4499
    %6218 = vmatpush.bf16.msra.mxu0 %v4497
    %6219 = vmatpush.bf16.msra.mxu0 %v4495
    %6220 = vmatpush.bf16.msra.mxu0 %v4493
    %6221 = vmatpush.bf16.msra.mxu0 %v4491
    %6222 = vmatmul.bf16.gmra.mxu0 %v570
    %v6223 = vpop.f32.mrf.mxu0
    %v6224 = vadd.f32 %v6205, %v6223
    %v6225 = vpop.f32.mrf.mxu0
    %v6226 = vadd.f32 %v6207, %v6225
    %6227 = vmatmul.bf16.gmra.mxu0 %v620
    %v6228 = vpop.f32.mrf.mxu0
    %v6229 = vadd.f32 %v6210, %v6228
    %v6230 = vpop.f32.mrf.mxu0
    %v6231 = vadd.f32 %v6212, %v6230
    %6232 = vdwg.mxu0
    %6233 = vmatpush.bf16.msra.mxu0 %v4521
    %6234 = vmatpush.bf16.msra.mxu0 %v4519
    %6235 = vmatpush.bf16.msra.mxu0 %v4517
    %6236 = vmatpush.bf16.msra.mxu0 %v4515
    %6237 = vmatpush.bf16.msra.mxu0 %v4513
    %6238 = vmatpush.bf16.msra.mxu0 %v4511
    %6239 = vmatpush.bf16.msra.mxu0 %v4509
    %6240 = vmatpush.bf16.msra.mxu0 %v4507
    %6241 = vmatmul.bf16.gmra.mxu0 %v571
    %v6242 = vpop.f32.mrf.mxu0
    %v6243 = vadd.f32 %v6224, %v6242
    %v6244 = vpop.f32.mrf.mxu0
    %v6245 = vadd.f32 %v6226, %v6244
    %6246 = vmatmul.bf16.gmra.mxu0 %v621
    %v6247 = vpop.f32.mrf.mxu0
    %v6248 = vadd.f32 %v6229, %v6247
    %v6249 = vpop.f32.mrf.mxu0
    %v6250 = vadd.f32 %v6231, %v6249
    %6251 = vdwg.mxu0
    %6252 = vmatpush.bf16.msra.mxu0 %v4537
    %6253 = vmatpush.bf16.msra.mxu0 %v4535
    %6254 = vmatpush.bf16.msra.mxu0 %v4533
    %6255 = vmatpush.bf16.msra.mxu0 %v4531
    %6256 = vmatpush.bf16.msra.mxu0 %v4529
    %6257 = vmatpush.bf16.msra.mxu0 %v4527
    %6258 = vmatpush.bf16.msra.mxu0 %v4525
    %6259 = vmatpush.bf16.msra.mxu0 %v4523
    %6260 = vmatmul.bf16.gmra.mxu0 %v572
    %v6261 = vpop.f32.mrf.mxu0
    %v6262 = vadd.f32 %v6243, %v6261
    %v6263 = vpop.f32.mrf.mxu0
    %v6264 = vadd.f32 %v6245, %v6263
    %6265 = vmatmul.bf16.gmra.mxu0 %v622
    %v6266 = vpop.f32.mrf.mxu0
    %v6267 = vadd.f32 %v6248, %v6266
    %v6268 = vpop.f32.mrf.mxu0
    %v6269 = vadd.f32 %v6250, %v6268
    %6270 = vdwg.mxu0
    %6271 = vmatpush.bf16.msra.mxu0 %v4553
    %6272 = vmatpush.bf16.msra.mxu0 %v4551
    %6273 = vmatpush.bf16.msra.mxu0 %v4549
    %6274 = vmatpush.bf16.msra.mxu0 %v4547
    %6275 = vmatpush.bf16.msra.mxu0 %v4545
    %6276 = vmatpush.bf16.msra.mxu0 %v4543
    %6277 = vmatpush.bf16.msra.mxu0 %v4541
    %6278 = vmatpush.bf16.msra.mxu0 %v4539
    %6279 = vmatmul.bf16.gmra.mxu0 %v573
    %v6280 = vpop.f32.mrf.mxu0
    %v6281 = vadd.f32 %v6262, %v6280
    %v6282 = vpop.f32.mrf.mxu0
    %v6283 = vadd.f32 %v6264, %v6282
    %6284 = vmatmul.bf16.gmra.mxu0 %v623
    %v6285 = vpop.f32.mrf.mxu0
    %v6286 = vadd.f32 %v6267, %v6285
    %v6287 = vpop.f32.mrf.mxu0
    %v6288 = vadd.f32 %v6269, %v6287
    %6289 = vdwg.mxu0
    %6290 = vmatpush.bf16.msra.mxu0 %v4569
    %6291 = vmatpush.bf16.msra.mxu0 %v4567
    %6292 = vmatpush.bf16.msra.mxu0 %v4565
    %6293 = vmatpush.bf16.msra.mxu0 %v4563
    %6294 = vmatpush.bf16.msra.mxu0 %v4561
    %6295 = vmatpush.bf16.msra.mxu0 %v4559
    %6296 = vmatpush.bf16.msra.mxu0 %v4557
    %6297 = vmatpush.bf16.msra.mxu0 %v4555
    %6298 = vmatmul.bf16.gmra.mxu0 %v574
    %v6299 = vpop.f32.mrf.mxu0
    %v6300 = vadd.f32 %v6281, %v6299
    %v6301 = vpop.f32.mrf.mxu0
    %v6302 = vadd.f32 %v6283, %v6301
    %6303 = vmatmul.bf16.gmra.mxu0 %v624
    %v6304 = vpop.f32.mrf.mxu0
    %v6305 = vadd.f32 %v6286, %v6304
    %v6306 = vpop.f32.mrf.mxu0
    %v6307 = vadd.f32 %v6288, %v6306
    %6308 = vdwg.mxu0
    %6309 = vmatpush.bf16.msra.mxu0 %v4585
    %6310 = vmatpush.bf16.msra.mxu0 %v4583
    %6311 = vmatpush.bf16.msra.mxu0 %v4581
    %6312 = vmatpush.bf16.msra.mxu0 %v4579
    %6313 = vmatpush.bf16.msra.mxu0 %v4577
    %6314 = vmatpush.bf16.msra.mxu0 %v4575
    %6315 = vmatpush.bf16.msra.mxu0 %v4573
    %6316 = vmatpush.bf16.msra.mxu0 %v4571
    %6317 = vmatmul.bf16.gmra.mxu0 %v575
    %v6318 = vpop.f32.mrf.mxu0
    %v6319 = vadd.f32 %v6300, %v6318
    %v6320 = vpop.f32.mrf.mxu0
    %v6321 = vadd.f32 %v6302, %v6320
    %6322 = vmatmul.bf16.gmra.mxu0 %v625
    %v6323 = vpop.f32.mrf.mxu0
    %v6324 = vadd.f32 %v6305, %v6323
    %v6325 = vpop.f32.mrf.mxu0
    %v6326 = vadd.f32 %v6307, %v6325
    %6327 = vdwg.mxu0
    %6328 = vmatpush.bf16.msra.mxu0 %v4601
    %6329 = vmatpush.bf16.msra.mxu0 %v4599
    %6330 = vmatpush.bf16.msra.mxu0 %v4597
    %6331 = vmatpush.bf16.msra.mxu0 %v4595
    %6332 = vmatpush.bf16.msra.mxu0 %v4593
    %6333 = vmatpush.bf16.msra.mxu0 %v4591
    %6334 = vmatpush.bf16.msra.mxu0 %v4589
    %6335 = vmatpush.bf16.msra.mxu0 %v4587
    %6336 = vmatmul.bf16.gmra.mxu0 %v576
    %v6337 = vpop.f32.mrf.mxu0
    %v6338 = vadd.f32 %v6319, %v6337
    %v6339 = vpop.f32.mrf.mxu0
    %v6340 = vadd.f32 %v6321, %v6339
    %6341 = vmatmul.bf16.gmra.mxu0 %v626
    %v6342 = vpop.f32.mrf.mxu0
    %v6343 = vadd.f32 %v6324, %v6342
    %v6344 = vpop.f32.mrf.mxu0
    %v6345 = vadd.f32 %v6326, %v6344
    %6346 = vdwg.mxu0
    %6347 = vmatpush.bf16.msra.mxu0 %v4617
    %6348 = vmatpush.bf16.msra.mxu0 %v4615
    %6349 = vmatpush.bf16.msra.mxu0 %v4613
    %6350 = vmatpush.bf16.msra.mxu0 %v4611
    %6351 = vmatpush.bf16.msra.mxu0 %v4609
    %6352 = vmatpush.bf16.msra.mxu0 %v4607
    %6353 = vmatpush.bf16.msra.mxu0 %v4605
    %6354 = vmatpush.bf16.msra.mxu0 %v4603
    %6355 = vmatmul.bf16.gmra.mxu0 %v577
    %v6356 = vpop.f32.mrf.mxu0
    %v6357 = vadd.f32 %v6338, %v6356
    %v6358 = vpop.f32.mrf.mxu0
    %v6359 = vadd.f32 %v6340, %v6358
    %6360 = vmatmul.bf16.gmra.mxu0 %v627
    %v6361 = vpop.f32.mrf.mxu0
    %v6362 = vadd.f32 %v6343, %v6361
    %v6363 = vpop.f32.mrf.mxu0
    %v6364 = vadd.f32 %v6345, %v6363
    %6365 = vdwg.mxu0
    %6366 = vmatpush.bf16.msra.mxu0 %v4633
    %6367 = vmatpush.bf16.msra.mxu0 %v4631
    %6368 = vmatpush.bf16.msra.mxu0 %v4629
    %6369 = vmatpush.bf16.msra.mxu0 %v4627
    %6370 = vmatpush.bf16.msra.mxu0 %v4625
    %6371 = vmatpush.bf16.msra.mxu0 %v4623
    %6372 = vmatpush.bf16.msra.mxu0 %v4621
    %6373 = vmatpush.bf16.msra.mxu0 %v4619
    %6374 = vmatmul.bf16.gmra.mxu0 %v578
    %v6375 = vpop.f32.mrf.mxu0
    %v6376 = vadd.f32 %v6357, %v6375
    %v6377 = vpop.f32.mrf.mxu0
    %v6378 = vadd.f32 %v6359, %v6377
    %6379 = vmatmul.bf16.gmra.mxu0 %v628
    %v6380 = vpop.f32.mrf.mxu0
    %v6381 = vadd.f32 %v6362, %v6380
    %v6382 = vpop.f32.mrf.mxu0
    %v6383 = vadd.f32 %v6364, %v6382
    %6384 = vdwg.mxu0
    %6385 = vmatpush.bf16.msra.mxu0 %v3850
    %6386 = vmatpush.bf16.msra.mxu0 %v3848
    %6387 = vmatpush.bf16.msra.mxu0 %v3846
    %6388 = vmatpush.bf16.msra.mxu0 %v3844
    %6389 = vmatpush.bf16.msra.mxu0 %v3842
    %6390 = vmatpush.bf16.msra.mxu0 %v3840
    %6391 = vmatpush.bf16.msra.mxu0 %v3838
    %6392 = vmatpush.bf16.msra.mxu0 %v3836
    %6393 = vmatmul.bf16.gmra.mxu0 %v529
    %v6394 = vpop.f32.mrf.mxu0
    %v6395 = vadd.f32 %v1432, %v6394
    %v6396 = vpop.f32.mrf.mxu0
    %v6397 = vadd.f32 %v1432, %v6396
    %6398 = vmatmul.bf16.gmra.mxu0 %v579
    %v6399 = vpop.f32.mrf.mxu0
    %v6400 = vadd.f32 %v1432, %v6399
    %v6401 = vpop.f32.mrf.mxu0
    %v6402 = vadd.f32 %v1432, %v6401
    %6403 = vdwg.mxu0
    %6404 = vmatpush.bf16.msra.mxu0 %v3866
    %6405 = vmatpush.bf16.msra.mxu0 %v3864
    %6406 = vmatpush.bf16.msra.mxu0 %v3862
    %6407 = vmatpush.bf16.msra.mxu0 %v3860
    %6408 = vmatpush.bf16.msra.mxu0 %v3858
    %6409 = vmatpush.bf16.msra.mxu0 %v3856
    %6410 = vmatpush.bf16.msra.mxu0 %v3854
    %6411 = vmatpush.bf16.msra.mxu0 %v3852
    %6412 = vmatmul.bf16.gmra.mxu0 %v530
    %v6413 = vpop.f32.mrf.mxu0
    %v6414 = vadd.f32 %v6395, %v6413
    %v6415 = vpop.f32.mrf.mxu0
    %v6416 = vadd.f32 %v6397, %v6415
    %6417 = vmatmul.bf16.gmra.mxu0 %v580
    %v6418 = vpop.f32.mrf.mxu0
    %v6419 = vadd.f32 %v6400, %v6418
    %v6420 = vpop.f32.mrf.mxu0
    %v6421 = vadd.f32 %v6402, %v6420
    %6422 = vdwg.mxu0
    %6423 = vmatpush.bf16.msra.mxu0 %v3882
    %6424 = vmatpush.bf16.msra.mxu0 %v3880
    %6425 = vmatpush.bf16.msra.mxu0 %v3878
    %6426 = vmatpush.bf16.msra.mxu0 %v3876
    %6427 = vmatpush.bf16.msra.mxu0 %v3874
    %6428 = vmatpush.bf16.msra.mxu0 %v3872
    %6429 = vmatpush.bf16.msra.mxu0 %v3870
    %6430 = vmatpush.bf16.msra.mxu0 %v3868
    %6431 = vmatmul.bf16.gmra.mxu0 %v531
    %v6432 = vpop.f32.mrf.mxu0
    %v6433 = vadd.f32 %v6414, %v6432
    %v6434 = vpop.f32.mrf.mxu0
    %v6435 = vadd.f32 %v6416, %v6434
    %6436 = vmatmul.bf16.gmra.mxu0 %v581
    %v6437 = vpop.f32.mrf.mxu0
    %v6438 = vadd.f32 %v6419, %v6437
    %v6439 = vpop.f32.mrf.mxu0
    %v6440 = vadd.f32 %v6421, %v6439
    %6441 = vdwg.mxu0
    %6442 = vmatpush.bf16.msra.mxu0 %v3898
    %6443 = vmatpush.bf16.msra.mxu0 %v3896
    %6444 = vmatpush.bf16.msra.mxu0 %v3894
    %6445 = vmatpush.bf16.msra.mxu0 %v3892
    %6446 = vmatpush.bf16.msra.mxu0 %v3890
    %6447 = vmatpush.bf16.msra.mxu0 %v3888
    %6448 = vmatpush.bf16.msra.mxu0 %v3886
    %6449 = vmatpush.bf16.msra.mxu0 %v3884
    %6450 = vmatmul.bf16.gmra.mxu0 %v532
    %v6451 = vpop.f32.mrf.mxu0
    %v6452 = vadd.f32 %v6433, %v6451
    %v6453 = vpop.f32.mrf.mxu0
    %v6454 = vadd.f32 %v6435, %v6453
    %6455 = vmatmul.bf16.gmra.mxu0 %v582
    %v6456 = vpop.f32.mrf.mxu0
    %v6457 = vadd.f32 %v6438, %v6456
    %v6458 = vpop.f32.mrf.mxu0
    %v6459 = vadd.f32 %v6440, %v6458
    %6460 = vdwg.mxu0
    %6461 = vmatpush.bf16.msra.mxu0 %v3914
    %6462 = vmatpush.bf16.msra.mxu0 %v3912
    %6463 = vmatpush.bf16.msra.mxu0 %v3910
    %6464 = vmatpush.bf16.msra.mxu0 %v3908
    %6465 = vmatpush.bf16.msra.mxu0 %v3906
    %6466 = vmatpush.bf16.msra.mxu0 %v3904
    %6467 = vmatpush.bf16.msra.mxu0 %v3902
    %6468 = vmatpush.bf16.msra.mxu0 %v3900
    %6469 = vmatmul.bf16.gmra.mxu0 %v533
    %v6470 = vpop.f32.mrf.mxu0
    %v6471 = vadd.f32 %v6452, %v6470
    %v6472 = vpop.f32.mrf.mxu0
    %v6473 = vadd.f32 %v6454, %v6472
    %6474 = vmatmul.bf16.gmra.mxu0 %v583
    %v6475 = vpop.f32.mrf.mxu0
    %v6476 = vadd.f32 %v6457, %v6475
    %v6477 = vpop.f32.mrf.mxu0
    %v6478 = vadd.f32 %v6459, %v6477
    %6479 = vdwg.mxu0
    %6480 = vmatpush.bf16.msra.mxu0 %v3930
    %6481 = vmatpush.bf16.msra.mxu0 %v3928
    %6482 = vmatpush.bf16.msra.mxu0 %v3926
    %6483 = vmatpush.bf16.msra.mxu0 %v3924
    %6484 = vmatpush.bf16.msra.mxu0 %v3922
    %6485 = vmatpush.bf16.msra.mxu0 %v3920
    %6486 = vmatpush.bf16.msra.mxu0 %v3918
    %6487 = vmatpush.bf16.msra.mxu0 %v3916
    %6488 = vmatmul.bf16.gmra.mxu0 %v534
    %v6489 = vpop.f32.mrf.mxu0
    %v6490 = vadd.f32 %v6471, %v6489
    %v6491 = vpop.f32.mrf.mxu0
    %v6492 = vadd.f32 %v6473, %v6491
    %6493 = vmatmul.bf16.gmra.mxu0 %v584
    %v6494 = vpop.f32.mrf.mxu0
    %v6495 = vadd.f32 %v6476, %v6494
    %v6496 = vpop.f32.mrf.mxu0
    %v6497 = vadd.f32 %v6478, %v6496
    %6498 = vdwg.mxu0
    %6499 = vmatpush.bf16.msra.mxu0 %v3946
    %6500 = vmatpush.bf16.msra.mxu0 %v3944
    %6501 = vmatpush.bf16.msra.mxu0 %v3942
    %6502 = vmatpush.bf16.msra.mxu0 %v3940
    %6503 = vmatpush.bf16.msra.mxu0 %v3938
    %6504 = vmatpush.bf16.msra.mxu0 %v3936
    %6505 = vmatpush.bf16.msra.mxu0 %v3934
    %6506 = vmatpush.bf16.msra.mxu0 %v3932
    %6507 = vmatmul.bf16.gmra.mxu0 %v535
    %v6508 = vpop.f32.mrf.mxu0
    %v6509 = vadd.f32 %v6490, %v6508
    %v6510 = vpop.f32.mrf.mxu0
    %v6511 = vadd.f32 %v6492, %v6510
    %6512 = vmatmul.bf16.gmra.mxu0 %v585
    %v6513 = vpop.f32.mrf.mxu0
    %v6514 = vadd.f32 %v6495, %v6513
    %v6515 = vpop.f32.mrf.mxu0
    %v6516 = vadd.f32 %v6497, %v6515
    %6517 = vdwg.mxu0
    %6518 = vmatpush.bf16.msra.mxu0 %v3962
    %6519 = vmatpush.bf16.msra.mxu0 %v3960
    %6520 = vmatpush.bf16.msra.mxu0 %v3958
    %6521 = vmatpush.bf16.msra.mxu0 %v3956
    %6522 = vmatpush.bf16.msra.mxu0 %v3954
    %6523 = vmatpush.bf16.msra.mxu0 %v3952
    %6524 = vmatpush.bf16.msra.mxu0 %v3950
    %6525 = vmatpush.bf16.msra.mxu0 %v3948
    %6526 = vmatmul.bf16.gmra.mxu0 %v536
    %v6527 = vpop.f32.mrf.mxu0
    %v6528 = vadd.f32 %v6509, %v6527
    %v6529 = vpop.f32.mrf.mxu0
    %v6530 = vadd.f32 %v6511, %v6529
    %6531 = vmatmul.bf16.gmra.mxu0 %v586
    %v6532 = vpop.f32.mrf.mxu0
    %v6533 = vadd.f32 %v6514, %v6532
    %v6534 = vpop.f32.mrf.mxu0
    %v6535 = vadd.f32 %v6516, %v6534
    %6536 = vdwg.mxu0
    %6537 = vmatpush.bf16.msra.mxu0 %v3978
    %6538 = vmatpush.bf16.msra.mxu0 %v3976
    %6539 = vmatpush.bf16.msra.mxu0 %v3974
    %6540 = vmatpush.bf16.msra.mxu0 %v3972
    %6541 = vmatpush.bf16.msra.mxu0 %v3970
    %6542 = vmatpush.bf16.msra.mxu0 %v3968
    %6543 = vmatpush.bf16.msra.mxu0 %v3966
    %6544 = vmatpush.bf16.msra.mxu0 %v3964
    %6545 = vmatmul.bf16.gmra.mxu0 %v537
    %v6546 = vpop.f32.mrf.mxu0
    %v6547 = vadd.f32 %v6528, %v6546
    %v6548 = vpop.f32.mrf.mxu0
    %v6549 = vadd.f32 %v6530, %v6548
    %6550 = vmatmul.bf16.gmra.mxu0 %v587
    %v6551 = vpop.f32.mrf.mxu0
    %v6552 = vadd.f32 %v6533, %v6551
    %v6553 = vpop.f32.mrf.mxu0
    %v6554 = vadd.f32 %v6535, %v6553
    %6555 = vdwg.mxu0
    %6556 = vmatpush.bf16.msra.mxu0 %v3994
    %6557 = vmatpush.bf16.msra.mxu0 %v3992
    %6558 = vmatpush.bf16.msra.mxu0 %v3990
    %6559 = vmatpush.bf16.msra.mxu0 %v3988
    %6560 = vmatpush.bf16.msra.mxu0 %v3986
    %6561 = vmatpush.bf16.msra.mxu0 %v3984
    %6562 = vmatpush.bf16.msra.mxu0 %v3982
    %6563 = vmatpush.bf16.msra.mxu0 %v3980
    %6564 = vmatmul.bf16.gmra.mxu0 %v538
    %v6565 = vpop.f32.mrf.mxu0
    %v6566 = vadd.f32 %v6547, %v6565
    %v6567 = vpop.f32.mrf.mxu0
    %v6568 = vadd.f32 %v6549, %v6567
    %6569 = vmatmul.bf16.gmra.mxu0 %v588
    %v6570 = vpop.f32.mrf.mxu0
    %v6571 = vadd.f32 %v6552, %v6570
    %v6572 = vpop.f32.mrf.mxu0
    %v6573 = vadd.f32 %v6554, %v6572
    %6574 = vdwg.mxu0
    %6575 = vmatpush.bf16.msra.mxu0 %v4010
    %6576 = vmatpush.bf16.msra.mxu0 %v4008
    %6577 = vmatpush.bf16.msra.mxu0 %v4006
    %6578 = vmatpush.bf16.msra.mxu0 %v4004
    %6579 = vmatpush.bf16.msra.mxu0 %v4002
    %6580 = vmatpush.bf16.msra.mxu0 %v4000
    %6581 = vmatpush.bf16.msra.mxu0 %v3998
    %6582 = vmatpush.bf16.msra.mxu0 %v3996
    %6583 = vmatmul.bf16.gmra.mxu0 %v539
    %v6584 = vpop.f32.mrf.mxu0
    %v6585 = vadd.f32 %v6566, %v6584
    %v6586 = vpop.f32.mrf.mxu0
    %v6587 = vadd.f32 %v6568, %v6586
    %6588 = vmatmul.bf16.gmra.mxu0 %v589
    %v6589 = vpop.f32.mrf.mxu0
    %v6590 = vadd.f32 %v6571, %v6589
    %v6591 = vpop.f32.mrf.mxu0
    %v6592 = vadd.f32 %v6573, %v6591
    %6593 = vdwg.mxu0
    %6594 = vmatpush.bf16.msra.mxu0 %v4026
    %6595 = vmatpush.bf16.msra.mxu0 %v4024
    %6596 = vmatpush.bf16.msra.mxu0 %v4022
    %6597 = vmatpush.bf16.msra.mxu0 %v4020
    %6598 = vmatpush.bf16.msra.mxu0 %v4018
    %6599 = vmatpush.bf16.msra.mxu0 %v4016
    %6600 = vmatpush.bf16.msra.mxu0 %v4014
    %6601 = vmatpush.bf16.msra.mxu0 %v4012
    %6602 = vmatmul.bf16.gmra.mxu0 %v540
    %v6603 = vpop.f32.mrf.mxu0
    %v6604 = vadd.f32 %v6585, %v6603
    %v6605 = vpop.f32.mrf.mxu0
    %v6606 = vadd.f32 %v6587, %v6605
    %6607 = vmatmul.bf16.gmra.mxu0 %v590
    %v6608 = vpop.f32.mrf.mxu0
    %v6609 = vadd.f32 %v6590, %v6608
    %v6610 = vpop.f32.mrf.mxu0
    %v6611 = vadd.f32 %v6592, %v6610
    %6612 = vdwg.mxu0
    %6613 = vmatpush.bf16.msra.mxu0 %v4042
    %6614 = vmatpush.bf16.msra.mxu0 %v4040
    %6615 = vmatpush.bf16.msra.mxu0 %v4038
    %6616 = vmatpush.bf16.msra.mxu0 %v4036
    %6617 = vmatpush.bf16.msra.mxu0 %v4034
    %6618 = vmatpush.bf16.msra.mxu0 %v4032
    %6619 = vmatpush.bf16.msra.mxu0 %v4030
    %6620 = vmatpush.bf16.msra.mxu0 %v4028
    %6621 = vmatmul.bf16.gmra.mxu0 %v541
    %v6622 = vpop.f32.mrf.mxu0
    %v6623 = vadd.f32 %v6604, %v6622
    %v6624 = vpop.f32.mrf.mxu0
    %v6625 = vadd.f32 %v6606, %v6624
    %6626 = vmatmul.bf16.gmra.mxu0 %v591
    %v6627 = vpop.f32.mrf.mxu0
    %v6628 = vadd.f32 %v6609, %v6627
    %v6629 = vpop.f32.mrf.mxu0
    %v6630 = vadd.f32 %v6611, %v6629
    %6631 = vdwg.mxu0
    %6632 = vmatpush.bf16.msra.mxu0 %v4058
    %6633 = vmatpush.bf16.msra.mxu0 %v4056
    %6634 = vmatpush.bf16.msra.mxu0 %v4054
    %6635 = vmatpush.bf16.msra.mxu0 %v4052
    %6636 = vmatpush.bf16.msra.mxu0 %v4050
    %6637 = vmatpush.bf16.msra.mxu0 %v4048
    %6638 = vmatpush.bf16.msra.mxu0 %v4046
    %6639 = vmatpush.bf16.msra.mxu0 %v4044
    %6640 = vmatmul.bf16.gmra.mxu0 %v542
    %v6641 = vpop.f32.mrf.mxu0
    %v6642 = vadd.f32 %v6623, %v6641
    %v6643 = vpop.f32.mrf.mxu0
    %v6644 = vadd.f32 %v6625, %v6643
    %6645 = vmatmul.bf16.gmra.mxu0 %v592
    %v6646 = vpop.f32.mrf.mxu0
    %v6647 = vadd.f32 %v6628, %v6646
    %v6648 = vpop.f32.mrf.mxu0
    %v6649 = vadd.f32 %v6630, %v6648
    %6650 = vdwg.mxu0
    %6651 = vmatpush.bf16.msra.mxu0 %v4074
    %6652 = vmatpush.bf16.msra.mxu0 %v4072
    %6653 = vmatpush.bf16.msra.mxu0 %v4070
    %6654 = vmatpush.bf16.msra.mxu0 %v4068
    %6655 = vmatpush.bf16.msra.mxu0 %v4066
    %6656 = vmatpush.bf16.msra.mxu0 %v4064
    %6657 = vmatpush.bf16.msra.mxu0 %v4062
    %6658 = vmatpush.bf16.msra.mxu0 %v4060
    %6659 = vmatmul.bf16.gmra.mxu0 %v543
    %v6660 = vpop.f32.mrf.mxu0
    %v6661 = vadd.f32 %v6642, %v6660
    %v6662 = vpop.f32.mrf.mxu0
    %v6663 = vadd.f32 %v6644, %v6662
    %6664 = vmatmul.bf16.gmra.mxu0 %v593
    %v6665 = vpop.f32.mrf.mxu0
    %v6666 = vadd.f32 %v6647, %v6665
    %v6667 = vpop.f32.mrf.mxu0
    %v6668 = vadd.f32 %v6649, %v6667
    %6669 = vdwg.mxu0
    %6670 = vmatpush.bf16.msra.mxu0 %v4090
    %6671 = vmatpush.bf16.msra.mxu0 %v4088
    %6672 = vmatpush.bf16.msra.mxu0 %v4086
    %6673 = vmatpush.bf16.msra.mxu0 %v4084
    %6674 = vmatpush.bf16.msra.mxu0 %v4082
    %6675 = vmatpush.bf16.msra.mxu0 %v4080
    %6676 = vmatpush.bf16.msra.mxu0 %v4078
    %6677 = vmatpush.bf16.msra.mxu0 %v4076
    %6678 = vmatmul.bf16.gmra.mxu0 %v544
    %v6679 = vpop.f32.mrf.mxu0
    %v6680 = vadd.f32 %v6661, %v6679
    %v6681 = vpop.f32.mrf.mxu0
    %v6682 = vadd.f32 %v6663, %v6681
    %6683 = vmatmul.bf16.gmra.mxu0 %v594
    %v6684 = vpop.f32.mrf.mxu0
    %v6685 = vadd.f32 %v6666, %v6684
    %v6686 = vpop.f32.mrf.mxu0
    %v6687 = vadd.f32 %v6668, %v6686
    %6688 = vdwg.mxu0
    %6689 = vmatpush.bf16.msra.mxu0 %v4106
    %6690 = vmatpush.bf16.msra.mxu0 %v4104
    %6691 = vmatpush.bf16.msra.mxu0 %v4102
    %6692 = vmatpush.bf16.msra.mxu0 %v4100
    %6693 = vmatpush.bf16.msra.mxu0 %v4098
    %6694 = vmatpush.bf16.msra.mxu0 %v4096
    %6695 = vmatpush.bf16.msra.mxu0 %v4094
    %6696 = vmatpush.bf16.msra.mxu0 %v4092
    %6697 = vmatmul.bf16.gmra.mxu0 %v545
    %v6698 = vpop.f32.mrf.mxu0
    %v6699 = vadd.f32 %v6680, %v6698
    %v6700 = vpop.f32.mrf.mxu0
    %v6701 = vadd.f32 %v6682, %v6700
    %6702 = vmatmul.bf16.gmra.mxu0 %v595
    %v6703 = vpop.f32.mrf.mxu0
    %v6704 = vadd.f32 %v6685, %v6703
    %v6705 = vpop.f32.mrf.mxu0
    %v6706 = vadd.f32 %v6687, %v6705
    %6707 = vdwg.mxu0
    %6708 = vmatpush.bf16.msra.mxu0 %v4122
    %6709 = vmatpush.bf16.msra.mxu0 %v4120
    %6710 = vmatpush.bf16.msra.mxu0 %v4118
    %6711 = vmatpush.bf16.msra.mxu0 %v4116
    %6712 = vmatpush.bf16.msra.mxu0 %v4114
    %6713 = vmatpush.bf16.msra.mxu0 %v4112
    %6714 = vmatpush.bf16.msra.mxu0 %v4110
    %6715 = vmatpush.bf16.msra.mxu0 %v4108
    %6716 = vmatmul.bf16.gmra.mxu0 %v546
    %v6717 = vpop.f32.mrf.mxu0
    %v6718 = vadd.f32 %v6699, %v6717
    %v6719 = vpop.f32.mrf.mxu0
    %v6720 = vadd.f32 %v6701, %v6719
    %6721 = vmatmul.bf16.gmra.mxu0 %v596
    %v6722 = vpop.f32.mrf.mxu0
    %v6723 = vadd.f32 %v6704, %v6722
    %v6724 = vpop.f32.mrf.mxu0
    %v6725 = vadd.f32 %v6706, %v6724
    %6726 = vdwg.mxu0
    %6727 = vmatpush.bf16.msra.mxu0 %v4138
    %6728 = vmatpush.bf16.msra.mxu0 %v4136
    %6729 = vmatpush.bf16.msra.mxu0 %v4134
    %6730 = vmatpush.bf16.msra.mxu0 %v4132
    %6731 = vmatpush.bf16.msra.mxu0 %v4130
    %6732 = vmatpush.bf16.msra.mxu0 %v4128
    %6733 = vmatpush.bf16.msra.mxu0 %v4126
    %6734 = vmatpush.bf16.msra.mxu0 %v4124
    %6735 = vmatmul.bf16.gmra.mxu0 %v547
    %v6736 = vpop.f32.mrf.mxu0
    %v6737 = vadd.f32 %v6718, %v6736
    %v6738 = vpop.f32.mrf.mxu0
    %v6739 = vadd.f32 %v6720, %v6738
    %6740 = vmatmul.bf16.gmra.mxu0 %v597
    %v6741 = vpop.f32.mrf.mxu0
    %v6742 = vadd.f32 %v6723, %v6741
    %v6743 = vpop.f32.mrf.mxu0
    %v6744 = vadd.f32 %v6725, %v6743
    %6745 = vdwg.mxu0
    %6746 = vmatpush.bf16.msra.mxu0 %v4154
    %6747 = vmatpush.bf16.msra.mxu0 %v4152
    %6748 = vmatpush.bf16.msra.mxu0 %v4150
    %6749 = vmatpush.bf16.msra.mxu0 %v4148
    %6750 = vmatpush.bf16.msra.mxu0 %v4146
    %6751 = vmatpush.bf16.msra.mxu0 %v4144
    %6752 = vmatpush.bf16.msra.mxu0 %v4142
    %6753 = vmatpush.bf16.msra.mxu0 %v4140
    %6754 = vmatmul.bf16.gmra.mxu0 %v548
    %v6755 = vpop.f32.mrf.mxu0
    %v6756 = vadd.f32 %v6737, %v6755
    %v6757 = vpop.f32.mrf.mxu0
    %v6758 = vadd.f32 %v6739, %v6757
    %6759 = vmatmul.bf16.gmra.mxu0 %v598
    %v6760 = vpop.f32.mrf.mxu0
    %v6761 = vadd.f32 %v6742, %v6760
    %v6762 = vpop.f32.mrf.mxu0
    %v6763 = vadd.f32 %v6744, %v6762
    %6764 = vdwg.mxu0
    %6765 = vmatpush.bf16.msra.mxu0 %v4170
    %6766 = vmatpush.bf16.msra.mxu0 %v4168
    %6767 = vmatpush.bf16.msra.mxu0 %v4166
    %6768 = vmatpush.bf16.msra.mxu0 %v4164
    %6769 = vmatpush.bf16.msra.mxu0 %v4162
    %6770 = vmatpush.bf16.msra.mxu0 %v4160
    %6771 = vmatpush.bf16.msra.mxu0 %v4158
    %6772 = vmatpush.bf16.msra.mxu0 %v4156
    %6773 = vmatmul.bf16.gmra.mxu0 %v549
    %v6774 = vpop.f32.mrf.mxu0
    %v6775 = vadd.f32 %v6756, %v6774
    %v6776 = vpop.f32.mrf.mxu0
    %v6777 = vadd.f32 %v6758, %v6776
    %6778 = vmatmul.bf16.gmra.mxu0 %v599
    %v6779 = vpop.f32.mrf.mxu0
    %v6780 = vadd.f32 %v6761, %v6779
    %v6781 = vpop.f32.mrf.mxu0
    %v6782 = vadd.f32 %v6763, %v6781
    %6783 = vdwg.mxu0
    %6784 = vmatpush.bf16.msra.mxu0 %v4186
    %6785 = vmatpush.bf16.msra.mxu0 %v4184
    %6786 = vmatpush.bf16.msra.mxu0 %v4182
    %6787 = vmatpush.bf16.msra.mxu0 %v4180
    %6788 = vmatpush.bf16.msra.mxu0 %v4178
    %6789 = vmatpush.bf16.msra.mxu0 %v4176
    %6790 = vmatpush.bf16.msra.mxu0 %v4174
    %6791 = vmatpush.bf16.msra.mxu0 %v4172
    %6792 = vmatmul.bf16.gmra.mxu0 %v550
    %v6793 = vpop.f32.mrf.mxu0
    %v6794 = vadd.f32 %v6775, %v6793
    %v6795 = vpop.f32.mrf.mxu0
    %v6796 = vadd.f32 %v6777, %v6795
    %6797 = vmatmul.bf16.gmra.mxu0 %v600
    %v6798 = vpop.f32.mrf.mxu0
    %v6799 = vadd.f32 %v6780, %v6798
    %v6800 = vpop.f32.mrf.mxu0
    %v6801 = vadd.f32 %v6782, %v6800
    %6802 = vdwg.mxu0
    %6803 = vmatpush.bf16.msra.mxu0 %v4202
    %6804 = vmatpush.bf16.msra.mxu0 %v4200
    %6805 = vmatpush.bf16.msra.mxu0 %v4198
    %6806 = vmatpush.bf16.msra.mxu0 %v4196
    %6807 = vmatpush.bf16.msra.mxu0 %v4194
    %6808 = vmatpush.bf16.msra.mxu0 %v4192
    %6809 = vmatpush.bf16.msra.mxu0 %v4190
    %6810 = vmatpush.bf16.msra.mxu0 %v4188
    %6811 = vmatmul.bf16.gmra.mxu0 %v551
    %v6812 = vpop.f32.mrf.mxu0
    %v6813 = vadd.f32 %v6794, %v6812
    %v6814 = vpop.f32.mrf.mxu0
    %v6815 = vadd.f32 %v6796, %v6814
    %6816 = vmatmul.bf16.gmra.mxu0 %v601
    %v6817 = vpop.f32.mrf.mxu0
    %v6818 = vadd.f32 %v6799, %v6817
    %v6819 = vpop.f32.mrf.mxu0
    %v6820 = vadd.f32 %v6801, %v6819
    %6821 = vdwg.mxu0
    %6822 = vmatpush.bf16.msra.mxu0 %v4218
    %6823 = vmatpush.bf16.msra.mxu0 %v4216
    %6824 = vmatpush.bf16.msra.mxu0 %v4214
    %6825 = vmatpush.bf16.msra.mxu0 %v4212
    %6826 = vmatpush.bf16.msra.mxu0 %v4210
    %6827 = vmatpush.bf16.msra.mxu0 %v4208
    %6828 = vmatpush.bf16.msra.mxu0 %v4206
    %6829 = vmatpush.bf16.msra.mxu0 %v4204
    %6830 = vmatmul.bf16.gmra.mxu0 %v552
    %v6831 = vpop.f32.mrf.mxu0
    %v6832 = vadd.f32 %v6813, %v6831
    %v6833 = vpop.f32.mrf.mxu0
    %v6834 = vadd.f32 %v6815, %v6833
    %6835 = vmatmul.bf16.gmra.mxu0 %v602
    %v6836 = vpop.f32.mrf.mxu0
    %v6837 = vadd.f32 %v6818, %v6836
    %v6838 = vpop.f32.mrf.mxu0
    %v6839 = vadd.f32 %v6820, %v6838
    %6840 = vdwg.mxu0
    %6841 = vmatpush.bf16.msra.mxu0 %v4234
    %6842 = vmatpush.bf16.msra.mxu0 %v4232
    %6843 = vmatpush.bf16.msra.mxu0 %v4230
    %6844 = vmatpush.bf16.msra.mxu0 %v4228
    %6845 = vmatpush.bf16.msra.mxu0 %v4226
    %6846 = vmatpush.bf16.msra.mxu0 %v4224
    %6847 = vmatpush.bf16.msra.mxu0 %v4222
    %6848 = vmatpush.bf16.msra.mxu0 %v4220
    %6849 = vmatmul.bf16.gmra.mxu0 %v553
    %v6850 = vpop.f32.mrf.mxu0
    %v6851 = vadd.f32 %v6832, %v6850
    %v6852 = vpop.f32.mrf.mxu0
    %v6853 = vadd.f32 %v6834, %v6852
    %6854 = vmatmul.bf16.gmra.mxu0 %v603
    %v6855 = vpop.f32.mrf.mxu0
    %v6856 = vadd.f32 %v6837, %v6855
    %v6857 = vpop.f32.mrf.mxu0
    %v6858 = vadd.f32 %v6839, %v6857
    %6859 = vdwg.mxu0
    %6860 = vmatpush.bf16.msra.mxu0 %v4250
    %6861 = vmatpush.bf16.msra.mxu0 %v4248
    %6862 = vmatpush.bf16.msra.mxu0 %v4246
    %6863 = vmatpush.bf16.msra.mxu0 %v4244
    %6864 = vmatpush.bf16.msra.mxu0 %v4242
    %6865 = vmatpush.bf16.msra.mxu0 %v4240
    %6866 = vmatpush.bf16.msra.mxu0 %v4238
    %6867 = vmatpush.bf16.msra.mxu0 %v4236
    %6868 = vmatmul.bf16.gmra.mxu0 %v554
    %v6869 = vpop.f32.mrf.mxu0
    %v6870 = vadd.f32 %v6851, %v6869
    %v6871 = vpop.f32.mrf.mxu0
    %v6872 = vadd.f32 %v6853, %v6871
    %6873 = vmatmul.bf16.gmra.mxu0 %v604
    %v6874 = vpop.f32.mrf.mxu0
    %v6875 = vadd.f32 %v6856, %v6874
    %v6876 = vpop.f32.mrf.mxu0
    %v6877 = vadd.f32 %v6858, %v6876
    %6878 = vdwg.mxu0
    %6879 = vmatpush.bf16.msra.mxu0 %v4266
    %6880 = vmatpush.bf16.msra.mxu0 %v4264
    %6881 = vmatpush.bf16.msra.mxu0 %v4262
    %6882 = vmatpush.bf16.msra.mxu0 %v4260
    %6883 = vmatpush.bf16.msra.mxu0 %v4258
    %6884 = vmatpush.bf16.msra.mxu0 %v4256
    %6885 = vmatpush.bf16.msra.mxu0 %v4254
    %6886 = vmatpush.bf16.msra.mxu0 %v4252
    %6887 = vmatmul.bf16.gmra.mxu0 %v555
    %v6888 = vpop.f32.mrf.mxu0
    %v6889 = vadd.f32 %v6870, %v6888
    %v6890 = vpop.f32.mrf.mxu0
    %v6891 = vadd.f32 %v6872, %v6890
    %6892 = vmatmul.bf16.gmra.mxu0 %v605
    %v6893 = vpop.f32.mrf.mxu0
    %v6894 = vadd.f32 %v6875, %v6893
    %v6895 = vpop.f32.mrf.mxu0
    %v6896 = vadd.f32 %v6877, %v6895
    %6897 = vdwg.mxu0
    %6898 = vmatpush.bf16.msra.mxu0 %v4282
    %6899 = vmatpush.bf16.msra.mxu0 %v4280
    %6900 = vmatpush.bf16.msra.mxu0 %v4278
    %6901 = vmatpush.bf16.msra.mxu0 %v4276
    %6902 = vmatpush.bf16.msra.mxu0 %v4274
    %6903 = vmatpush.bf16.msra.mxu0 %v4272
    %6904 = vmatpush.bf16.msra.mxu0 %v4270
    %6905 = vmatpush.bf16.msra.mxu0 %v4268
    %6906 = vmatmul.bf16.gmra.mxu0 %v556
    %v6907 = vpop.f32.mrf.mxu0
    %v6908 = vadd.f32 %v6889, %v6907
    %v6909 = vpop.f32.mrf.mxu0
    %v6910 = vadd.f32 %v6891, %v6909
    %6911 = vmatmul.bf16.gmra.mxu0 %v606
    %v6912 = vpop.f32.mrf.mxu0
    %v6913 = vadd.f32 %v6894, %v6912
    %v6914 = vpop.f32.mrf.mxu0
    %v6915 = vadd.f32 %v6896, %v6914
    %6916 = vdwg.mxu0
    %6917 = vmatpush.bf16.msra.mxu0 %v4298
    %6918 = vmatpush.bf16.msra.mxu0 %v4296
    %6919 = vmatpush.bf16.msra.mxu0 %v4294
    %6920 = vmatpush.bf16.msra.mxu0 %v4292
    %6921 = vmatpush.bf16.msra.mxu0 %v4290
    %6922 = vmatpush.bf16.msra.mxu0 %v4288
    %6923 = vmatpush.bf16.msra.mxu0 %v4286
    %6924 = vmatpush.bf16.msra.mxu0 %v4284
    %6925 = vmatmul.bf16.gmra.mxu0 %v557
    %v6926 = vpop.f32.mrf.mxu0
    %v6927 = vadd.f32 %v6908, %v6926
    %v6928 = vpop.f32.mrf.mxu0
    %v6929 = vadd.f32 %v6910, %v6928
    %6930 = vmatmul.bf16.gmra.mxu0 %v607
    %v6931 = vpop.f32.mrf.mxu0
    %v6932 = vadd.f32 %v6913, %v6931
    %v6933 = vpop.f32.mrf.mxu0
    %v6934 = vadd.f32 %v6915, %v6933
    %6935 = vdwg.mxu0
    %6936 = vmatpush.bf16.msra.mxu0 %v4314
    %6937 = vmatpush.bf16.msra.mxu0 %v4312
    %6938 = vmatpush.bf16.msra.mxu0 %v4310
    %6939 = vmatpush.bf16.msra.mxu0 %v4308
    %6940 = vmatpush.bf16.msra.mxu0 %v4306
    %6941 = vmatpush.bf16.msra.mxu0 %v4304
    %6942 = vmatpush.bf16.msra.mxu0 %v4302
    %6943 = vmatpush.bf16.msra.mxu0 %v4300
    %6944 = vmatmul.bf16.gmra.mxu0 %v558
    %v6945 = vpop.f32.mrf.mxu0
    %v6946 = vadd.f32 %v6927, %v6945
    %v6947 = vpop.f32.mrf.mxu0
    %v6948 = vadd.f32 %v6929, %v6947
    %6949 = vmatmul.bf16.gmra.mxu0 %v608
    %v6950 = vpop.f32.mrf.mxu0
    %v6951 = vadd.f32 %v6932, %v6950
    %v6952 = vpop.f32.mrf.mxu0
    %v6953 = vadd.f32 %v6934, %v6952
    %6954 = vdwg.mxu0
    %6955 = vmatpush.bf16.msra.mxu0 %v4330
    %6956 = vmatpush.bf16.msra.mxu0 %v4328
    %6957 = vmatpush.bf16.msra.mxu0 %v4326
    %6958 = vmatpush.bf16.msra.mxu0 %v4324
    %6959 = vmatpush.bf16.msra.mxu0 %v4322
    %6960 = vmatpush.bf16.msra.mxu0 %v4320
    %6961 = vmatpush.bf16.msra.mxu0 %v4318
    %6962 = vmatpush.bf16.msra.mxu0 %v4316
    %6963 = vmatmul.bf16.gmra.mxu0 %v559
    %v6964 = vpop.f32.mrf.mxu0
    %v6965 = vadd.f32 %v6946, %v6964
    %v6966 = vpop.f32.mrf.mxu0
    %v6967 = vadd.f32 %v6948, %v6966
    %6968 = vmatmul.bf16.gmra.mxu0 %v609
    %v6969 = vpop.f32.mrf.mxu0
    %v6970 = vadd.f32 %v6951, %v6969
    %v6971 = vpop.f32.mrf.mxu0
    %v6972 = vadd.f32 %v6953, %v6971
    %6973 = vdwg.mxu0
    %6974 = vmatpush.bf16.msra.mxu0 %v4346
    %6975 = vmatpush.bf16.msra.mxu0 %v4344
    %6976 = vmatpush.bf16.msra.mxu0 %v4342
    %6977 = vmatpush.bf16.msra.mxu0 %v4340
    %6978 = vmatpush.bf16.msra.mxu0 %v4338
    %6979 = vmatpush.bf16.msra.mxu0 %v4336
    %6980 = vmatpush.bf16.msra.mxu0 %v4334
    %6981 = vmatpush.bf16.msra.mxu0 %v4332
    %6982 = vmatmul.bf16.gmra.mxu0 %v560
    %v6983 = vpop.f32.mrf.mxu0
    %v6984 = vadd.f32 %v6965, %v6983
    %v6985 = vpop.f32.mrf.mxu0
    %v6986 = vadd.f32 %v6967, %v6985
    %6987 = vmatmul.bf16.gmra.mxu0 %v610
    %v6988 = vpop.f32.mrf.mxu0
    %v6989 = vadd.f32 %v6970, %v6988
    %v6990 = vpop.f32.mrf.mxu0
    %v6991 = vadd.f32 %v6972, %v6990
    %6992 = vdwg.mxu0
    %6993 = vmatpush.bf16.msra.mxu0 %v4362
    %6994 = vmatpush.bf16.msra.mxu0 %v4360
    %6995 = vmatpush.bf16.msra.mxu0 %v4358
    %6996 = vmatpush.bf16.msra.mxu0 %v4356
    %6997 = vmatpush.bf16.msra.mxu0 %v4354
    %6998 = vmatpush.bf16.msra.mxu0 %v4352
    %6999 = vmatpush.bf16.msra.mxu0 %v4350
    %7000 = vmatpush.bf16.msra.mxu0 %v4348
    %7001 = vmatmul.bf16.gmra.mxu0 %v561
    %v7002 = vpop.f32.mrf.mxu0
    %v7003 = vadd.f32 %v6984, %v7002
    %v7004 = vpop.f32.mrf.mxu0
    %v7005 = vadd.f32 %v6986, %v7004
    %7006 = vmatmul.bf16.gmra.mxu0 %v611
    %v7007 = vpop.f32.mrf.mxu0
    %v7008 = vadd.f32 %v6989, %v7007
    %v7009 = vpop.f32.mrf.mxu0
    %v7010 = vadd.f32 %v6991, %v7009
    %7011 = vdwg.mxu0
    %7012 = vmatpush.bf16.msra.mxu0 %v4378
    %7013 = vmatpush.bf16.msra.mxu0 %v4376
    %7014 = vmatpush.bf16.msra.mxu0 %v4374
    %7015 = vmatpush.bf16.msra.mxu0 %v4372
    %7016 = vmatpush.bf16.msra.mxu0 %v4370
    %7017 = vmatpush.bf16.msra.mxu0 %v4368
    %7018 = vmatpush.bf16.msra.mxu0 %v4366
    %7019 = vmatpush.bf16.msra.mxu0 %v4364
    %7020 = vmatmul.bf16.gmra.mxu0 %v562
    %v7021 = vpop.f32.mrf.mxu0
    %v7022 = vadd.f32 %v7003, %v7021
    %v7023 = vpop.f32.mrf.mxu0
    %v7024 = vadd.f32 %v7005, %v7023
    %7025 = vmatmul.bf16.gmra.mxu0 %v612
    %v7026 = vpop.f32.mrf.mxu0
    %v7027 = vadd.f32 %v7008, %v7026
    %v7028 = vpop.f32.mrf.mxu0
    %v7029 = vadd.f32 %v7010, %v7028
    %7030 = vdwg.mxu0
    %7031 = vmatpush.bf16.msra.mxu0 %v4394
    %7032 = vmatpush.bf16.msra.mxu0 %v4392
    %7033 = vmatpush.bf16.msra.mxu0 %v4390
    %7034 = vmatpush.bf16.msra.mxu0 %v4388
    %7035 = vmatpush.bf16.msra.mxu0 %v4386
    %7036 = vmatpush.bf16.msra.mxu0 %v4384
    %7037 = vmatpush.bf16.msra.mxu0 %v4382
    %7038 = vmatpush.bf16.msra.mxu0 %v4380
    %7039 = vmatmul.bf16.gmra.mxu0 %v563
    %v7040 = vpop.f32.mrf.mxu0
    %v7041 = vadd.f32 %v7022, %v7040
    %v7042 = vpop.f32.mrf.mxu0
    %v7043 = vadd.f32 %v7024, %v7042
    %7044 = vmatmul.bf16.gmra.mxu0 %v613
    %v7045 = vpop.f32.mrf.mxu0
    %v7046 = vadd.f32 %v7027, %v7045
    %v7047 = vpop.f32.mrf.mxu0
    %v7048 = vadd.f32 %v7029, %v7047
    %7049 = vdwg.mxu0
    %7050 = vmatpush.bf16.msra.mxu0 %v4410
    %7051 = vmatpush.bf16.msra.mxu0 %v4408
    %7052 = vmatpush.bf16.msra.mxu0 %v4406
    %7053 = vmatpush.bf16.msra.mxu0 %v4404
    %7054 = vmatpush.bf16.msra.mxu0 %v4402
    %7055 = vmatpush.bf16.msra.mxu0 %v4400
    %7056 = vmatpush.bf16.msra.mxu0 %v4398
    %7057 = vmatpush.bf16.msra.mxu0 %v4396
    %7058 = vmatmul.bf16.gmra.mxu0 %v564
    %v7059 = vpop.f32.mrf.mxu0
    %v7060 = vadd.f32 %v7041, %v7059
    %v7061 = vpop.f32.mrf.mxu0
    %v7062 = vadd.f32 %v7043, %v7061
    %7063 = vmatmul.bf16.gmra.mxu0 %v614
    %v7064 = vpop.f32.mrf.mxu0
    %v7065 = vadd.f32 %v7046, %v7064
    %v7066 = vpop.f32.mrf.mxu0
    %v7067 = vadd.f32 %v7048, %v7066
    %7068 = vdwg.mxu0
    %7069 = vmatpush.bf16.msra.mxu0 %v4426
    %7070 = vmatpush.bf16.msra.mxu0 %v4424
    %7071 = vmatpush.bf16.msra.mxu0 %v4422
    %7072 = vmatpush.bf16.msra.mxu0 %v4420
    %7073 = vmatpush.bf16.msra.mxu0 %v4418
    %7074 = vmatpush.bf16.msra.mxu0 %v4416
    %7075 = vmatpush.bf16.msra.mxu0 %v4414
    %7076 = vmatpush.bf16.msra.mxu0 %v4412
    %7077 = vmatmul.bf16.gmra.mxu0 %v565
    %v7078 = vpop.f32.mrf.mxu0
    %v7079 = vadd.f32 %v7060, %v7078
    %v7080 = vpop.f32.mrf.mxu0
    %v7081 = vadd.f32 %v7062, %v7080
    %7082 = vmatmul.bf16.gmra.mxu0 %v615
    %v7083 = vpop.f32.mrf.mxu0
    %v7084 = vadd.f32 %v7065, %v7083
    %v7085 = vpop.f32.mrf.mxu0
    %v7086 = vadd.f32 %v7067, %v7085
    %7087 = vdwg.mxu0
    %7088 = vmatpush.bf16.msra.mxu0 %v4442
    %7089 = vmatpush.bf16.msra.mxu0 %v4440
    %7090 = vmatpush.bf16.msra.mxu0 %v4438
    %7091 = vmatpush.bf16.msra.mxu0 %v4436
    %7092 = vmatpush.bf16.msra.mxu0 %v4434
    %7093 = vmatpush.bf16.msra.mxu0 %v4432
    %7094 = vmatpush.bf16.msra.mxu0 %v4430
    %7095 = vmatpush.bf16.msra.mxu0 %v4428
    %7096 = vmatmul.bf16.gmra.mxu0 %v566
    %v7097 = vpop.f32.mrf.mxu0
    %v7098 = vadd.f32 %v7079, %v7097
    %v7099 = vpop.f32.mrf.mxu0
    %v7100 = vadd.f32 %v7081, %v7099
    %7101 = vmatmul.bf16.gmra.mxu0 %v616
    %v7102 = vpop.f32.mrf.mxu0
    %v7103 = vadd.f32 %v7084, %v7102
    %v7104 = vpop.f32.mrf.mxu0
    %v7105 = vadd.f32 %v7086, %v7104
    %7106 = vdwg.mxu0
    %7107 = vmatpush.bf16.msra.mxu0 %v4458
    %7108 = vmatpush.bf16.msra.mxu0 %v4456
    %7109 = vmatpush.bf16.msra.mxu0 %v4454
    %7110 = vmatpush.bf16.msra.mxu0 %v4452
    %7111 = vmatpush.bf16.msra.mxu0 %v4450
    %7112 = vmatpush.bf16.msra.mxu0 %v4448
    %7113 = vmatpush.bf16.msra.mxu0 %v4446
    %7114 = vmatpush.bf16.msra.mxu0 %v4444
    %7115 = vmatmul.bf16.gmra.mxu0 %v567
    %v7116 = vpop.f32.mrf.mxu0
    %v7117 = vadd.f32 %v7098, %v7116
    %v7118 = vpop.f32.mrf.mxu0
    %v7119 = vadd.f32 %v7100, %v7118
    %7120 = vmatmul.bf16.gmra.mxu0 %v617
    %v7121 = vpop.f32.mrf.mxu0
    %v7122 = vadd.f32 %v7103, %v7121
    %v7123 = vpop.f32.mrf.mxu0
    %v7124 = vadd.f32 %v7105, %v7123
    %7125 = vdwg.mxu0
    %7126 = vmatpush.bf16.msra.mxu0 %v4474
    %7127 = vmatpush.bf16.msra.mxu0 %v4472
    %7128 = vmatpush.bf16.msra.mxu0 %v4470
    %7129 = vmatpush.bf16.msra.mxu0 %v4468
    %7130 = vmatpush.bf16.msra.mxu0 %v4466
    %7131 = vmatpush.bf16.msra.mxu0 %v4464
    %7132 = vmatpush.bf16.msra.mxu0 %v4462
    %7133 = vmatpush.bf16.msra.mxu0 %v4460
    %7134 = vmatmul.bf16.gmra.mxu0 %v568
    %v7135 = vpop.f32.mrf.mxu0
    %v7136 = vadd.f32 %v7117, %v7135
    %v7137 = vpop.f32.mrf.mxu0
    %v7138 = vadd.f32 %v7119, %v7137
    %7139 = vmatmul.bf16.gmra.mxu0 %v618
    %v7140 = vpop.f32.mrf.mxu0
    %v7141 = vadd.f32 %v7122, %v7140
    %v7142 = vpop.f32.mrf.mxu0
    %v7143 = vadd.f32 %v7124, %v7142
    %7144 = vdwg.mxu0
    %7145 = vmatpush.bf16.msra.mxu0 %v4490
    %7146 = vmatpush.bf16.msra.mxu0 %v4488
    %7147 = vmatpush.bf16.msra.mxu0 %v4486
    %7148 = vmatpush.bf16.msra.mxu0 %v4484
    %7149 = vmatpush.bf16.msra.mxu0 %v4482
    %7150 = vmatpush.bf16.msra.mxu0 %v4480
    %7151 = vmatpush.bf16.msra.mxu0 %v4478
    %7152 = vmatpush.bf16.msra.mxu0 %v4476
    %7153 = vmatmul.bf16.gmra.mxu0 %v569
    %v7154 = vpop.f32.mrf.mxu0
    %v7155 = vadd.f32 %v7136, %v7154
    %v7156 = vpop.f32.mrf.mxu0
    %v7157 = vadd.f32 %v7138, %v7156
    %7158 = vmatmul.bf16.gmra.mxu0 %v619
    %v7159 = vpop.f32.mrf.mxu0
    %v7160 = vadd.f32 %v7141, %v7159
    %v7161 = vpop.f32.mrf.mxu0
    %v7162 = vadd.f32 %v7143, %v7161
    %7163 = vdwg.mxu0
    %7164 = vmatpush.bf16.msra.mxu0 %v4506
    %7165 = vmatpush.bf16.msra.mxu0 %v4504
    %7166 = vmatpush.bf16.msra.mxu0 %v4502
    %7167 = vmatpush.bf16.msra.mxu0 %v4500
    %7168 = vmatpush.bf16.msra.mxu0 %v4498
    %7169 = vmatpush.bf16.msra.mxu0 %v4496
    %7170 = vmatpush.bf16.msra.mxu0 %v4494
    %7171 = vmatpush.bf16.msra.mxu0 %v4492
    %7172 = vmatmul.bf16.gmra.mxu0 %v570
    %v7173 = vpop.f32.mrf.mxu0
    %v7174 = vadd.f32 %v7155, %v7173
    %v7175 = vpop.f32.mrf.mxu0
    %v7176 = vadd.f32 %v7157, %v7175
    %7177 = vmatmul.bf16.gmra.mxu0 %v620
    %v7178 = vpop.f32.mrf.mxu0
    %v7179 = vadd.f32 %v7160, %v7178
    %v7180 = vpop.f32.mrf.mxu0
    %v7181 = vadd.f32 %v7162, %v7180
    %7182 = vdwg.mxu0
    %7183 = vmatpush.bf16.msra.mxu0 %v4522
    %7184 = vmatpush.bf16.msra.mxu0 %v4520
    %7185 = vmatpush.bf16.msra.mxu0 %v4518
    %7186 = vmatpush.bf16.msra.mxu0 %v4516
    %7187 = vmatpush.bf16.msra.mxu0 %v4514
    %7188 = vmatpush.bf16.msra.mxu0 %v4512
    %7189 = vmatpush.bf16.msra.mxu0 %v4510
    %7190 = vmatpush.bf16.msra.mxu0 %v4508
    %7191 = vmatmul.bf16.gmra.mxu0 %v571
    %v7192 = vpop.f32.mrf.mxu0
    %v7193 = vadd.f32 %v7174, %v7192
    %v7194 = vpop.f32.mrf.mxu0
    %v7195 = vadd.f32 %v7176, %v7194
    %7196 = vmatmul.bf16.gmra.mxu0 %v621
    %v7197 = vpop.f32.mrf.mxu0
    %v7198 = vadd.f32 %v7179, %v7197
    %v7199 = vpop.f32.mrf.mxu0
    %v7200 = vadd.f32 %v7181, %v7199
    %7201 = vdwg.mxu0
    %7202 = vmatpush.bf16.msra.mxu0 %v4538
    %7203 = vmatpush.bf16.msra.mxu0 %v4536
    %7204 = vmatpush.bf16.msra.mxu0 %v4534
    %7205 = vmatpush.bf16.msra.mxu0 %v4532
    %7206 = vmatpush.bf16.msra.mxu0 %v4530
    %7207 = vmatpush.bf16.msra.mxu0 %v4528
    %7208 = vmatpush.bf16.msra.mxu0 %v4526
    %7209 = vmatpush.bf16.msra.mxu0 %v4524
    %7210 = vmatmul.bf16.gmra.mxu0 %v572
    %v7211 = vpop.f32.mrf.mxu0
    %v7212 = vadd.f32 %v7193, %v7211
    %v7213 = vpop.f32.mrf.mxu0
    %v7214 = vadd.f32 %v7195, %v7213
    %7215 = vmatmul.bf16.gmra.mxu0 %v622
    %v7216 = vpop.f32.mrf.mxu0
    %v7217 = vadd.f32 %v7198, %v7216
    %v7218 = vpop.f32.mrf.mxu0
    %v7219 = vadd.f32 %v7200, %v7218
    %7220 = vdwg.mxu0
    %7221 = vmatpush.bf16.msra.mxu0 %v4554
    %7222 = vmatpush.bf16.msra.mxu0 %v4552
    %7223 = vmatpush.bf16.msra.mxu0 %v4550
    %7224 = vmatpush.bf16.msra.mxu0 %v4548
    %7225 = vmatpush.bf16.msra.mxu0 %v4546
    %7226 = vmatpush.bf16.msra.mxu0 %v4544
    %7227 = vmatpush.bf16.msra.mxu0 %v4542
    %7228 = vmatpush.bf16.msra.mxu0 %v4540
    %7229 = vmatmul.bf16.gmra.mxu0 %v573
    %v7230 = vpop.f32.mrf.mxu0
    %v7231 = vadd.f32 %v7212, %v7230
    %v7232 = vpop.f32.mrf.mxu0
    %v7233 = vadd.f32 %v7214, %v7232
    %7234 = vmatmul.bf16.gmra.mxu0 %v623
    %v7235 = vpop.f32.mrf.mxu0
    %v7236 = vadd.f32 %v7217, %v7235
    %v7237 = vpop.f32.mrf.mxu0
    %v7238 = vadd.f32 %v7219, %v7237
    %7239 = vdwg.mxu0
    %7240 = vmatpush.bf16.msra.mxu0 %v4570
    %7241 = vmatpush.bf16.msra.mxu0 %v4568
    %7242 = vmatpush.bf16.msra.mxu0 %v4566
    %7243 = vmatpush.bf16.msra.mxu0 %v4564
    %7244 = vmatpush.bf16.msra.mxu0 %v4562
    %7245 = vmatpush.bf16.msra.mxu0 %v4560
    %7246 = vmatpush.bf16.msra.mxu0 %v4558
    %7247 = vmatpush.bf16.msra.mxu0 %v4556
    %7248 = vmatmul.bf16.gmra.mxu0 %v574
    %v7249 = vpop.f32.mrf.mxu0
    %v7250 = vadd.f32 %v7231, %v7249
    %v7251 = vpop.f32.mrf.mxu0
    %v7252 = vadd.f32 %v7233, %v7251
    %7253 = vmatmul.bf16.gmra.mxu0 %v624
    %v7254 = vpop.f32.mrf.mxu0
    %v7255 = vadd.f32 %v7236, %v7254
    %v7256 = vpop.f32.mrf.mxu0
    %v7257 = vadd.f32 %v7238, %v7256
    %7258 = vdwg.mxu0
    %7259 = vmatpush.bf16.msra.mxu0 %v4586
    %7260 = vmatpush.bf16.msra.mxu0 %v4584
    %7261 = vmatpush.bf16.msra.mxu0 %v4582
    %7262 = vmatpush.bf16.msra.mxu0 %v4580
    %7263 = vmatpush.bf16.msra.mxu0 %v4578
    %7264 = vmatpush.bf16.msra.mxu0 %v4576
    %7265 = vmatpush.bf16.msra.mxu0 %v4574
    %7266 = vmatpush.bf16.msra.mxu0 %v4572
    %7267 = vmatmul.bf16.gmra.mxu0 %v575
    %v7268 = vpop.f32.mrf.mxu0
    %v7269 = vadd.f32 %v7250, %v7268
    %v7270 = vpop.f32.mrf.mxu0
    %v7271 = vadd.f32 %v7252, %v7270
    %7272 = vmatmul.bf16.gmra.mxu0 %v625
    %v7273 = vpop.f32.mrf.mxu0
    %v7274 = vadd.f32 %v7255, %v7273
    %v7275 = vpop.f32.mrf.mxu0
    %v7276 = vadd.f32 %v7257, %v7275
    %7277 = vdwg.mxu0
    %7278 = vmatpush.bf16.msra.mxu0 %v4602
    %7279 = vmatpush.bf16.msra.mxu0 %v4600
    %7280 = vmatpush.bf16.msra.mxu0 %v4598
    %7281 = vmatpush.bf16.msra.mxu0 %v4596
    %7282 = vmatpush.bf16.msra.mxu0 %v4594
    %7283 = vmatpush.bf16.msra.mxu0 %v4592
    %7284 = vmatpush.bf16.msra.mxu0 %v4590
    %7285 = vmatpush.bf16.msra.mxu0 %v4588
    %7286 = vmatmul.bf16.gmra.mxu0 %v576
    %v7287 = vpop.f32.mrf.mxu0
    %v7288 = vadd.f32 %v7269, %v7287
    %v7289 = vpop.f32.mrf.mxu0
    %v7290 = vadd.f32 %v7271, %v7289
    %7291 = vmatmul.bf16.gmra.mxu0 %v626
    %v7292 = vpop.f32.mrf.mxu0
    %v7293 = vadd.f32 %v7274, %v7292
    %v7294 = vpop.f32.mrf.mxu0
    %v7295 = vadd.f32 %v7276, %v7294
    %7296 = vdwg.mxu0
    %7297 = vmatpush.bf16.msra.mxu0 %v4618
    %7298 = vmatpush.bf16.msra.mxu0 %v4616
    %7299 = vmatpush.bf16.msra.mxu0 %v4614
    %7300 = vmatpush.bf16.msra.mxu0 %v4612
    %7301 = vmatpush.bf16.msra.mxu0 %v4610
    %7302 = vmatpush.bf16.msra.mxu0 %v4608
    %7303 = vmatpush.bf16.msra.mxu0 %v4606
    %7304 = vmatpush.bf16.msra.mxu0 %v4604
    %7305 = vmatmul.bf16.gmra.mxu0 %v577
    %v7306 = vpop.f32.mrf.mxu0
    %v7307 = vadd.f32 %v7288, %v7306
    %v7308 = vpop.f32.mrf.mxu0
    %v7309 = vadd.f32 %v7290, %v7308
    %7310 = vmatmul.bf16.gmra.mxu0 %v627
    %v7311 = vpop.f32.mrf.mxu0
    %v7312 = vadd.f32 %v7293, %v7311
    %v7313 = vpop.f32.mrf.mxu0
    %v7314 = vadd.f32 %v7295, %v7313
    %7315 = vdwg.mxu0
    %7316 = vmatpush.bf16.msra.mxu0 %v4634
    %7317 = vmatpush.bf16.msra.mxu0 %v4632
    %7318 = vmatpush.bf16.msra.mxu0 %v4630
    %7319 = vmatpush.bf16.msra.mxu0 %v4628
    %7320 = vmatpush.bf16.msra.mxu0 %v4626
    %7321 = vmatpush.bf16.msra.mxu0 %v4624
    %7322 = vmatpush.bf16.msra.mxu0 %v4622
    %7323 = vmatpush.bf16.msra.mxu0 %v4620
    %7324 = vmatmul.bf16.gmra.mxu0 %v578
    %v7325 = vpop.f32.mrf.mxu0
    %v7326 = vadd.f32 %v7307, %v7325
    %v7327 = vpop.f32.mrf.mxu0
    %v7328 = vadd.f32 %v7309, %v7327
    %7329 = vmatmul.bf16.gmra.mxu0 %v628
    %v7330 = vpop.f32.mrf.mxu0
    %v7331 = vadd.f32 %v7312, %v7330
    %v7332 = vpop.f32.mrf.mxu0
    %v7333 = vadd.f32 %v7314, %v7332
    %7334 = vdwg.mxu0
    %v7335 = vmax.f32 %v6376, 0.0
    %v7336 = vmax.f32 %v7326, 0.0
    %v7337 = vmax.f32 %v6378, 0.0
    %v7338 = vmax.f32 %v7328, 0.0
    %v7339 = vmax.f32 %v6381, 0.0
    %v7340 = vmax.f32 %v7331, 0.0
    %v7341 = vmax.f32 %v6383, 0.0
    %v7342 = vmax.f32 %v7333, 0.0
    %v7343 = vpack.c.bf16 %v7337, %v7335
    %v7344 = vpack.c.bf16 %v7338, %v7336
    %v7345 = vpack.c.bf16 %v7341, %v7339
    %v7346 = vpack.c.bf16 %v7342, %v7340
    %v7347 = vld [vmem:[#allocation6] sm:$0xf]
    %v7348 = vld [vmem:[#allocation6 + $0x4] sm:$0xf]
    %v7349 = vld [vmem:[#allocation6 + $0x8] sm:$0xf]
    %v7350 = vld [vmem:[#allocation6 + $0xc] sm:$0xf]
    %v7351 = vld [vmem:[#allocation6 + $0x10] sm:$0xf]
    %v7352 = vld [vmem:[#allocation6 + $0x14] sm:$0xf]
    %v7353 = vld [vmem:[#allocation6 + $0x18] sm:$0xf]
    %v7354 = vld [vmem:[#allocation6 + $0x1c] sm:$0xf]
    %v7355 = vld [vmem:[#allocation6 + $0x20] sm:$0xf]
    %v7356 = vld [vmem:[#allocation6 + $0x24] sm:$0xf]
    %v7357 = vld [vmem:[#allocation6 + $0x28] sm:$0xf]
    %v7358 = vld [vmem:[#allocation6 + $0x2c] sm:$0xf]
    %v7359 = vld [vmem:[#allocation6 + $0x30] sm:$0xf]
    %v7360 = vld [vmem:[#allocation6 + $0x34] sm:$0xf]
    %v7361 = vld [vmem:[#allocation6 + $0x38] sm:$0xf]
    %v7362 = vld [vmem:[#allocation6 + $0x3c] sm:$0xf]
    %v7363 = vld [vmem:[#allocation6 + $0x40] sm:$0xf]
    %v7364 = vld [vmem:[#allocation6 + $0x44] sm:$0xf]
    %v7365 = vld [vmem:[#allocation6 + $0x48] sm:$0xf]
    %v7366 = vld [vmem:[#allocation6 + $0x4c] sm:$0xf]
    %v7367 = vld [vmem:[#allocation6 + $0x50] sm:$0xf]
    %v7368 = vld [vmem:[#allocation6 + $0x54] sm:$0xf]
    %v7369 = vld [vmem:[#allocation6 + $0x58] sm:$0xf]
    %v7370 = vld [vmem:[#allocation6 + $0x5c] sm:$0xf]
    %v7371 = vld [vmem:[#allocation6 + $0x60] sm:$0xf]
    %v7372 = vld [vmem:[#allocation6 + $0x64] sm:$0xf]
    %v7373 = vld [vmem:[#allocation6 + $0x68] sm:$0xf]
    %v7374 = vld [vmem:[#allocation6 + $0x6c] sm:$0xf]
    %v7375 = vld [vmem:[#allocation6 + $0x70] sm:$0xf]
    %v7376 = vld [vmem:[#allocation6 + $0x74] sm:$0xf]
    %v7377 = vld [vmem:[#allocation6 + $0x78] sm:$0xf]
    %v7378 = vld [vmem:[#allocation6 + $0x7c] sm:$0xf]
    %v7379 = vld [vmem:[#allocation7] sm:$0x1]
    %v7381 = vperm.slane %v7379, 0
    %v7415 = vunpack.c.l.b16 %v7347
    %v7416 = vunpack.c.l.b16 %v7348
    %v7417 = vunpack.c.l.b16 %v7349
    %v7418 = vunpack.c.l.b16 %v7350
    %v7419 = vunpack.c.l.b16 %v7351
    %v7420 = vunpack.c.l.b16 %v7352
    %v7421 = vunpack.c.l.b16 %v7353
    %v7422 = vunpack.c.l.b16 %v7354
    %v7423 = vunpack.c.l.b16 %v7355
    %v7424 = vunpack.c.l.b16 %v7356
    %v7425 = vunpack.c.l.b16 %v7357
    %v7426 = vunpack.c.l.b16 %v7358
    %v7427 = vunpack.c.l.b16 %v7359
    %v7428 = vunpack.c.l.b16 %v7360
    %v7429 = vunpack.c.l.b16 %v7361
    %v7430 = vunpack.c.l.b16 %v7362
    %v7431 = vunpack.c.l.b16 %v7363
    %v7432 = vunpack.c.l.b16 %v7364
    %v7433 = vunpack.c.l.b16 %v7365
    %v7434 = vunpack.c.l.b16 %v7366
    %v7435 = vunpack.c.l.b16 %v7367
    %v7436 = vunpack.c.l.b16 %v7368
    %v7437 = vunpack.c.l.b16 %v7369
    %v7438 = vunpack.c.l.b16 %v7370
    %v7439 = vunpack.c.l.b16 %v7371
    %v7440 = vunpack.c.l.b16 %v7372
    %v7441 = vunpack.c.l.b16 %v7373
    %v7442 = vunpack.c.l.b16 %v7374
    %v7443 = vunpack.c.l.b16 %v7375
    %v7444 = vunpack.c.l.b16 %v7376
    %v7445 = vunpack.c.l.b16 %v7377
    %v7446 = vunpack.c.l.b16 %v7378
    %v7447 = vpack.c.b16 %v7416, %v7415
    %v7448 = vpack.c.b16 %v7418, %v7417
    %v7449 = vpack.c.b16 %v7420, %v7419
    %v7450 = vpack.c.b16 %v7422, %v7421
    %v7451 = vpack.c.b16 %v7424, %v7423
    %v7452 = vpack.c.b16 %v7426, %v7425
    %v7453 = vpack.c.b16 %v7428, %v7427
    %v7454 = vpack.c.b16 %v7430, %v7429
    %v7455 = vpack.c.b16 %v7432, %v7431
    %v7456 = vpack.c.b16 %v7434, %v7433
    %v7457 = vpack.c.b16 %v7436, %v7435
    %v7458 = vpack.c.b16 %v7438, %v7437
    %v7459 = vpack.c.b16 %v7440, %v7439
    %v7460 = vpack.c.b16 %v7442, %v7441
    %v7461 = vpack.c.b16 %v7444, %v7443
    %v7462 = vpack.c.b16 %v7446, %v7445
    %7479 = vmatpush.bf16.msra.mxu0 %v7454
    %7480 = vmatpush.bf16.msra.mxu0 %v7453
    %7481 = vmatpush.bf16.msra.mxu0 %v7452
    %7482 = vmatpush.bf16.msra.mxu0 %v7451
    %7483 = vmatpush.bf16.msra.mxu0 %v7450
    %7484 = vmatpush.bf16.msra.mxu0 %v7449
    %7485 = vmatpush.bf16.msra.mxu0 %v7448
    %7486 = vmatpush.bf16.msra.mxu0 %v7447
    %7487 = vmatmul.bf16.gmra.mxu0 %v7343
    %v7488 = vpop.f32.mrf.mxu0
    %v7489 = vadd.f32 %v7381, %v7488
    %v7490 = vpop.f32.mrf.mxu0
    %v7491 = vadd.f32 %v7381, %v7490
    %7492 = vmatmul.bf16.gmra.mxu0 %v7345
    %v7493 = vpop.f32.mrf.mxu0
    %v7494 = vadd.f32 %v7381, %v7493
    %v7495 = vpop.f32.mrf.mxu0
    %v7496 = vadd.f32 %v7381, %v7495
    %7497 = vdwg.mxu0
    %7498 = vmatpush.bf16.msra.mxu0 %v7462
    %7499 = vmatpush.bf16.msra.mxu0 %v7461
    %7500 = vmatpush.bf16.msra.mxu0 %v7460
    %7501 = vmatpush.bf16.msra.mxu0 %v7459
    %7502 = vmatpush.bf16.msra.mxu0 %v7458
    %7503 = vmatpush.bf16.msra.mxu0 %v7457
    %7504 = vmatpush.bf16.msra.mxu0 %v7456
    %7505 = vmatpush.bf16.msra.mxu0 %v7455
    %7506 = vmatmul.bf16.gmra.mxu0 %v7344
    %v7507 = vpop.f32.mrf.mxu0
    %v7508 = vadd.f32 %v7489, %v7507
    %v7509 = vpop.f32.mrf.mxu0
    %v7510 = vadd.f32 %v7491, %v7509
    %7511 = vmatmul.bf16.gmra.mxu0 %v7346
    %v7512 = vpop.f32.mrf.mxu0
    %v7513 = vadd.f32 %v7494, %v7512
    %v7514 = vpop.f32.mrf.mxu0
    %v7515 = vadd.f32 %v7496, %v7514
    %7516 = vdwg.mxu0
    %7517 = vmax.xlane.f32.xlu0 %v7508
    %v7518 = vpop.xlane.xlu0 %7517
    %7519 = vmax.xlane.f32.xlu0 %v7510
    %v7520 = vpop.xlane.xlu0 %7519
    %7521 = vmax.xlane.f32.xlu0 %v7513
    %v7522 = vpop.xlane.xlu0 %7521
    %7523 = vmax.xlane.f32.xlu0 %v7515
    %v7524 = vpop.xlane.xlu0 %7523
    %v7525 = vsub.f32 %v7508, %v7518
    %v7526 = vsub.f32 %v7510, %v7520
    %v7527 = vsub.f32 %v7513, %v7522
    %v7528 = vsub.f32 %v7515, %v7524
    %v7529 = vmul.f32 %v7525, 1.442695
    %v7530 = vpow.pop %v7529
    %v7531 = vmul.f32 %v7526, 1.442695
    %v7532 = vpow.pop %v7531
    %v7533 = vmul.f32 %v7527, 1.442695
    %v7534 = vpow.pop %v7533
    %v7535 = vmul.f32 %v7528, 1.442695
    %v7536 = vpow.pop %v7535
    %7537 = vadd.xlane.f32.xlu0 %v7530
    %v7538 = vpop.xlane.xlu0 %7537
    %7539 = vadd.xlane.f32.xlu0 %v7532
    %v7540 = vpop.xlane.xlu0 %7539
    %7541 = vadd.xlane.f32.xlu0 %v7534
    %v7542 = vpop.xlane.xlu0 %7541
    %7543 = vadd.xlane.f32.xlu0 %v7536
    %v7544 = vpop.xlane.xlu0 %7543
    %v7545 = vrcp.pop %v7538
    %v7546 = vmul.f32 %v7538, %v7545
    %v7547 = vsub.f32 1.0, %v7546
    %v7548 = vmul.f32 %v7545, %v7547
    %v7549 = vadd.f32 %v7545, %v7548
    %vm7550 = vweird.f32 %v7538
    %vm7551 = vweird.f32 %v7545
    %vm7552 = vmor %vm7550, %vm7551
    %v7553 = vsel %vm7552, %v7545, %v7549
    %v7554 = vand.u32 2147483647, %v7538
    %vm7555 = vcmp.eq.f32.partialorder %v7554, 8.507059e+37
    %v7556 = vand.u32 %v7538, 2147483648
    %v7557 = vor.u32 1.1754944e-38, %v7556
    %v7558 = vsel %vm7555, %v7557, %v7553
    %v7559 = vmul.f32 %v7530, %v7558
    %v7560 = vrcp.pop %v7540
    %v7561 = vmul.f32 %v7540, %v7560
    %v7562 = vsub.f32 1.0, %v7561
    %v7563 = vmul.f32 %v7560, %v7562
    %v7564 = vadd.f32 %v7560, %v7563
    %vm7565 = vweird.f32 %v7540
    %vm7566 = vweird.f32 %v7560
    %vm7567 = vmor %vm7565, %vm7566
    %v7568 = vsel %vm7567, %v7560, %v7564
    %v7569 = vand.u32 2147483647, %v7540
    %vm7570 = vcmp.eq.f32.partialorder %v7569, 8.507059e+37
    %v7571 = vand.u32 %v7540, 2147483648
    %v7572 = vor.u32 1.1754944e-38, %v7571
    %v7573 = vsel %vm7570, %v7572, %v7568
    %v7574 = vmul.f32 %v7532, %v7573
    %v7575 = vrcp.pop %v7542
    %v7576 = vmul.f32 %v7542, %v7575
    %v7577 = vsub.f32 1.0, %v7576
    %v7578 = vmul.f32 %v7575, %v7577
    %v7579 = vadd.f32 %v7575, %v7578
    %vm7580 = vweird.f32 %v7542
    %vm7581 = vweird.f32 %v7575
    %vm7582 = vmor %vm7580, %vm7581
    %v7583 = vsel %vm7582, %v7575, %v7579
    %v7584 = vand.u32 2147483647, %v7542
    %vm7585 = vcmp.eq.f32.partialorder %v7584, 8.507059e+37
    %v7586 = vand.u32 %v7542, 2147483648
    %v7587 = vor.u32 1.1754944e-38, %v7586
    %v7588 = vsel %vm7585, %v7587, %v7583
    %v7589 = vmul.f32 %v7534, %v7588
    %v7590 = vrcp.pop %v7544
    %v7591 = vmul.f32 %v7544, %v7590
    %v7592 = vsub.f32 1.0, %v7591
    %v7593 = vmul.f32 %v7590, %v7592
    %v7594 = vadd.f32 %v7590, %v7593
    %vm7595 = vweird.f32 %v7544
    %vm7596 = vweird.f32 %v7590
    %vm7597 = vmor %vm7595, %vm7596
    %v7598 = vsel %vm7597, %v7590, %v7594
    %v7599 = vand.u32 2147483647, %v7544
    %vm7600 = vcmp.eq.f32.partialorder %v7599, 8.507059e+37
    %v7601 = vand.u32 %v7544, 2147483648
    %v7602 = vor.u32 1.1754944e-38, %v7601
    %v7603 = vsel %vm7600, %v7602, %v7598
    %v7604 = vmul.f32 %v7536, %v7603
    %7605 = vst [vmem:[%s5] sm:$0xff] %v7559
    %7606 = vst [vmem:[%s5 + $0x8] sm:$0xff] %v7574
    %7607 = vst [vmem:[%s5 + $0x10] sm:$0xff] %v7589
    %7608 = vst [vmem:[%s5 + $0x18] sm:$0xff] %v7604
    // Predicated region
    $region38: #{policy_forward.1} parent=1 // pred_check
      _
    $region39: #{policy_forward.1} parent=1 // pred_check_branch
      %7610 = sbr.rel (0) target = $region41
    $region40: #{policy_forward.1} parent=1 // pred_region
      _
    $region41: #{policy_forward.1} parent=1 // pred_fallthru
      _
    // Predicated region
    $region42: #{policy_forward.1} parent=1 // pred_check
      _
    $region43: #{policy_forward.1} parent=1 // pred_check_branch
      %7612 = sbr.rel (0) target = $region45
    $region44: #{policy_forward.1} parent=1 // pred_region
      _
    $region45: #{policy_forward.1} parent=1 // pred_fallthru
      _
    %7613 = vsyncpa [#allocation3], 1
    %7614 = vsyncpa [#allocation5], 1
    %7615 = vsyncpa [#allocation8], 1

</llo_original>
